<compile_context>
chip_gen: v5e
topology: v5e:2x2
jax: 0.10.0
libtpu: 0.0.40
codegen_flags: <defaults>
</compile_context>

<pallas_src>
import functools
import math

import numpy as np
import jax
import jax.numpy as jnp
from jax.experimental import pallas as pl
from jax.experimental.pallas import tpu as pltpu

_BN_EPS = 1e-5


def _round_up(x, m):
    return (x + m - 1) // m * m


# ---------------------------------------------------------------------------
# Host-side glue: build the (transposed) ROI-align bilinear sampling matrix.
# Exact torchvision.ops.roi_align semantics (aligned=False, sampling_ratio=-1).
# Returns S_T: [R, k*k, H*W] so that  roi_T[r] = S_T[r] @ feat_T  with
# feat_T = features[img(r)].reshape(C, H*W).T.
# ---------------------------------------------------------------------------
def build_roi_align_matrix_t(boxes, H, W, k, spatial_scale, sampling_ratio=-1):
    R = boxes.shape[0]
    S = np.zeros((R, k * k, H * W), dtype=np.float64)

    def _corners(v, size):
        valid = (v >= -1.0) & (v <= size)
        vc = np.maximum(v, 0.0)
        lo = vc.astype(np.int64)
        clamp = lo >= size - 1
        lo = np.where(clamp, size - 1, lo)
        hi = np.where(clamp, size - 1, lo + 1)
        vc = np.where(clamp, lo.astype(np.float64), vc)
        l = vc - lo
        return lo, hi, l, 1.0 - l, valid

    for r in range(R):
        x1, y1, x2, y2 = (float(v) for v in boxes[r])
        roi_start_w = x1 * spatial_scale
        roi_start_h = y1 * spatial_scale
        roi_w = max(x2 * spatial_scale - roi_start_w, 1.0)   # aligned=False
        roi_h = max(y2 * spatial_scale - roi_start_h, 1.0)
        bin_h = roi_h / k
        bin_w = roi_w / k
        gh = sampling_ratio if sampling_ratio > 0 else int(math.ceil(roi_h / k))
        gw = sampling_ratio if sampling_ratio > 0 else int(math.ceil(roi_w / k))
        count = max(gh * gw, 1)

        ph = np.arange(k, dtype=np.float64)
        pw = np.arange(k, dtype=np.float64)
        iy = np.arange(gh, dtype=np.float64)
        ix = np.arange(gw, dtype=np.float64)
        yy = roi_start_h + ph[:, None] * bin_h + (iy[None, :] + 0.5) * bin_h / gh   # [k, gh]
        xx = roi_start_w + pw[:, None] * bin_w + (ix[None, :] + 0.5) * bin_w / gw   # [k, gw]

        y_lo, y_hi, ly, hy, vy = _corners(yy, H)   # each [k, gh]
        x_lo, x_hi, lx, hx, vx = _corners(xx, W)   # each [k, gw]

        shape = (k, gh, k, gw)                     # [ph, iy, pw, ix]
        col = np.broadcast_to(
            np.arange(k)[:, None, None, None] * k + np.arange(k)[None, None, :, None],
            shape).ravel()
        valid = (vy[:, :, None, None] & vx[None, None, :, :]).astype(np.float64)

        for py, wy in ((y_lo, hy), (y_hi, ly)):
            for px, wx in ((x_lo, hx), (x_hi, lx)):
                rows = np.broadcast_to(
                    py[:, :, None, None] * W + px[None, None, :, :], shape).ravel()
                wgt = np.broadcast_to(
                    wy[:, :, None, None] * wx[None, None, :, :] * valid / count, shape).ravel()
                np.add.at(S[r], (col, rows), wgt)
    return S.astype(np.float32)


# ---------------------------------------------------------------------------
# Pallas kernel.  grid = (image, hw_tile); one image's ROIs per "parallel" step,
# the HW reduction of matmul-1 over the trailing "arbitrary" axis.
#   feat_ref : [hw_tile, C_in]  bf16   (this image's feature HW tile, lane = channels)
#   s_ref    : [n*kk, hw_tile]  bf16   (stacked sampling matrices, HW tile)
#   w_ref    : [C_in, C_out]    bf16   (1x1 conv weight with BN scale folded in, resident)
#   shift_ref: [1, C_out]       f32    (conv bias + BN shift, folded, resident)
#   out_ref  : [n, C_out]       f32
#   acc_ref  : [n*kk, C_in]     f32    (matmul-1 accumulator, VMEM scratch)
# ---------------------------------------------------------------------------
def _roi_head_kernel(feat_ref, s_ref, w_ref, shift_ref, out_ref, acc_ref,
                     *, n, kk, c_in, c_out, c_chunk):
    hw_step = pl.program_id(1)
    m_rows = n * kk

    @pl.when(hw_step == 0)
    def _():
        acc_ref[...] = jnp.zeros_like(acc_ref)

    # ROI align partial sum for this HW tile (MXU): [M, hw_tile] @ [hw_tile, C_in]
    acc_ref[...] += jnp.dot(s_ref[...], feat_ref[...],
                            preferred_element_type=jnp.float32)

    @pl.when(hw_step == pl.num_programs(1) - 1)
    def _():
        # ReLU -> 1x1 conv (+ folded BN scale), fused over C_in chunks so the full
        # [M, C_in] post-ReLU bf16 intermediate is never materialized.
        y = jnp.zeros((m_rows, c_out), jnp.float32)
        for c0 in range(0, c_in, c_chunk):
            cw = min(c_chunk, c_in - c0)
            r = jnp.maximum(acc_ref[:, c0:c0 + cw], 0.0).astype(jnp.bfloat16)
            y = y + jnp.dot(r, w_ref[c0:c0 + cw, :],
                            preferred_element_type=jnp.float32)
        # conv bias + BN shift (folded) and second ReLU
        y = jnp.maximum(y + shift_ref[...], 0.0)
        # AdaptiveAvgPool2d((1,1)) over each ROI's kk bins as one tiny block-diagonal (1/kk)
        # MXU matmul -> single lane-dense [n, C_out] store.
        row = jax.lax.broadcasted_iota(jnp.int32, (n, m_rows), 0) * kk
        col = jax.lax.broadcasted_iota(jnp.int32, (n, m_rows), 1)
        pool = jnp.where((col >= row) & (col < row + kk),
                         jnp.float32(1.0 / kk), jnp.float32(0.0))
        out_ref[...] = jnp.dot(pool, y, preferred_element_type=jnp.float32)


def roi_align_forward(features, boxes_list, params, kernel_size, n, scale=1.0,
                      hw_tile=512, c_chunk=512):
    """features: [B, 2048, H, W] f32 (NCHW). boxes_list: list of B arrays [n, 4]. -> [B, n, 512]."""
    B, C_in, H, W = features.shape
    assert len(boxes_list) == B
    kk = kernel_size * kernel_size
    M = n * kk
    HW = H * W
    C_out = params["conv_w"].shape[0]

    # --- dense sampling matrices (host) ---
    boxes_np = np.concatenate([np.asarray(b, dtype=np.float64) for b in boxes_list], axis=0)
    s_t = build_roi_align_matrix_t(boxes_np, H, W, kernel_size, scale).reshape(B, M, HW)

    # --- HW tiling for the reduction grid axis; zero-pad HW so it divides evenly
    #     (zero feature rows / zero S columns contribute nothing) ---
    hw_tile = _round_up(min(hw_tile, _round_up(HW, 128)), 128)
    hw_pad = _round_up(HW, hw_tile)
    n_hw = hw_pad // hw_tile
    if hw_pad != HW:
        s_t = np.pad(s_t, ((0, 0), (0, 0), (0, hw_pad - HW)))
    s_t = jnp.asarray(s_t, dtype=jnp.bfloat16)

    # --- lane-major (channels-last) features; cast to bf16 BEFORE transposing to halve the
    #     transpose pre-pass' HBM traffic.  Disappears entirely if the backbone emits NHWC. ---
    feat_t = jnp.transpose(features.astype(jnp.bfloat16).reshape(B, C_in, HW), (0, 2, 1))
    if hw_pad != HW:
        feat_t = jnp.pad(feat_t, ((0, 0), (0, hw_pad - HW), (0, 0)))

    # --- fold BN(eval) scale into the 1x1 conv weight; only the additive shift stays in-kernel ---
    a = params["bn_gamma"] / jnp.sqrt(params["bn_var"] + _BN_EPS)                 # [C_out]
    w_t = (params["conv_w"] * a[:, None]).T.astype(jnp.bfloat16)                  # [C_in, C_out]
    shift = (params["bn_beta"] + (params["conv_b"] - params["bn_mean"]) * a)
    shift = shift.reshape(1, C_out).astype(jnp.float32)

    # --- VMEM budgeting: single-buffer the grid-invariant weight/shift once the streamed tiles
    #     make the footprint meaningful; derive vmem_limit_bytes from the estimate (<= 64 MiB
    #     to respect v7x physical VMEM). ---
    bytes_stream = 2 * (hw_tile * C_in * 2 + M * hw_tile * 2)     # double-buffered feat + S tiles
    bytes_acc = M * C_in * 4
    bytes_w = C_in * C_out * 2 + C_out * 4
    single_buffer_resident = (bytes_stream + bytes_acc) > (8 << 20)
    w_pipeline = dict(pipeline_mode=pl.Buffered(1)) if single_buffer_resident else {}
    est = (bytes_stream + bytes_acc + 2 * n * C_out * 4
           + (1 if single_buffer_resident else 2) * bytes_w)
    vmem_limit = int(min(max(2 * est, 32 << 20), 64 << 20))

    kernel = functools.partial(_roi_head_kernel, n=n, kk=kk,
                               c_in=C_in, c_out=C_out, c_chunk=min(c_chunk, C_in))
    out = pl.pallas_call(
        kernel,
        out_shape=jax.ShapeDtypeStruct((B, n, C_out), jnp.float32),
        grid_spec=pltpu.PrefetchScalarGridSpec(
            num_scalar_prefetch=0,
            grid=(B, n_hw),                                   # images parallel, HW reduction last
            in_specs=[
                pl.BlockSpec((None, hw_tile, C_in), lambda b, k: (b, k, 0)),   # feature HW tile
                pl.BlockSpec((None, M, hw_tile), lambda b, k: (b, 0, k)),      # sampling-matrix tile
                pl.BlockSpec((C_in, C_out), lambda b, k: (0, 0), **w_pipeline),  # folded conv weight
                pl.BlockSpec((1, C_out), lambda b, k: (0, 0), **w_pipeline),     # folded bias/BN shift
            ],
            out_specs=pl.BlockSpec((None, n, C_out), lambda b, k: (b, 0, 0)),
            scratch_shapes=[pltpu.VMEM((M, C_in), jnp.float32)],   # matmul-1 accumulator
        ),
        compiler_params=pltpu.CompilerParams(
            dimension_semantics=("parallel", "arbitrary"),
            vmem_limit_bytes=vmem_limit,
        ),
    )(feat_t, s_t, w_t, shift)

    # x.reshape(b, self.n, -1)
    return out


# ---------------------------------------------------------------------------
# Deterministic parameter init (Conv2d(2048,512,1), BatchNorm2d(512))
# ---------------------------------------------------------------------------
def init_params(key, c_in=2048, c_out=512):
    k1, k2, k3, k4, k5, k6 = jax.random.split(key, 6)
    return {
        "conv_w": jax.random.normal(k1, (c_out, c_in), jnp.float32) * 0.02,
        "conv_b": jax.random.normal(k2, (c_out,), jnp.float32) * 0.1,
        "bn_gamma": 1.0 + 0.1 * jax.random.normal(k3, (c_out,), jnp.float32),
        "bn_beta": 0.1 * jax.random.normal(k4, (c_out,), jnp.float32),
        "bn_mean": 0.1 * jax.random.normal(k5, (c_out,), jnp.float32),
        "bn_var": 0.5 + 0.5 * jnp.abs(jax.random.normal(k6, (c_out,), jnp.float32)),
    }


# ---------------------------------------------------------------------------
# Pure-numpy reference for a sanity check
# ---------------------------------------------------------------------------
def _reference(features, boxes_list, params, kernel_size, n, scale):
    B, C_in, H, W = features.shape
    boxes_np = np.concatenate([np.asarray(b, dtype=np.float64) for b in boxes_list], axis=0)
    S_T = build_roi_align_matrix_t(boxes_np, H, W, kernel_size, scale)        # [R, kk, HW]
    feat = np.asarray(features, dtype=np.float64).reshape(B, C_in, H * W)
    batch_idx = np.repeat(np.arange(B), n)
    roi = np.einsum("rkw,rcw->rck", S_T.astype(np.float64), feat[batch_idx])  # [R, C_in, kk]
    roi = np.maximum(roi, 0.0)
    w = np.asarray(params["conv_w"], dtype=np.float64)
    y = np.einsum("oc,rck->rok", w, roi) + np.asarray(params["conv_b"], np.float64)[None, :, None]
    gamma = np.asarray(params["bn_gamma"], np.float64)[None, :, None]
    beta = np.asarray(params["bn_beta"], np.float64)[None, :, None]
    rm = np.asarray(params["bn_mean"], np.float64)[None, :, None]
    rv = np.asarray(params["bn_var"], np.float64)[None, :, None]
    y = (y - rm) / np.sqrt(rv + _BN_EPS) * gamma + beta
    y = np.maximum(y, 0.0)
    out = y.mean(axis=2)
    return out.reshape(B, n, -1)


if __name__ == "__main__":
    B, n = 2, 3
    C_in, C_out = 2048, 512
    H = W = 16
    kernel_size = 4
    scale = 0.25  # feature-map stride 4: image coords up to 64

    key = jax.random.PRNGKey(0)
    kfeat, kbox, kparam = jax.random.split(key, 3)

    features = jax.random.normal(kfeat, (B, C_in, H, W), dtype=jnp.float32)

    # boxes: list of B tensors [n, 4] in (x1, y1, x2, y2), image coordinates
    raw = jax.random.uniform(kbox, (B, n, 2, 2), minval=0.0, maxval=float(H) / scale, dtype=jnp.float32)
    boxes = jnp.concatenate([jnp.min(raw, axis=2), jnp.max(raw, axis=2)], axis=-1)
    boxes_list = [boxes[i] for i in range(B)]

    params = init_params(kparam, c_in=C_in, c_out=C_out)

    # hw_tile=128 -> 2 HW-reduction grid steps at HW=256, exercising the accumulator path.
    out = roi_align_forward(features, boxes_list, params, kernel_size, n, scale, hw_tile=128)
    out = jax.block_until_ready(out)
    assert out.shape == (B, n, C_out), out.shape

    ref = _reference(features, boxes_list, params, kernel_size, n, scale)
    if not np.allclose(np.asarray(out, dtype=np.float64), ref, rtol=2e-2, atol=2e-2):
        raise AssertionError("Pallas output does not match reference")

    print("KERNEL_OK")
</pallas_src>

<mosaic_0001>
module attributes {stable_mosaic.version = 11 : i64} {
  func.func @_roi_head_kernel(%arg0: i32, %arg1: i32, %arg2: memref<1x128x2048xbf16, #tpu.memory_space<vmem>>, %arg3: memref<1x48x128xbf16, #tpu.memory_space<vmem>>, %arg4: memref<2048x512xbf16, #tpu.memory_space<vmem>>, %arg5: memref<1x512xf32, #tpu.memory_space<vmem>>, %arg6: memref<1x3x512xf32, #tpu.memory_space<vmem>>, %arg7: memref<48x2048xf32, #tpu.memory_space<vmem>>) attributes {dimension_semantics = [#tpu.dimension_semantics<parallel>, #tpu.dimension_semantics<arbitrary>], iteration_bounds = array<i64: 2, 2>, scalar_prefetch = 0 : i64, scratch_operands = 1 : i64, tpu.core_type = #tpu.core_type<tc>, window_params = [{transform_indices = @transform_0, window_bounds = array<i64: 1, 128, 2048>}, {transform_indices = @transform_1, window_bounds = array<i64: 1, 48, 128>}, {pipeline_mode = #tpu.pipeline_mode<synchronous>, transform_indices = @transform_2, window_bounds = array<i64: 2048, 512>}, {pipeline_mode = #tpu.pipeline_mode<synchronous>, transform_indices = @transform_3, window_bounds = array<i64: 1, 512>}, {transform_indices = @transform_4, window_bounds = array<i64: 1, 3, 512>}]} {
    %c0_i32 = arith.constant 0 : i32
    %0 = arith.cmpi eq, %arg1, %c0_i32 : i32
    %1 = arith.extui %0 : i1 to i32
    %c0_i32_0 = arith.constant 0 : i32
    %2 = arith.cmpi ne, %1, %c0_i32_0 : i32
    scf.if %2 {
      %cst_11 = arith.constant 0.000000e+00 : f32
      %14 = vector.broadcast %cst_11 : f32 to vector<48x2048xf32>
      %c0_12 = arith.constant 0 : index
      %c0_13 = arith.constant 0 : index
      %15 = vector.load %arg7[%c0_12, %c0_13] : memref<48x2048xf32, #tpu.memory_space<vmem>>, vector<48x2048xf32>
      tpu.vector_store %arg7[%c0_12, %c0_13], %14 {strides = array<i32>} : memref<48x2048xf32, #tpu.memory_space<vmem>>, vector<48x2048xf32>,
    } else {
    }
    %c0 = arith.constant 0 : index
    %c0_1 = arith.constant 0 : index
    %3 = vector.load %arg7[%c0, %c0_1] : memref<48x2048xf32, #tpu.memory_space<vmem>>, vector<48x2048xf32>
    %c0_2 = arith.constant 0 : index
    %c0_3 = arith.constant 0 : index
    %c0_4 = arith.constant 0 : index
    %4 = vector.load %arg3[%c0_2, %c0_3, %c0_4] : memref<1x48x128xbf16, #tpu.memory_space<vmem>>, vector<1x48x128xbf16>
    %5 = vector.shape_cast %4 : vector<1x48x128xbf16> to vector<48x128xbf16>
    %c0_5 = arith.constant 0 : index
    %c0_6 = arith.constant 0 : index
    %c0_7 = arith.constant 0 : index
    %6 = vector.load %arg2[%c0_5, %c0_6, %c0_7] : memref<1x128x2048xbf16, #tpu.memory_space<vmem>>, vector<1x128x2048xbf16>
    %7 = vector.shape_cast %6 : vector<1x128x2048xbf16> to vector<128x2048xbf16>
    %cst = arith.constant dense<0.000000e+00> : vector<48x2048xf32>
    %8 = tpu.matmul %5, %7, %cst {dimension_numbers = #tpu.dot_dimension_numbers<[1], [0], [0], [1], [0, 0, 1, 1], [], []>} : vector<48x128xbf16>, vector<128x2048xbf16>, vector<48x2048xf32> -> vector<48x2048xf32>
    %9 = arith.addf %3, %8 : vector<48x2048xf32>
    %c0_8 = arith.constant 0 : index
    %c0_9 = arith.constant 0 : index
    %10 = vector.load %arg7[%c0_8, %c0_9] : memref<48x2048xf32, #tpu.memory_space<vmem>>, vector<48x2048xf32>
    tpu.vector_store %arg7[%c0_8, %c0_9], %9 {strides = array<i32>} : memref<48x2048xf32, #tpu.memory_space<vmem>>, vector<48x2048xf32>,
    %c1_i32 = arith.constant 1 : i32
    %11 = arith.cmpi eq, %arg1, %c1_i32 : i32
    %12 = arith.extui %11 : i1 to i32
    %c0_i32_10 = arith.constant 0 : i32
    %13 = arith.cmpi ne, %12, %c0_i32_10 : i32
    scf.if %13 {
      %cst_11 = arith.constant 0.000000e+00 : f32
      %14 = vector.broadcast %cst_11 : f32 to vector<48x512xf32>
      %c0_12 = arith.constant 0 : index
      %c0_13 = arith.constant 0 : index
      %15 = vector.load %arg7[%c0_12, %c0_13] : memref<48x2048xf32, #tpu.memory_space<vmem>>, vector<48x512xf32>
      %cst_14 = arith.constant 0.000000e+00 : f32
      %16 = vector.broadcast %cst_14 : f32 to vector<48x512xf32>
      %17 = arith.maximumf %15, %16 : vector<48x512xf32>
      %18 = arith.truncf %17 : vector<48x512xf32> to vector<48x512xbf16>
      %c0_15 = arith.constant 0 : index
      %c0_16 = arith.constant 0 : index
      %19 = vector.load %arg4[%c0_15, %c0_16] : memref<2048x512xbf16, #tpu.memory_space<vmem>>, vector<512x512xbf16>
      %cst_17 = arith.constant dense<0.000000e+00> : vector<48x512xf32>
      %20 = tpu.matmul %18, %19, %cst_17 {dimension_numbers = #tpu.dot_dimension_numbers<[1], [0], [0], [1], [0, 0, 1, 1], [], []>} : vector<48x512xbf16>, vector<512x512xbf16>, vector<48x512xf32> -> vector<48x512xf32>
      %21 = arith.addf %14, %20 : vector<48x512xf32>
      %c0_18 = arith.constant 0 : index
      %c512 = arith.constant 512 : index
      %22 = vector.load %arg7[%c0_18, %c512] : memref<48x2048xf32, #tpu.memory_space<vmem>>, vector<48x512xf32>
      %cst_19 = arith.constant 0.000000e+00 : f32
      %23 = vector.broadcast %cst_19 : f32 to vector<48x512xf32>
      %24 = arith.maximumf %22, %23 : vector<48x512xf32>
      %25 = arith.truncf %24 : vector<48x512xf32> to vector<48x512xbf16>
      %c512_20 = arith.constant 512 : index
      %c0_21 = arith.constant 0 : index
      %26 = vector.load %arg4[%c512_20, %c0_21] : memref<2048x512xbf16, #tpu.memory_space<vmem>>, vector<512x512xbf16>
      %cst_22 = arith.constant dense<0.000000e+00> : vector<48x512xf32>
      %27 = tpu.matmul %25, %26, %cst_22 {dimension_numbers = #tpu.dot_dimension_numbers<[1], [0], [0], [1], [0, 0, 1, 1], [], []>} : vector<48x512xbf16>, vector<512x512xbf16>, vector<48x512xf32> -> vector<48x512xf32>
      %28 = arith.addf %21, %27 : vector<48x512xf32>
      %c0_23 = arith.constant 0 : index
      %c1024 = arith.constant 1024 : index
      %29 = vector.load %arg7[%c0_23, %c1024] : memref<48x2048xf32, #tpu.memory_space<vmem>>, vector<48x512xf32>
      %cst_24 = arith.constant 0.000000e+00 : f32
      %30 = vector.broadcast %cst_24 : f32 to vector<48x512xf32>
      %31 = arith.maximumf %29, %30 : vector<48x512xf32>
      %32 = arith.truncf %31 : vector<48x512xf32> to vector<48x512xbf16>
      %c1024_25 = arith.constant 1024 : index
      %c0_26 = arith.constant 0 : index
      %33 = vector.load %arg4[%c1024_25, %c0_26] : memref<2048x512xbf16, #tpu.memory_space<vmem>>, vector<512x512xbf16>
      %cst_27 = arith.constant dense<0.000000e+00> : vector<48x512xf32>
      %34 = tpu.matmul %32, %33, %cst_27 {dimension_numbers = #tpu.dot_dimension_numbers<[1], [0], [0], [1], [0, 0, 1, 1], [], []>} : vector<48x512xbf16>, vector<512x512xbf16>, vector<48x512xf32> -> vector<48x512xf32>
      %35 = arith.addf %28, %34 : vector<48x512xf32>
      %c0_28 = arith.constant 0 : index
      %c1536 = arith.constant 1536 : index
      %36 = vector.load %arg7[%c0_28, %c1536] : memref<48x2048xf32, #tpu.memory_space<vmem>>, vector<48x512xf32>
      %cst_29 = arith.constant 0.000000e+00 : f32
      %37 = vector.broadcast %cst_29 : f32 to vector<48x512xf32>
      %38 = arith.maximumf %36, %37 : vector<48x512xf32>
      %39 = arith.truncf %38 : vector<48x512xf32> to vector<48x512xbf16>
      %c1536_30 = arith.constant 1536 : index
      %c0_31 = arith.constant 0 : index
      %40 = vector.load %arg4[%c1536_30, %c0_31] : memref<2048x512xbf16, #tpu.memory_space<vmem>>, vector<512x512xbf16>
      %cst_32 = arith.constant dense<0.000000e+00> : vector<48x512xf32>
      %41 = tpu.matmul %39, %40, %cst_32 {dimension_numbers = #tpu.dot_dimension_numbers<[1], [0], [0], [1], [0, 0, 1, 1], [], []>} : vector<48x512xbf16>, vector<512x512xbf16>, vector<48x512xf32> -> vector<48x512xf32>
      %42 = arith.addf %35, %41 : vector<48x512xf32>
      %c0_33 = arith.constant 0 : index
      %c0_34 = arith.constant 0 : index
      %43 = vector.load %arg5[%c0_33, %c0_34] : memref<1x512xf32, #tpu.memory_space<vmem>>, vector<1x512xf32>
      %44 = vector.broadcast %43 : vector<1x512xf32> to vector<48x512xf32>
      %45 = arith.addf %42, %44 : vector<48x512xf32>
      %cst_35 = arith.constant 0.000000e+00 : f32
      %46 = vector.broadcast %cst_35 : f32 to vector<48x512xf32>
      %47 = arith.maximumf %45, %46 : vector<48x512xf32>
      %48 = tpu.iota {dimensions = array<i32: 0>} : vector<3x48xi32>
      %c16_i32 = arith.constant 16 : i32
      %49 = vector.broadcast %c16_i32 : i32 to vector<3x48xi32>
      %50 = arith.muli %48, %49 : vector<3x48xi32>
      %51 = tpu.iota {dimensions = array<i32: 1>} : vector<3x48xi32>
      %52 = arith.cmpi sge, %51, %50 : vector<3x48xi32>
      %c16_i32_36 = arith.constant 16 : i32
      %53 = vector.broadcast %c16_i32_36 : i32 to vector<3x48xi32>
      %54 = arith.addi %50, %53 : vector<3x48xi32>
      %55 = arith.cmpi slt, %51, %54 : vector<3x48xi32>
      %56 = arith.andi %52, %55 : vector<3x48xi1>
      %cst_37 = arith.constant 6.250000e-02 : f32
      %cst_38 = arith.constant 0.000000e+00 : f32
      %57 = vector.broadcast %cst_37 : f32 to vector<3x48xf32>
      %58 = vector.broadcast %cst_38 : f32 to vector<3x48xf32>
      %59 = arith.select %56, %57, %58 : vector<3x48xi1>, vector<3x48xf32>
      %cst_39 = arith.constant dense<0.000000e+00> : vector<3x512xf32>
      %60 = tpu.matmul %59, %47, %cst_39 {dimension_numbers = #tpu.dot_dimension_numbers<[1], [0], [0], [1], [0, 0, 1, 1], [], []>} : vector<3x48xf32>, vector<48x512xf32>, vector<3x512xf32> -> vector<3x512xf32>
      %c0_40 = arith.constant 0 : index
      %c0_41 = arith.constant 0 : index
      %c0_42 = arith.constant 0 : index
      %61 = vector.load %arg6[%c0_40, %c0_41, %c0_42] : memref<1x3x512xf32, #tpu.memory_space<vmem>>, vector<1x3x512xf32>
      %62 = vector.shape_cast %61 : vector<1x3x512xf32> to vector<3x512xf32>
      %63 = vector.shape_cast %60 : vector<3x512xf32> to vector<1x3x512xf32>
      tpu.vector_store %arg6[%c0_40, %c0_41, %c0_42], %63 {strides = array<i32>} : memref<1x3x512xf32, #tpu.memory_space<vmem>>, vector<1x3x512xf32>,
    } else {
    }
    return
  }
  func.func @transform_0(%arg0: i32, %arg1: i32) -> (i32, i32, i32) {
    %c0_i32 = arith.constant 0 : i32
    %c0_i32_0 = arith.constant 0 : i32
    return %arg0, %arg1, %c0_i32 : i32, i32, i32
  }
  func.func @transform_1(%arg0: i32, %arg1: i32) -> (i32, i32, i32) {
    %c0_i32 = arith.constant 0 : i32
    %c0_i32_0 = arith.constant 0 : i32
    return %arg0, %c0_i32, %arg1 : i32, i32, i32
  }
  func.func @transform_2(%arg0: i32, %arg1: i32) -> (i32, i32) {
    %c0_i32 = arith.constant 0 : i32
    %c0_i32_0 = arith.constant 0 : i32
    %c0_i32_1 = arith.constant 0 : i32
    return %c0_i32, %c0_i32_0 : i32, i32
  }
  func.func @transform_3(%arg0: i32, %arg1: i32) -> (i32, i32) {
    %c0_i32 = arith.constant 0 : i32
    %c0_i32_0 = arith.constant 0 : i32
    %c0_i32_1 = arith.constant 0 : i32
    return %c0_i32, %c0_i32_0 : i32, i32
  }
  func.func @transform_4(%arg0: i32, %arg1: i32) -> (i32, i32, i32) {
    %c0_i32 = arith.constant 0 : i32
    %c0_i32_0 = arith.constant 0 : i32
    %c0_i32_1 = arith.constant 0 : i32
    return %arg0, %c0_i32, %c0_i32_0 : i32, i32, i32
  }
}

</mosaic_0001>

<llo_original>
// kernel: tpu_custom_call.1
$region0: #{tpu_custom_call.1}
  #allocation0 [shape = 'u32[]', space=smem, size = 0x4, offset = 0x4, fixed_abs, tag = 'smem constant byte address 0x4 - core index']
  #allocation1 [shape = 'u32[72,128]{1,0:T(1,128)}', space=vmem, size = 0x9000, scoped, tag = 'internal scratch']
  #allocation2 [shape = 'f32[48,2048]{1,0:T(8,128)}', space=vmem, size = 0x60000, scoped, tag = 'scratch operand']
  %s0 = inlined_call_operand.hbm [shape: bf16[2,256,2048], index: 0, kind: input, shape index: {}]
  %s1 = inlined_call_operand.hbm [shape: bf16[2,48,256], index: 1, kind: input, shape index: {}]
  %s2 = inlined_call_operand.hbm [shape: bf16[2048,512], index: 2, kind: input, shape index: {}]
  %s3 = inlined_call_operand.hbm [shape: f32[1,512], index: 3, kind: input, shape index: {}]
  %s4 = inlined_call_operand.vmem [shape: f32[2,3,512], index: 4, kind: output, shape index: {}]
  %s5 = sld [smem:[#allocation0]]
  $region73: #{tpu_custom_call.1} parent=0
    _
  %s7 = ssub.s32 1, %s5
  %s8 = scalar_select 0, %s7, %s5
  $region1: #{tpu_custom_call.1} parent=0
    #allocation3 [shape = 'u8[1048576]{0}', space=vmem, size = 0x100000, scoped, tag = 'input window, operand 0']
    #allocation4 [shape = 's32[2]{0}', space=sflag, size = 0x8, scoped, tag = 'scoped memory for tpu_custom_call.1']
    #allocation5 [shape = 'u8[24576]{0}', space=vmem, size = 0x6000, scoped, tag = 'input window, operand 1']
    #allocation6 [shape = 's32[2]{0}', space=sflag, size = 0x8, scoped, tag = 'scoped memory for tpu_custom_call.1']
    #allocation7 [shape = 'u8[2097152]{0}', space=vmem, size = 0x200000, scoped, tag = 'input window, operand 2, single buffered']
    #allocation8 [shape = 'u8[2048]{0}', space=vmem, size = 0x800, scoped, tag = 'input window, operand 3, single buffered']
    #allocation9 [shape = 's32[1]{0}', space=sflag, size = 0x4, scoped, tag = 'scoped memory for tpu_custom_call.1']
    %9 = vsyncpa [#allocation4], 0
    %s10 = scalar_lea.sflag [#allocation4], 1
    %11 = vsyncpa %s10, 0
    %12 = vsyncpa [#allocation6], 0
    %s13 = scalar_lea.sflag [#allocation6], 1
    %14 = vsyncpa %s13, 0
    %15 = vsyncpa [#allocation9], 0
    loop: start=0, step=1, limit=6
    $region2: #{tpu_custom_call.1} parent=1 // loop_pre_header
      _
    $region3: #{tpu_custom_call.1} parent=1 // loop_header
      %s17 = sphi 0, %s21
      %p18 = scmp.ge.s32.totalorder %s17, 6
      %s24 = sphi 0, %s36
      %s25 = sphi 0, %s32
      %s26 = sphi 0, %s24
      %s27 = sphi 0, %s25
      %s28 = sphi 0, %s26
      %s29 = sphi 0, %s27
      %s41 = sphi 0, %s43
      %s44 = sphi 0, %s41
      %s45 = sphi 0, %s44
      %s61 = sphi 0, %s45
      %s69 = sphi 0, %s71
      %s72 = sphi 0, %s69
      %s73 = sphi 0, %s72
      %s89 = sphi 0, %s73
      %s93 = sphi 0, %s93
      %s95 = sphi 0, %s93
      %s96 = sphi 0, %s95
      %s110 = sphi 0, %s96
      %s114 = sphi 0, %s114
      %s116 = sphi 0, %s114
      %s117 = sphi 0, %s116
      %s131 = sphi 0, %s117
      %s137 = sphi 0, %s139
      %s140 = sphi 0, %s137
      %s141 = sphi 0, %s140
      %s157 = sphi 0, %s141
    $region4: #{tpu_custom_call.1} parent=1 // loop_header_branch
      %20 = sbr.rel (%p18) target = $region8
    $region5: #{tpu_custom_call.1} parent=1 // loop_body
      %s22 = ssub.s32 %s17, 1
      %s23 = ssub.s32 %s17, 2
      %s30 = sadd.s32 1, %s25
      %p31 = scmp.ge.s32.totalorder %s30, 2
      %s32 = scalar_select %p31, 0, %s30
      %s33 = sadd.s32 1, %s24
      %s34 = scalar_select %p31, %s33, %s24
      %p35 = scmp.ge.s32.totalorder %s34, 2
      %s36 = scalar_select %p35, 0, %s34
      %s37 = ssub.s32 %s24, %s36
      %s38 = ssub.s32 %s25, %s32
      %s39 = sor.u32 %s37, %s38
      %p40 = scmp.eq.s32.totalorder %s39, 0
      %s42 = sadd.s32 %s41, 1
      %s43 = scalar_select %p40, %s41, %s42
      %p46 = pneg %p40
      %p47 = scmp.eq.s32.totalorder %s17, 3
      %p48 = por %p46, %p47
      %p49 = scmp.ne.s32.totalorder %s41, %s44
      %p50 = scmp.eq.s32.totalorder %s17, 0
      %p51 = por %p49, %p50
      %p52 = scmp.ne.s32.totalorder %s41, %s44
      %p53 = scmp.eq.s32.totalorder %s22, 3
      %p54 = por %p52, %p53
      %p55 = scmp.ne.s32.totalorder %s44, %s45
      %p56 = scmp.eq.s32.totalorder %s22, 0
      %p57 = por %p55, %p56
      %p58 = scmp.ne.s32.totalorder %s44, %s45
      %p59 = scmp.eq.s32.totalorder %s23, 3
      %p60 = por %p58, %p59
      %p62 = scmp.ne.s32.totalorder %s45, %s61
      %p63 = scmp.eq.s32.totalorder %s23, 0
      %p64 = por %p62, %p63
      %s65 = ssub.s32 %s24, %s36
      %s66 = ssub.s32 %s25, %s32
      %s67 = sor.u32 %s65, %s66
      %p68 = scmp.eq.s32.totalorder %s67, 0
      %s70 = sadd.s32 %s69, 1
      %s71 = scalar_select %p68, %s69, %s70
      %p74 = pneg %p68
      %p75 = scmp.eq.s32.totalorder %s17, 3
      %p76 = por %p74, %p75
      %p77 = scmp.ne.s32.totalorder %s69, %s72
      %p78 = scmp.eq.s32.totalorder %s17, 0
      %p79 = por %p77, %p78
      %p80 = scmp.ne.s32.totalorder %s69, %s72
      %p81 = scmp.eq.s32.totalorder %s22, 3
      %p82 = por %p80, %p81
      %p83 = scmp.ne.s32.totalorder %s72, %s73
      %p84 = scmp.eq.s32.totalorder %s22, 0
      %p85 = por %p83, %p84
      %p86 = scmp.ne.s32.totalorder %s72, %s73
      %p87 = scmp.eq.s32.totalorder %s23, 3
      %p88 = por %p86, %p87
      %p90 = scmp.ne.s32.totalorder %s73, %s89
      %p91 = scmp.eq.s32.totalorder %s23, 0
      %p92 = por %p90, %p91
      %s94 = sadd.s32 %s93, 1
      %p97 = scmp.eq.s32.totalorder %s17, 3
      %p98 = scmp.ne.s32.totalorder %s93, %s95
      %p99 = scmp.eq.s32.totalorder %s17, 0
      %p100 = por %p98, %p99
      %p101 = scmp.ne.s32.totalorder %s93, %s95
      %p102 = scmp.eq.s32.totalorder %s22, 3
      %p103 = por %p101, %p102
      %p104 = scmp.ne.s32.totalorder %s95, %s96
      %p105 = scmp.eq.s32.totalorder %s22, 0
      %p106 = por %p104, %p105
      %p107 = scmp.ne.s32.totalorder %s95, %s96
      %p108 = scmp.eq.s32.totalorder %s23, 3
      %p109 = por %p107, %p108
      %p111 = scmp.ne.s32.totalorder %s96, %s110
      %p112 = scmp.eq.s32.totalorder %s23, 0
      %p113 = por %p111, %p112
      %s115 = sadd.s32 %s114, 1
      %p118 = scmp.eq.s32.totalorder %s17, 3
      %p119 = scmp.ne.s32.totalorder %s114, %s116
      %p120 = scmp.eq.s32.totalorder %s17, 0
      %p121 = por %p119, %p120
      %p122 = scmp.ne.s32.totalorder %s114, %s116
      %p123 = scmp.eq.s32.totalorder %s22, 3
      %p124 = por %p122, %p123
      %p125 = scmp.ne.s32.totalorder %s116, %s117
      %p126 = scmp.eq.s32.totalorder %s22, 0
      %p127 = por %p125, %p126
      %p128 = scmp.ne.s32.totalorder %s116, %s117
      %p129 = scmp.eq.s32.totalorder %s23, 3
      %p130 = por %p128, %p129
      %p132 = scmp.ne.s32.totalorder %s117, %s131
      %p133 = scmp.eq.s32.totalorder %s23, 0
      %p134 = por %p132, %p133
      %s135 = ssub.s32 %s24, %s36
      %p136 = scmp.eq.s32.totalorder %s135, 0
      %s138 = sadd.s32 %s137, 1
      %s139 = scalar_select %p136, %s137, %s138
      %p142 = pneg %p136
      %p143 = scmp.eq.s32.totalorder %s17, 3
      %p144 = por %p142, %p143
      %p145 = scmp.ne.s32.totalorder %s137, %s140
      %p146 = scmp.eq.s32.totalorder %s17, 0
      %p147 = por %p145, %p146
      %p148 = scmp.ne.s32.totalorder %s137, %s140
      %p149 = scmp.eq.s32.totalorder %s22, 3
      %p150 = por %p148, %p149
      %p151 = scmp.ne.s32.totalorder %s140, %s141
      %p152 = scmp.eq.s32.totalorder %s22, 0
      %p153 = por %p151, %p152
      %p154 = scmp.ne.s32.totalorder %s140, %s141
      %p155 = scmp.eq.s32.totalorder %s23, 3
      %p156 = por %p154, %p155
      %p158 = scmp.ne.s32.totalorder %s141, %s157
      %p159 = scmp.eq.s32.totalorder %s23, 0
      %p160 = por %p158, %p159
      %p161 = scmp.le.s32.totalorder 1, %s17
      %p162 = scmp.lt.s32.totalorder %s17, 5
      %p163 = pnand %p161, %p162
      %p164 = pneg %p163
      // Predicated region
      $region9: #{tpu_custom_call.1} parent=5 // pred_check
        _
      $region10: #{tpu_custom_call.1} parent=5 // pred_check_branch
        %166 = sbr.rel (%p163) target = $region12
      $region11: #{tpu_custom_call.1} parent=5 // pred_region
        %s167 = ssub.s32 %s17, 1
        // Predicated region
        $region13: #{tpu_custom_call.1} parent=11 // pred_check
          %p168 = pneg %p106
        $region14: #{tpu_custom_call.1} parent=11 // pred_check_branch
          %170 = sbr.rel (%p168) target = $region16
        $region15: #{tpu_custom_call.1} parent=11 // pred_region
          %172 = vsyncadd [#allocation6], 0
          %s173 = sshll.u32 %s2, 4
          %s174 = int_to_ptr.hbm [resolvable:$true] %s173
          %s175 = sshll.u32 [#allocation7], 4
          %s176 = int_to_ptr.vmem [resolvable:$true] %s175
          %181 = dma.hbm_to_vmem [thread:$0]  %s174, 65536, %s176, [#allocation6], 256, 256, 16
        $region16: #{tpu_custom_call.1} parent=11 // pred_fallthru
          _
        // Predicated region
        $region17: #{tpu_custom_call.1} parent=11 // pred_check
          %p182 = pneg %p127
        $region18: #{tpu_custom_call.1} parent=11 // pred_check_branch
          %184 = sbr.rel (%p182) target = $region20
        $region19: #{tpu_custom_call.1} parent=11 // pred_region
          %186 = vsyncadd [#allocation9], 0
          %s188 = sshll.u32 %s3, 4
          %s189 = int_to_ptr.hbm [resolvable:$true] %s188
          %s190 = sshll.u32 [#allocation8], 4
          %s191 = int_to_ptr.vmem [resolvable:$true] %s190
          %193 = dma.hbm_to_vmem [thread:$0]  %s189, 64, %s191, [#allocation9]
        $region20: #{tpu_custom_call.1} parent=11 // pred_fallthru
          _
      $region12: #{tpu_custom_call.1} parent=5 // pred_fallthru
        _
      %p194 = scmp.lt.s32.totalorder %s17, 4
      // Predicated region
      $region21: #{tpu_custom_call.1} parent=5 // pred_check
        %p195 = pneg %p194
      $region22: #{tpu_custom_call.1} parent=5 // pred_check_branch
        %197 = sbr.rel (%p195) target = $region24
      $region23: #{tpu_custom_call.1} parent=5 // pred_region
        // Predicated region
        $region25: #{tpu_custom_call.1} parent=23 // pred_check
          %p198 = pneg %p51
        $region26: #{tpu_custom_call.1} parent=23 // pred_check_branch
          %200 = sbr.rel (%p198) target = $region28
        $region27: #{tpu_custom_call.1} parent=23 // pred_region
          %s201 = sand.u32 %s41, 1
          %s202 = scalar_lea.sflag [#allocation4], %s201
          %s203 = sand.u32 %s41, 1
          %s204 = smul.addr %s203, 1024
          %s205 = scalar_lea.vmem [#allocation3], %s204
          %s206 = smul.u32 16, %s25
          %208 = vsyncadd %s202, 0
          %s209 = smul.addr %s206, 16
          %s210 = smul.addr %s24, 512
          %s211 = sadd.s32 %s209, %s210
          %s212 = smul.addr %s211, 4
          %s213 = scalar_lea.hbm %s0, %s212
          %s214 = sshll.u32 %s213, 4
          %s215 = int_to_ptr.hbm [resolvable:$true] %s214
          %s216 = sshll.u32 %s205, 4
          %s217 = int_to_ptr.vmem [resolvable:$true] %s216
          %222 = dma.hbm_to_vmem [thread:$0]  %s215, 16384, %s217, %s202, 1024, 1024, 64
        $region28: #{tpu_custom_call.1} parent=23 // pred_fallthru
          _
        // Predicated region
        $region29: #{tpu_custom_call.1} parent=23 // pred_check
          %p223 = pneg %p79
        $region30: #{tpu_custom_call.1} parent=23 // pred_check_branch
          %225 = sbr.rel (%p223) target = $region32
        $region31: #{tpu_custom_call.1} parent=23 // pred_region
          %s226 = sand.u32 %s17, 1
          %s227 = scalar_lea.sflag [#allocation6], %s226
          %s228 = sand.u32 %s69, 1
          %s229 = smul.addr %s228, 24
          %s230 = scalar_lea.vmem [#allocation5], %s229
          %232 = vsyncadd %s227, 0
          %s233 = smul.addr %s24, 12
          %s234 = sadd.s32 %s25, %s233
          %s235 = smul.addr %s234, 4
          %s236 = scalar_lea.hbm %s1, %s235
          %s237 = sshll.u32 %s236, 4
          %s238 = int_to_ptr.hbm [resolvable:$true] %s237
          %s239 = sshll.u32 %s230, 4
          %s240 = int_to_ptr.vmem [resolvable:$true] %s239
          %245 = dma.hbm_to_vmem [thread:$0]  %s238, 384, %s240, %s227, 128, 64, 4
        $region32: #{tpu_custom_call.1} parent=23 // pred_fallthru
          _
      $region24: #{tpu_custom_call.1} parent=5 // pred_fallthru
        _
      %p246 = scmp.le.s32.totalorder 1, %s17
      %p247 = scmp.lt.s32.totalorder %s17, 5
      %p248 = pnand %p246, %p247
      %p249 = pneg %p248
      // Predicated region
      $region33: #{tpu_custom_call.1} parent=5 // pred_check
        _
      $region34: #{tpu_custom_call.1} parent=5 // pred_check_branch
        %251 = sbr.rel (%p248) target = $region36
      $region35: #{tpu_custom_call.1} parent=5 // pred_region
        %s252 = ssub.s32 %s17, 1
        %s253 = sand.u32 %s44, 1
        %s254 = scalar_lea.sflag [#allocation4], %s253
        %s255 = sand.u32 %s44, 1
        %s256 = smul.addr %s255, 1024
        %s257 = scalar_lea.vmem [#allocation3], %s256
        // Predicated region
        $region37: #{tpu_custom_call.1} parent=35 // pred_check
          %p258 = pneg %p57
        $region38: #{tpu_custom_call.1} parent=35 // pred_check_branch
          %260 = sbr.rel (%p258) target = $region40
        $region39: #{tpu_custom_call.1} parent=35 // pred_region
          %262 = dma.done %s254, 16384
        $region40: #{tpu_custom_call.1} parent=35 // pred_fallthru
          _
        %s263 = sand.u32 %s22, 1
        %s264 = scalar_lea.sflag [#allocation6], %s263
        %s265 = sand.u32 %s72, 1
        %s266 = smul.addr %s265, 24
        %s267 = scalar_lea.vmem [#allocation5], %s266
        // Predicated region
        $region41: #{tpu_custom_call.1} parent=35 // pred_check
          %p268 = pneg %p85
        $region42: #{tpu_custom_call.1} parent=35 // pred_check_branch
          %270 = sbr.rel (%p268) target = $region44
        $region43: #{tpu_custom_call.1} parent=35 // pred_region
          %272 = dma.done %s264, 384
        $region44: #{tpu_custom_call.1} parent=35 // pred_fallthru
          _
        // Predicated region
        $region45: #{tpu_custom_call.1} parent=35 // pred_check
          %p273 = pneg %p106
        $region46: #{tpu_custom_call.1} parent=35 // pred_check_branch
          %275 = sbr.rel (%p273) target = $region48
        $region47: #{tpu_custom_call.1} parent=35 // pred_region
          %277 = dma.done [#allocation6], 65536
        $region48: #{tpu_custom_call.1} parent=35 // pred_fallthru
          _
        // Predicated region
        $region49: #{tpu_custom_call.1} parent=35 // pred_check
          %p278 = pneg %p127
        $region50: #{tpu_custom_call.1} parent=35 // pred_check_branch
          %280 = sbr.rel (%p278) target = $region52
        $region51: #{tpu_custom_call.1} parent=35 // pred_region
          %282 = dma.done [#allocation9], 64
        $region52: #{tpu_custom_call.1} parent=35 // pred_fallthru
          _
        %s283 = sand.u32 %s44, 1
        %s284 = scalar_lea.sflag [#allocation4], %s283
        %s285 = sand.u32 %s44, 1
        %s286 = smul.addr %s285, 1024
        %s287 = scalar_lea.vmem [#allocation3], %s286
        %p288 = pneg %p57
        %p289 = pneg %p54
        %s290 = sand.u32 %s22, 1
        %s291 = scalar_lea.sflag [#allocation6], %s290
        %s292 = sand.u32 %s72, 1
        %s293 = smul.addr %s292, 24
        %s294 = scalar_lea.vmem [#allocation5], %s293
        %p295 = pneg %p85
        %p296 = pneg %p82
        %p297 = pneg %p106
        %p298 = pneg %p103
        %p299 = pneg %p127
        %p300 = pneg %p124
        %p301 = pneg %p153
        %p302 = pneg %p150
        %p303 = scmp.lt.s32.totalorder %s26, 1
        %s304 = scalar_select %p303, %s26, 1
        %s305 = smul.addr %s304, 4
        %s306 = smul.addr %s305, 4
        %s307 = scalar_lea.vmem %s4, %s306
        %s308 = smul.u32 16, %s27
        %p309 = scmp.lt.s32.totalorder %s26, 1
        %s310 = scalar_select %p309, %s26, 1
        %s311 = smul.addr %s310, 4
        %s312 = smul.addr %s311, 4
        %s313 = scalar_lea.vmem %s4, %s312
        %p314 = scmp.eq.s32.totalorder %s27, 0
        // Predicated region
        $region53: #{tpu_custom_call.1} parent=35 // pred_check
          %p315 = pneg %p314
        $region54: #{tpu_custom_call.1} parent=35 // pred_check_branch
          %317 = sbr.rel (%p315) target = $region56
        $region55: #{tpu_custom_call.1} parent=35 // pred_region
          %318 = vst [vmem:[#allocation2] sm:$0xff] 0.0
          %319 = vst [vmem:[#allocation2 + $0x8] sm:$0xff] 0.0
          %320 = vst [vmem:[#allocation2 + $0x10] sm:$0xff] 0.0
          %321 = vst [vmem:[#allocation2 + $0x18] sm:$0xff] 0.0
          %322 = vst [vmem:[#allocation2 + $0x20] sm:$0xff] 0.0
          %323 = vst [vmem:[#allocation2 + $0x28] sm:$0xff] 0.0
          %324 = vst [vmem:[#allocation2 + $0x30] sm:$0xff] 0.0
          %325 = vst [vmem:[#allocation2 + $0x38] sm:$0xff] 0.0
          %326 = vst [vmem:[#allocation2 + $0x40] sm:$0xff] 0.0
          %327 = vst [vmem:[#allocation2 + $0x48] sm:$0xff] 0.0
          %328 = vst [vmem:[#allocation2 + $0x50] sm:$0xff] 0.0
          %329 = vst [vmem:[#allocation2 + $0x58] sm:$0xff] 0.0
          %330 = vst [vmem:[#allocation2 + $0x60] sm:$0xff] 0.0
          %331 = vst [vmem:[#allocation2 + $0x68] sm:$0xff] 0.0
          %332 = vst [vmem:[#allocation2 + $0x70] sm:$0xff] 0.0
          %333 = vst [vmem:[#allocation2 + $0x78] sm:$0xff] 0.0
          %334 = vst [vmem:[#allocation2 + $0x80] sm:$0xff] 0.0
          %335 = vst [vmem:[#allocation2 + $0x88] sm:$0xff] 0.0
          %336 = vst [vmem:[#allocation2 + $0x90] sm:$0xff] 0.0
          %337 = vst [vmem:[#allocation2 + $0x98] sm:$0xff] 0.0
          %338 = vst [vmem:[#allocation2 + $0xa0] sm:$0xff] 0.0
          %339 = vst [vmem:[#allocation2 + $0xa8] sm:$0xff] 0.0
          %340 = vst [vmem:[#allocation2 + $0xb0] sm:$0xff] 0.0
          %341 = vst [vmem:[#allocation2 + $0xb8] sm:$0xff] 0.0
          %342 = vst [vmem:[#allocation2 + $0xc0] sm:$0xff] 0.0
          %343 = vst [vmem:[#allocation2 + $0xc8] sm:$0xff] 0.0
          %344 = vst [vmem:[#allocation2 + $0xd0] sm:$0xff] 0.0
          %345 = vst [vmem:[#allocation2 + $0xd8] sm:$0xff] 0.0
          %346 = vst [vmem:[#allocation2 + $0xe0] sm:$0xff] 0.0
          %347 = vst [vmem:[#allocation2 + $0xe8] sm:$0xff] 0.0
          %348 = vst [vmem:[#allocation2 + $0xf0] sm:$0xff] 0.0
          %349 = vst [vmem:[#allocation2 + $0xf8] sm:$0xff] 0.0
          %350 = vst [vmem:[#allocation2 + $0x100] sm:$0xff] 0.0
          %351 = vst [vmem:[#allocation2 + $0x108] sm:$0xff] 0.0
          %352 = vst [vmem:[#allocation2 + $0x110] sm:$0xff] 0.0
          %353 = vst [vmem:[#allocation2 + $0x118] sm:$0xff] 0.0
          %354 = vst [vmem:[#allocation2 + $0x120] sm:$0xff] 0.0
          %355 = vst [vmem:[#allocation2 + $0x128] sm:$0xff] 0.0
          %356 = vst [vmem:[#allocation2 + $0x130] sm:$0xff] 0.0
          %357 = vst [vmem:[#allocation2 + $0x138] sm:$0xff] 0.0
          %358 = vst [vmem:[#allocation2 + $0x140] sm:$0xff] 0.0
          %359 = vst [vmem:[#allocation2 + $0x148] sm:$0xff] 0.0
          %360 = vst [vmem:[#allocation2 + $0x150] sm:$0xff] 0.0
          %361 = vst [vmem:[#allocation2 + $0x158] sm:$0xff] 0.0
          %362 = vst [vmem:[#allocation2 + $0x160] sm:$0xff] 0.0
          %363 = vst [vmem:[#allocation2 + $0x168] sm:$0xff] 0.0
          %364 = vst [vmem:[#allocation2 + $0x170] sm:$0xff] 0.0
          %365 = vst [vmem:[#allocation2 + $0x178] sm:$0xff] 0.0
          %366 = vst [vmem:[#allocation2 + $0x180] sm:$0xff] 0.0
          %367 = vst [vmem:[#allocation2 + $0x188] sm:$0xff] 0.0
          %368 = vst [vmem:[#allocation2 + $0x190] sm:$0xff] 0.0
          %369 = vst [vmem:[#allocation2 + $0x198] sm:$0xff] 0.0
          %370 = vst [vmem:[#allocation2 + $0x1a0] sm:$0xff] 0.0
          %371 = vst [vmem:[#allocation2 + $0x1a8] sm:$0xff] 0.0
          %372 = vst [vmem:[#allocation2 + $0x1b0] sm:$0xff] 0.0
          %373 = vst [vmem:[#allocation2 + $0x1b8] sm:$0xff] 0.0
          %374 = vst [vmem:[#allocation2 + $0x1c0] sm:$0xff] 0.0
          %375 = vst [vmem:[#allocation2 + $0x1c8] sm:$0xff] 0.0
          %376 = vst [vmem:[#allocation2 + $0x1d0] sm:$0xff] 0.0
          %377 = vst [vmem:[#allocation2 + $0x1d8] sm:$0xff] 0.0
          %378 = vst [vmem:[#allocation2 + $0x1e0] sm:$0xff] 0.0
          %379 = vst [vmem:[#allocation2 + $0x1e8] sm:$0xff] 0.0
          %380 = vst [vmem:[#allocation2 + $0x1f0] sm:$0xff] 0.0
          %381 = vst [vmem:[#allocation2 + $0x1f8] sm:$0xff] 0.0
          %382 = vst [vmem:[#allocation2 + $0x200] sm:$0xff] 0.0
          %383 = vst [vmem:[#allocation2 + $0x208] sm:$0xff] 0.0
          %384 = vst [vmem:[#allocation2 + $0x210] sm:$0xff] 0.0
          %385 = vst [vmem:[#allocation2 + $0x218] sm:$0xff] 0.0
          %386 = vst [vmem:[#allocation2 + $0x220] sm:$0xff] 0.0
          %387 = vst [vmem:[#allocation2 + $0x228] sm:$0xff] 0.0
          %388 = vst [vmem:[#allocation2 + $0x230] sm:$0xff] 0.0
          %389 = vst [vmem:[#allocation2 + $0x238] sm:$0xff] 0.0
          %390 = vst [vmem:[#allocation2 + $0x240] sm:$0xff] 0.0
          %391 = vst [vmem:[#allocation2 + $0x248] sm:$0xff] 0.0
          %392 = vst [vmem:[#allocation2 + $0x250] sm:$0xff] 0.0
          %393 = vst [vmem:[#allocation2 + $0x258] sm:$0xff] 0.0
          %394 = vst [vmem:[#allocation2 + $0x260] sm:$0xff] 0.0
          %395 = vst [vmem:[#allocation2 + $0x268] sm:$0xff] 0.0
          %396 = vst [vmem:[#allocation2 + $0x270] sm:$0xff] 0.0
          %397 = vst [vmem:[#allocation2 + $0x278] sm:$0xff] 0.0
          %398 = vst [vmem:[#allocation2 + $0x280] sm:$0xff] 0.0
          %399 = vst [vmem:[#allocation2 + $0x288] sm:$0xff] 0.0
          %400 = vst [vmem:[#allocation2 + $0x290] sm:$0xff] 0.0
          %401 = vst [vmem:[#allocation2 + $0x298] sm:$0xff] 0.0
          %402 = vst [vmem:[#allocation2 + $0x2a0] sm:$0xff] 0.0
          %403 = vst [vmem:[#allocation2 + $0x2a8] sm:$0xff] 0.0
          %404 = vst [vmem:[#allocation2 + $0x2b0] sm:$0xff] 0.0
          %405 = vst [vmem:[#allocation2 + $0x2b8] sm:$0xff] 0.0
          %406 = vst [vmem:[#allocation2 + $0x2c0] sm:$0xff] 0.0
          %407 = vst [vmem:[#allocation2 + $0x2c8] sm:$0xff] 0.0
          %408 = vst [vmem:[#allocation2 + $0x2d0] sm:$0xff] 0.0
          %409 = vst [vmem:[#allocation2 + $0x2d8] sm:$0xff] 0.0
          %410 = vst [vmem:[#allocation2 + $0x2e0] sm:$0xff] 0.0
          %411 = vst [vmem:[#allocation2 + $0x2e8] sm:$0xff] 0.0
          %412 = vst [vmem:[#allocation2 + $0x2f0] sm:$0xff] 0.0
          %413 = vst [vmem:[#allocation2 + $0x2f8] sm:$0xff] 0.0
        $region56: #{tpu_custom_call.1} parent=35 // pred_fallthru
          _
        %v414 = vld [vmem:[#allocation2] sm:$0xff]
        %v415 = vld [vmem:[#allocation2 + $0x8] sm:$0xff]
        %v416 = vld [vmem:[#allocation2 + $0x10] sm:$0xff]
        %v417 = vld [vmem:[#allocation2 + $0x18] sm:$0xff]
        %v418 = vld [vmem:[#allocation2 + $0x20] sm:$0xff]
        %v419 = vld [vmem:[#allocation2 + $0x28] sm:$0xff]
        %v420 = vld [vmem:[#allocation2 + $0x30] sm:$0xff]
        %v421 = vld [vmem:[#allocation2 + $0x38] sm:$0xff]
        %v422 = vld [vmem:[#allocation2 + $0x40] sm:$0xff]
        %v423 = vld [vmem:[#allocation2 + $0x48] sm:$0xff]
        %v424 = vld [vmem:[#allocation2 + $0x50] sm:$0xff]
        %v425 = vld [vmem:[#allocation2 + $0x58] sm:$0xff]
        %v426 = vld [vmem:[#allocation2 + $0x60] sm:$0xff]
        %v427 = vld [vmem:[#allocation2 + $0x68] sm:$0xff]
        %v428 = vld [vmem:[#allocation2 + $0x70] sm:$0xff]
        %v429 = vld [vmem:[#allocation2 + $0x78] sm:$0xff]
        %v430 = vld [vmem:[#allocation2 + $0x80] sm:$0xff]
        %v431 = vld [vmem:[#allocation2 + $0x88] sm:$0xff]
        %v432 = vld [vmem:[#allocation2 + $0x90] sm:$0xff]
        %v433 = vld [vmem:[#allocation2 + $0x98] sm:$0xff]
        %v434 = vld [vmem:[#allocation2 + $0xa0] sm:$0xff]
        %v435 = vld [vmem:[#allocation2 + $0xa8] sm:$0xff]
        %v436 = vld [vmem:[#allocation2 + $0xb0] sm:$0xff]
        %v437 = vld [vmem:[#allocation2 + $0xb8] sm:$0xff]
        %v438 = vld [vmem:[#allocation2 + $0xc0] sm:$0xff]
        %v439 = vld [vmem:[#allocation2 + $0xc8] sm:$0xff]
        %v440 = vld [vmem:[#allocation2 + $0xd0] sm:$0xff]
        %v441 = vld [vmem:[#allocation2 + $0xd8] sm:$0xff]
        %v442 = vld [vmem:[#allocation2 + $0xe0] sm:$0xff]
        %v443 = vld [vmem:[#allocation2 + $0xe8] sm:$0xff]
        %v444 = vld [vmem:[#allocation2 + $0xf0] sm:$0xff]
        %v445 = vld [vmem:[#allocation2 + $0xf8] sm:$0xff]
        %v446 = vld [vmem:[#allocation2 + $0x100] sm:$0xff]
        %v447 = vld [vmem:[#allocation2 + $0x108] sm:$0xff]
        %v448 = vld [vmem:[#allocation2 + $0x110] sm:$0xff]
        %v449 = vld [vmem:[#allocation2 + $0x118] sm:$0xff]
        %v450 = vld [vmem:[#allocation2 + $0x120] sm:$0xff]
        %v451 = vld [vmem:[#allocation2 + $0x128] sm:$0xff]
        %v452 = vld [vmem:[#allocation2 + $0x130] sm:$0xff]
        %v453 = vld [vmem:[#allocation2 + $0x138] sm:$0xff]
        %v454 = vld [vmem:[#allocation2 + $0x140] sm:$0xff]
        %v455 = vld [vmem:[#allocation2 + $0x148] sm:$0xff]
        %v456 = vld [vmem:[#allocation2 + $0x150] sm:$0xff]
        %v457 = vld [vmem:[#allocation2 + $0x158] sm:$0xff]
        %v458 = vld [vmem:[#allocation2 + $0x160] sm:$0xff]
        %v459 = vld [vmem:[#allocation2 + $0x168] sm:$0xff]
        %v460 = vld [vmem:[#allocation2 + $0x170] sm:$0xff]
        %v461 = vld [vmem:[#allocation2 + $0x178] sm:$0xff]
        %v462 = vld [vmem:[#allocation2 + $0x180] sm:$0xff]
        %v463 = vld [vmem:[#allocation2 + $0x188] sm:$0xff]
        %v464 = vld [vmem:[#allocation2 + $0x190] sm:$0xff]
        %v465 = vld [vmem:[#allocation2 + $0x198] sm:$0xff]
        %v466 = vld [vmem:[#allocation2 + $0x1a0] sm:$0xff]
        %v467 = vld [vmem:[#allocation2 + $0x1a8] sm:$0xff]
        %v468 = vld [vmem:[#allocation2 + $0x1b0] sm:$0xff]
        %v469 = vld [vmem:[#allocation2 + $0x1b8] sm:$0xff]
        %v470 = vld [vmem:[#allocation2 + $0x1c0] sm:$0xff]
        %v471 = vld [vmem:[#allocation2 + $0x1c8] sm:$0xff]
        %v472 = vld [vmem:[#allocation2 + $0x1d0] sm:$0xff]
        %v473 = vld [vmem:[#allocation2 + $0x1d8] sm:$0xff]
        %v474 = vld [vmem:[#allocation2 + $0x1e0] sm:$0xff]
        %v475 = vld [vmem:[#allocation2 + $0x1e8] sm:$0xff]
        %v476 = vld [vmem:[#allocation2 + $0x1f0] sm:$0xff]
        %v477 = vld [vmem:[#allocation2 + $0x1f8] sm:$0xff]
        %v478 = vld [vmem:[#allocation2 + $0x200] sm:$0xff]
        %v479 = vld [vmem:[#allocation2 + $0x208] sm:$0xff]
        %v480 = vld [vmem:[#allocation2 + $0x210] sm:$0xff]
        %v481 = vld [vmem:[#allocation2 + $0x218] sm:$0xff]
        %v482 = vld [vmem:[#allocation2 + $0x220] sm:$0xff]
        %v483 = vld [vmem:[#allocation2 + $0x228] sm:$0xff]
        %v484 = vld [vmem:[#allocation2 + $0x230] sm:$0xff]
        %v485 = vld [vmem:[#allocation2 + $0x238] sm:$0xff]
        %v486 = vld [vmem:[#allocation2 + $0x240] sm:$0xff]
        %v487 = vld [vmem:[#allocation2 + $0x248] sm:$0xff]
        %v488 = vld [vmem:[#allocation2 + $0x250] sm:$0xff]
        %v489 = vld [vmem:[#allocation2 + $0x258] sm:$0xff]
        %v490 = vld [vmem:[#allocation2 + $0x260] sm:$0xff]
        %v491 = vld [vmem:[#allocation2 + $0x268] sm:$0xff]
        %v492 = vld [vmem:[#allocation2 + $0x270] sm:$0xff]
        %v493 = vld [vmem:[#allocation2 + $0x278] sm:$0xff]
        %v494 = vld [vmem:[#allocation2 + $0x280] sm:$0xff]
        %v495 = vld [vmem:[#allocation2 + $0x288] sm:$0xff]
        %v496 = vld [vmem:[#allocation2 + $0x290] sm:$0xff]
        %v497 = vld [vmem:[#allocation2 + $0x298] sm:$0xff]
        %v498 = vld [vmem:[#allocation2 + $0x2a0] sm:$0xff]
        %v499 = vld [vmem:[#allocation2 + $0x2a8] sm:$0xff]
        %v500 = vld [vmem:[#allocation2 + $0x2b0] sm:$0xff]
        %v501 = vld [vmem:[#allocation2 + $0x2b8] sm:$0xff]
        %v502 = vld [vmem:[#allocation2 + $0x2c0] sm:$0xff]
        %v503 = vld [vmem:[#allocation2 + $0x2c8] sm:$0xff]
        %v504 = vld [vmem:[#allocation2 + $0x2d0] sm:$0xff]
        %v505 = vld [vmem:[#allocation2 + $0x2d8] sm:$0xff]
        %v506 = vld [vmem:[#allocation2 + $0x2e0] sm:$0xff]
        %v507 = vld [vmem:[#allocation2 + $0x2e8] sm:$0xff]
        %v508 = vld [vmem:[#allocation2 + $0x2f0] sm:$0xff]
        %v509 = vld [vmem:[#allocation2 + $0x2f8] sm:$0xff]
        %v510 = vld [vmem:[%s267] sm:$0xf]
        %v511 = vld [vmem:[%s267 + $0x4] sm:$0xf]
        %v512 = vld [vmem:[%s267 + $0x8] sm:$0xf]
        %v513 = vld [vmem:[%s267 + $0xc] sm:$0xf]
        %v514 = vld [vmem:[%s267 + $0x10] sm:$0xf]
        %v515 = vld [vmem:[%s267 + $0x14] sm:$0xf]
        %v516 = vld [vmem:[%s257] sm:$0xff]
        %v517 = vld [vmem:[%s257 + $0x8] sm:$0xff]
        %v518 = vld [vmem:[%s257 + $0x10] sm:$0xff]
        %v519 = vld [vmem:[%s257 + $0x18] sm:$0xff]
        %v520 = vld [vmem:[%s257 + $0x20] sm:$0xff]
        %v521 = vld [vmem:[%s257 + $0x28] sm:$0xff]
        %v522 = vld [vmem:[%s257 + $0x30] sm:$0xff]
        %v523 = vld [vmem:[%s257 + $0x38] sm:$0xff]
        %v524 = vld [vmem:[%s257 + $0x40] sm:$0xff]
        %v525 = vld [vmem:[%s257 + $0x48] sm:$0xff]
        %v526 = vld [vmem:[%s257 + $0x50] sm:$0xff]
        %v527 = vld [vmem:[%s257 + $0x58] sm:$0xff]
        %v528 = vld [vmem:[%s257 + $0x60] sm:$0xff]
        %v529 = vld [vmem:[%s257 + $0x68] sm:$0xff]
        %v530 = vld [vmem:[%s257 + $0x70] sm:$0xff]
        %v531 = vld [vmem:[%s257 + $0x78] sm:$0xff]
        %v532 = vld [vmem:[%s257 + $0x80] sm:$0xff]
        %v533 = vld [vmem:[%s257 + $0x88] sm:$0xff]
        %v534 = vld [vmem:[%s257 + $0x90] sm:$0xff]
        %v535 = vld [vmem:[%s257 + $0x98] sm:$0xff]
        %v536 = vld [vmem:[%s257 + $0xa0] sm:$0xff]
        %v537 = vld [vmem:[%s257 + $0xa8] sm:$0xff]
        %v538 = vld [vmem:[%s257 + $0xb0] sm:$0xff]
        %v539 = vld [vmem:[%s257 + $0xb8] sm:$0xff]
        %v540 = vld [vmem:[%s257 + $0xc0] sm:$0xff]
        %v541 = vld [vmem:[%s257 + $0xc8] sm:$0xff]
        %v542 = vld [vmem:[%s257 + $0xd0] sm:$0xff]
        %v543 = vld [vmem:[%s257 + $0xd8] sm:$0xff]
        %v544 = vld [vmem:[%s257 + $0xe0] sm:$0xff]
        %v545 = vld [vmem:[%s257 + $0xe8] sm:$0xff]
        %v546 = vld [vmem:[%s257 + $0xf0] sm:$0xff]
        %v547 = vld [vmem:[%s257 + $0xf8] sm:$0xff]
        %v548 = vld [vmem:[%s257 + $0x100] sm:$0xff]
        %v549 = vld [vmem:[%s257 + $0x108] sm:$0xff]
        %v550 = vld [vmem:[%s257 + $0x110] sm:$0xff]
        %v551 = vld [vmem:[%s257 + $0x118] sm:$0xff]
        %v552 = vld [vmem:[%s257 + $0x120] sm:$0xff]
        %v553 = vld [vmem:[%s257 + $0x128] sm:$0xff]
        %v554 = vld [vmem:[%s257 + $0x130] sm:$0xff]
        %v555 = vld [vmem:[%s257 + $0x138] sm:$0xff]
        %v556 = vld [vmem:[%s257 + $0x140] sm:$0xff]
        %v557 = vld [vmem:[%s257 + $0x148] sm:$0xff]
        %v558 = vld [vmem:[%s257 + $0x150] sm:$0xff]
        %v559 = vld [vmem:[%s257 + $0x158] sm:$0xff]
        %v560 = vld [vmem:[%s257 + $0x160] sm:$0xff]
        %v561 = vld [vmem:[%s257 + $0x168] sm:$0xff]
        %v562 = vld [vmem:[%s257 + $0x170] sm:$0xff]
        %v563 = vld [vmem:[%s257 + $0x178] sm:$0xff]
        %v564 = vld [vmem:[%s257 + $0x180] sm:$0xff]
        %v565 = vld [vmem:[%s257 + $0x188] sm:$0xff]
        %v566 = vld [vmem:[%s257 + $0x190] sm:$0xff]
        %v567 = vld [vmem:[%s257 + $0x198] sm:$0xff]
        %v568 = vld [vmem:[%s257 + $0x1a0] sm:$0xff]
        %v569 = vld [vmem:[%s257 + $0x1a8] sm:$0xff]
        %v570 = vld [vmem:[%s257 + $0x1b0] sm:$0xff]
        %v571 = vld [vmem:[%s257 + $0x1b8] sm:$0xff]
        %v572 = vld [vmem:[%s257 + $0x1c0] sm:$0xff]
        %v573 = vld [vmem:[%s257 + $0x1c8] sm:$0xff]
        %v574 = vld [vmem:[%s257 + $0x1d0] sm:$0xff]
        %v575 = vld [vmem:[%s257 + $0x1d8] sm:$0xff]
        %v576 = vld [vmem:[%s257 + $0x1e0] sm:$0xff]
        %v577 = vld [vmem:[%s257 + $0x1e8] sm:$0xff]
        %v578 = vld [vmem:[%s257 + $0x1f0] sm:$0xff]
        %v579 = vld [vmem:[%s257 + $0x1f8] sm:$0xff]
        %v580 = vld [vmem:[%s257 + $0x200] sm:$0xff]
        %v581 = vld [vmem:[%s257 + $0x208] sm:$0xff]
        %v582 = vld [vmem:[%s257 + $0x210] sm:$0xff]
        %v583 = vld [vmem:[%s257 + $0x218] sm:$0xff]
        %v584 = vld [vmem:[%s257 + $0x220] sm:$0xff]
        %v585 = vld [vmem:[%s257 + $0x228] sm:$0xff]
        %v586 = vld [vmem:[%s257 + $0x230] sm:$0xff]
        %v587 = vld [vmem:[%s257 + $0x238] sm:$0xff]
        %v588 = vld [vmem:[%s257 + $0x240] sm:$0xff]
        %v589 = vld [vmem:[%s257 + $0x248] sm:$0xff]
        %v590 = vld [vmem:[%s257 + $0x250] sm:$0xff]
        %v591 = vld [vmem:[%s257 + $0x258] sm:$0xff]
        %v592 = vld [vmem:[%s257 + $0x260] sm:$0xff]
        %v593 = vld [vmem:[%s257 + $0x268] sm:$0xff]
        %v594 = vld [vmem:[%s257 + $0x270] sm:$0xff]
        %v595 = vld [vmem:[%s257 + $0x278] sm:$0xff]
        %v596 = vld [vmem:[%s257 + $0x280] sm:$0xff]
        %v597 = vld [vmem:[%s257 + $0x288] sm:$0xff]
        %v598 = vld [vmem:[%s257 + $0x290] sm:$0xff]
        %v599 = vld [vmem:[%s257 + $0x298] sm:$0xff]
        %v600 = vld [vmem:[%s257 + $0x2a0] sm:$0xff]
        %v601 = vld [vmem:[%s257 + $0x2a8] sm:$0xff]
        %v602 = vld [vmem:[%s257 + $0x2b0] sm:$0xff]
        %v603 = vld [vmem:[%s257 + $0x2b8] sm:$0xff]
        %v604 = vld [vmem:[%s257 + $0x2c0] sm:$0xff]
        %v605 = vld [vmem:[%s257 + $0x2c8] sm:$0xff]
        %v606 = vld [vmem:[%s257 + $0x2d0] sm:$0xff]
        %v607 = vld [vmem:[%s257 + $0x2d8] sm:$0xff]
        %v608 = vld [vmem:[%s257 + $0x2e0] sm:$0xff]
        %v609 = vld [vmem:[%s257 + $0x2e8] sm:$0xff]
        %v610 = vld [vmem:[%s257 + $0x2f0] sm:$0xff]
        %v611 = vld [vmem:[%s257 + $0x2f8] sm:$0xff]
        %v612 = vld [vmem:[%s257 + $0x300] sm:$0xff]
        %v613 = vld [vmem:[%s257 + $0x308] sm:$0xff]
        %v614 = vld [vmem:[%s257 + $0x310] sm:$0xff]
        %v615 = vld [vmem:[%s257 + $0x318] sm:$0xff]
        %v616 = vld [vmem:[%s257 + $0x320] sm:$0xff]
        %v617 = vld [vmem:[%s257 + $0x328] sm:$0xff]
        %v618 = vld [vmem:[%s257 + $0x330] sm:$0xff]
        %v619 = vld [vmem:[%s257 + $0x338] sm:$0xff]
        %v620 = vld [vmem:[%s257 + $0x340] sm:$0xff]
        %v621 = vld [vmem:[%s257 + $0x348] sm:$0xff]
        %v622 = vld [vmem:[%s257 + $0x350] sm:$0xff]
        %v623 = vld [vmem:[%s257 + $0x358] sm:$0xff]
        %v624 = vld [vmem:[%s257 + $0x360] sm:$0xff]
        %v625 = vld [vmem:[%s257 + $0x368] sm:$0xff]
        %v626 = vld [vmem:[%s257 + $0x370] sm:$0xff]
        %v627 = vld [vmem:[%s257 + $0x378] sm:$0xff]
        %v628 = vld [vmem:[%s257 + $0x380] sm:$0xff]
        %v629 = vld [vmem:[%s257 + $0x388] sm:$0xff]
        %v630 = vld [vmem:[%s257 + $0x390] sm:$0xff]
        %v631 = vld [vmem:[%s257 + $0x398] sm:$0xff]
        %v632 = vld [vmem:[%s257 + $0x3a0] sm:$0xff]
        %v633 = vld [vmem:[%s257 + $0x3a8] sm:$0xff]
        %v634 = vld [vmem:[%s257 + $0x3b0] sm:$0xff]
        %v635 = vld [vmem:[%s257 + $0x3b8] sm:$0xff]
        %v636 = vld [vmem:[%s257 + $0x3c0] sm:$0xff]
        %v637 = vld [vmem:[%s257 + $0x3c8] sm:$0xff]
        %v638 = vld [vmem:[%s257 + $0x3d0] sm:$0xff]
        %v639 = vld [vmem:[%s257 + $0x3d8] sm:$0xff]
        %v640 = vld [vmem:[%s257 + $0x3e0] sm:$0xff]
        %v641 = vld [vmem:[%s257 + $0x3e8] sm:$0xff]
        %v642 = vld [vmem:[%s257 + $0x3f0] sm:$0xff]
        %v643 = vld [vmem:[%s257 + $0x3f8] sm:$0xff]
        %v650 = vunpack.c.l.b16 %v510
        %v651 = vunpack.c.l.b16 %v511
        %v652 = vunpack.c.l.b16 %v512
        %v653 = vunpack.c.l.b16 %v513
        %v654 = vunpack.c.l.b16 %v514
        %v655 = vunpack.c.l.b16 %v515
        %v656 = vpack.c.b16 %v651, %v650
        %v657 = vpack.c.b16 %v653, %v652
        %v658 = vpack.c.b16 %v655, %v654
        %v790 = vunpack.c.l.b16 %v516
        %v791 = vunpack.c.h.b16 %v516
        %v792 = vunpack.c.l.b16 %v517
        %v793 = vunpack.c.h.b16 %v517
        %v794 = vunpack.c.l.b16 %v518
        %v795 = vunpack.c.h.b16 %v518
        %v796 = vunpack.c.l.b16 %v519
        %v797 = vunpack.c.h.b16 %v519
        %v798 = vunpack.c.l.b16 %v520
        %v799 = vunpack.c.h.b16 %v520
        %v800 = vunpack.c.l.b16 %v521
        %v801 = vunpack.c.h.b16 %v521
        %v802 = vunpack.c.l.b16 %v522
        %v803 = vunpack.c.h.b16 %v522
        %v804 = vunpack.c.l.b16 %v523
        %v805 = vunpack.c.h.b16 %v523
        %v806 = vunpack.c.l.b16 %v524
        %v807 = vunpack.c.h.b16 %v524
        %v808 = vunpack.c.l.b16 %v525
        %v809 = vunpack.c.h.b16 %v525
        %v810 = vunpack.c.l.b16 %v526
        %v811 = vunpack.c.h.b16 %v526
        %v812 = vunpack.c.l.b16 %v527
        %v813 = vunpack.c.h.b16 %v527
        %v814 = vunpack.c.l.b16 %v528
        %v815 = vunpack.c.h.b16 %v528
        %v816 = vunpack.c.l.b16 %v529
        %v817 = vunpack.c.h.b16 %v529
        %v818 = vunpack.c.l.b16 %v530
        %v819 = vunpack.c.h.b16 %v530
        %v820 = vunpack.c.l.b16 %v531
        %v821 = vunpack.c.h.b16 %v531
        %v822 = vunpack.c.l.b16 %v532
        %v823 = vunpack.c.h.b16 %v532
        %v824 = vunpack.c.l.b16 %v533
        %v825 = vunpack.c.h.b16 %v533
        %v826 = vunpack.c.l.b16 %v534
        %v827 = vunpack.c.h.b16 %v534
        %v828 = vunpack.c.l.b16 %v535
        %v829 = vunpack.c.h.b16 %v535
        %v830 = vunpack.c.l.b16 %v536
        %v831 = vunpack.c.h.b16 %v536
        %v832 = vunpack.c.l.b16 %v537
        %v833 = vunpack.c.h.b16 %v537
        %v834 = vunpack.c.l.b16 %v538
        %v835 = vunpack.c.h.b16 %v538
        %v836 = vunpack.c.l.b16 %v539
        %v837 = vunpack.c.h.b16 %v539
        %v838 = vunpack.c.l.b16 %v540
        %v839 = vunpack.c.h.b16 %v540
        %v840 = vunpack.c.l.b16 %v541
        %v841 = vunpack.c.h.b16 %v541
        %v842 = vunpack.c.l.b16 %v542
        %v843 = vunpack.c.h.b16 %v542
        %v844 = vunpack.c.l.b16 %v543
        %v845 = vunpack.c.h.b16 %v543
        %v846 = vunpack.c.l.b16 %v544
        %v847 = vunpack.c.h.b16 %v544
        %v848 = vunpack.c.l.b16 %v545
        %v849 = vunpack.c.h.b16 %v545
        %v850 = vunpack.c.l.b16 %v546
        %v851 = vunpack.c.h.b16 %v546
        %v852 = vunpack.c.l.b16 %v547
        %v853 = vunpack.c.h.b16 %v547
        %v854 = vunpack.c.l.b16 %v548
        %v855 = vunpack.c.h.b16 %v548
        %v856 = vunpack.c.l.b16 %v549
        %v857 = vunpack.c.h.b16 %v549
        %v858 = vunpack.c.l.b16 %v550
        %v859 = vunpack.c.h.b16 %v550
        %v860 = vunpack.c.l.b16 %v551
        %v861 = vunpack.c.h.b16 %v551
        %v862 = vunpack.c.l.b16 %v552
        %v863 = vunpack.c.h.b16 %v552
        %v864 = vunpack.c.l.b16 %v553
        %v865 = vunpack.c.h.b16 %v553
        %v866 = vunpack.c.l.b16 %v554
        %v867 = vunpack.c.h.b16 %v554
        %v868 = vunpack.c.l.b16 %v555
        %v869 = vunpack.c.h.b16 %v555
        %v870 = vunpack.c.l.b16 %v556
        %v871 = vunpack.c.h.b16 %v556
        %v872 = vunpack.c.l.b16 %v557
        %v873 = vunpack.c.h.b16 %v557
        %v874 = vunpack.c.l.b16 %v558
        %v875 = vunpack.c.h.b16 %v558
        %v876 = vunpack.c.l.b16 %v559
        %v877 = vunpack.c.h.b16 %v559
        %v878 = vunpack.c.l.b16 %v560
        %v879 = vunpack.c.h.b16 %v560
        %v880 = vunpack.c.l.b16 %v561
        %v881 = vunpack.c.h.b16 %v561
        %v882 = vunpack.c.l.b16 %v562
        %v883 = vunpack.c.h.b16 %v562
        %v884 = vunpack.c.l.b16 %v563
        %v885 = vunpack.c.h.b16 %v563
        %v886 = vunpack.c.l.b16 %v564
        %v887 = vunpack.c.h.b16 %v564
        %v888 = vunpack.c.l.b16 %v565
        %v889 = vunpack.c.h.b16 %v565
        %v890 = vunpack.c.l.b16 %v566
        %v891 = vunpack.c.h.b16 %v566
        %v892 = vunpack.c.l.b16 %v567
        %v893 = vunpack.c.h.b16 %v567
        %v894 = vunpack.c.l.b16 %v568
        %v895 = vunpack.c.h.b16 %v568
        %v896 = vunpack.c.l.b16 %v569
        %v897 = vunpack.c.h.b16 %v569
        %v898 = vunpack.c.l.b16 %v570
        %v899 = vunpack.c.h.b16 %v570
        %v900 = vunpack.c.l.b16 %v571
        %v901 = vunpack.c.h.b16 %v571
        %v902 = vunpack.c.l.b16 %v572
        %v903 = vunpack.c.h.b16 %v572
        %v904 = vunpack.c.l.b16 %v573
        %v905 = vunpack.c.h.b16 %v573
        %v906 = vunpack.c.l.b16 %v574
        %v907 = vunpack.c.h.b16 %v574
        %v908 = vunpack.c.l.b16 %v575
        %v909 = vunpack.c.h.b16 %v575
        %v910 = vunpack.c.l.b16 %v576
        %v911 = vunpack.c.h.b16 %v576
        %v912 = vunpack.c.l.b16 %v577
        %v913 = vunpack.c.h.b16 %v577
        %v914 = vunpack.c.l.b16 %v578
        %v915 = vunpack.c.h.b16 %v578
        %v916 = vunpack.c.l.b16 %v579
        %v917 = vunpack.c.h.b16 %v579
        %v918 = vunpack.c.l.b16 %v580
        %v919 = vunpack.c.h.b16 %v580
        %v920 = vunpack.c.l.b16 %v581
        %v921 = vunpack.c.h.b16 %v581
        %v922 = vunpack.c.l.b16 %v582
        %v923 = vunpack.c.h.b16 %v582
        %v924 = vunpack.c.l.b16 %v583
        %v925 = vunpack.c.h.b16 %v583
        %v926 = vunpack.c.l.b16 %v584
        %v927 = vunpack.c.h.b16 %v584
        %v928 = vunpack.c.l.b16 %v585
        %v929 = vunpack.c.h.b16 %v585
        %v930 = vunpack.c.l.b16 %v586
        %v931 = vunpack.c.h.b16 %v586
        %v932 = vunpack.c.l.b16 %v587
        %v933 = vunpack.c.h.b16 %v587
        %v934 = vunpack.c.l.b16 %v588
        %v935 = vunpack.c.h.b16 %v588
        %v936 = vunpack.c.l.b16 %v589
        %v937 = vunpack.c.h.b16 %v589
        %v938 = vunpack.c.l.b16 %v590
        %v939 = vunpack.c.h.b16 %v590
        %v940 = vunpack.c.l.b16 %v591
        %v941 = vunpack.c.h.b16 %v591
        %v942 = vunpack.c.l.b16 %v592
        %v943 = vunpack.c.h.b16 %v592
        %v944 = vunpack.c.l.b16 %v593
        %v945 = vunpack.c.h.b16 %v593
        %v946 = vunpack.c.l.b16 %v594
        %v947 = vunpack.c.h.b16 %v594
        %v948 = vunpack.c.l.b16 %v595
        %v949 = vunpack.c.h.b16 %v595
        %v950 = vunpack.c.l.b16 %v596
        %v951 = vunpack.c.h.b16 %v596
        %v952 = vunpack.c.l.b16 %v597
        %v953 = vunpack.c.h.b16 %v597
        %v954 = vunpack.c.l.b16 %v598
        %v955 = vunpack.c.h.b16 %v598
        %v956 = vunpack.c.l.b16 %v599
        %v957 = vunpack.c.h.b16 %v599
        %v958 = vunpack.c.l.b16 %v600
        %v959 = vunpack.c.h.b16 %v600
        %v960 = vunpack.c.l.b16 %v601
        %v961 = vunpack.c.h.b16 %v601
        %v962 = vunpack.c.l.b16 %v602
        %v963 = vunpack.c.h.b16 %v602
        %v964 = vunpack.c.l.b16 %v603
        %v965 = vunpack.c.h.b16 %v603
        %v966 = vunpack.c.l.b16 %v604
        %v967 = vunpack.c.h.b16 %v604
        %v968 = vunpack.c.l.b16 %v605
        %v969 = vunpack.c.h.b16 %v605
        %v970 = vunpack.c.l.b16 %v606
        %v971 = vunpack.c.h.b16 %v606
        %v972 = vunpack.c.l.b16 %v607
        %v973 = vunpack.c.h.b16 %v607
        %v974 = vunpack.c.l.b16 %v608
        %v975 = vunpack.c.h.b16 %v608
        %v976 = vunpack.c.l.b16 %v609
        %v977 = vunpack.c.h.b16 %v609
        %v978 = vunpack.c.l.b16 %v610
        %v979 = vunpack.c.h.b16 %v610
        %v980 = vunpack.c.l.b16 %v611
        %v981 = vunpack.c.h.b16 %v611
        %v982 = vunpack.c.l.b16 %v612
        %v983 = vunpack.c.h.b16 %v612
        %v984 = vunpack.c.l.b16 %v613
        %v985 = vunpack.c.h.b16 %v613
        %v986 = vunpack.c.l.b16 %v614
        %v987 = vunpack.c.h.b16 %v614
        %v988 = vunpack.c.l.b16 %v615
        %v989 = vunpack.c.h.b16 %v615
        %v990 = vunpack.c.l.b16 %v616
        %v991 = vunpack.c.h.b16 %v616
        %v992 = vunpack.c.l.b16 %v617
        %v993 = vunpack.c.h.b16 %v617
        %v994 = vunpack.c.l.b16 %v618
        %v995 = vunpack.c.h.b16 %v618
        %v996 = vunpack.c.l.b16 %v619
        %v997 = vunpack.c.h.b16 %v619
        %v998 = vunpack.c.l.b16 %v620
        %v999 = vunpack.c.h.b16 %v620
        %v1000 = vunpack.c.l.b16 %v621
        %v1001 = vunpack.c.h.b16 %v621
        %v1002 = vunpack.c.l.b16 %v622
        %v1003 = vunpack.c.h.b16 %v622
        %v1004 = vunpack.c.l.b16 %v623
        %v1005 = vunpack.c.h.b16 %v623
        %v1006 = vunpack.c.l.b16 %v624
        %v1007 = vunpack.c.h.b16 %v624
        %v1008 = vunpack.c.l.b16 %v625
        %v1009 = vunpack.c.h.b16 %v625
        %v1010 = vunpack.c.l.b16 %v626
        %v1011 = vunpack.c.h.b16 %v626
        %v1012 = vunpack.c.l.b16 %v627
        %v1013 = vunpack.c.h.b16 %v627
        %v1014 = vunpack.c.l.b16 %v628
        %v1015 = vunpack.c.h.b16 %v628
        %v1016 = vunpack.c.l.b16 %v629
        %v1017 = vunpack.c.h.b16 %v629
        %v1018 = vunpack.c.l.b16 %v630
        %v1019 = vunpack.c.h.b16 %v630
        %v1020 = vunpack.c.l.b16 %v631
        %v1021 = vunpack.c.h.b16 %v631
        %v1022 = vunpack.c.l.b16 %v632
        %v1023 = vunpack.c.h.b16 %v632
        %v1024 = vunpack.c.l.b16 %v633
        %v1025 = vunpack.c.h.b16 %v633
        %v1026 = vunpack.c.l.b16 %v634
        %v1027 = vunpack.c.h.b16 %v634
        %v1028 = vunpack.c.l.b16 %v635
        %v1029 = vunpack.c.h.b16 %v635
        %v1030 = vunpack.c.l.b16 %v636
        %v1031 = vunpack.c.h.b16 %v636
        %v1032 = vunpack.c.l.b16 %v637
        %v1033 = vunpack.c.h.b16 %v637
        %v1034 = vunpack.c.l.b16 %v638
        %v1035 = vunpack.c.h.b16 %v638
        %v1036 = vunpack.c.l.b16 %v639
        %v1037 = vunpack.c.h.b16 %v639
        %v1038 = vunpack.c.l.b16 %v640
        %v1039 = vunpack.c.h.b16 %v640
        %v1040 = vunpack.c.l.b16 %v641
        %v1041 = vunpack.c.h.b16 %v641
        %v1042 = vunpack.c.l.b16 %v642
        %v1043 = vunpack.c.h.b16 %v642
        %v1044 = vunpack.c.l.b16 %v643
        %v1045 = vunpack.c.h.b16 %v643
        %v1046 = vpack.c.b16 %v806, %v790
        %v1047 = vpack.c.b16 %v807, %v791
        %v1048 = vpack.c.b16 %v808, %v792
        %v1049 = vpack.c.b16 %v809, %v793
        %v1050 = vpack.c.b16 %v810, %v794
        %v1051 = vpack.c.b16 %v811, %v795
        %v1052 = vpack.c.b16 %v812, %v796
        %v1053 = vpack.c.b16 %v813, %v797
        %v1054 = vpack.c.b16 %v814, %v798
        %v1055 = vpack.c.b16 %v815, %v799
        %v1056 = vpack.c.b16 %v816, %v800
        %v1057 = vpack.c.b16 %v817, %v801
        %v1058 = vpack.c.b16 %v818, %v802
        %v1059 = vpack.c.b16 %v819, %v803
        %v1060 = vpack.c.b16 %v820, %v804
        %v1061 = vpack.c.b16 %v821, %v805
        %v1062 = vpack.c.b16 %v838, %v822
        %v1063 = vpack.c.b16 %v839, %v823
        %v1064 = vpack.c.b16 %v840, %v824
        %v1065 = vpack.c.b16 %v841, %v825
        %v1066 = vpack.c.b16 %v842, %v826
        %v1067 = vpack.c.b16 %v843, %v827
        %v1068 = vpack.c.b16 %v844, %v828
        %v1069 = vpack.c.b16 %v845, %v829
        %v1070 = vpack.c.b16 %v846, %v830
        %v1071 = vpack.c.b16 %v847, %v831
        %v1072 = vpack.c.b16 %v848, %v832
        %v1073 = vpack.c.b16 %v849, %v833
        %v1074 = vpack.c.b16 %v850, %v834
        %v1075 = vpack.c.b16 %v851, %v835
        %v1076 = vpack.c.b16 %v852, %v836
        %v1077 = vpack.c.b16 %v853, %v837
        %v1078 = vpack.c.b16 %v870, %v854
        %v1079 = vpack.c.b16 %v871, %v855
        %v1080 = vpack.c.b16 %v872, %v856
        %v1081 = vpack.c.b16 %v873, %v857
        %v1082 = vpack.c.b16 %v874, %v858
        %v1083 = vpack.c.b16 %v875, %v859
        %v1084 = vpack.c.b16 %v876, %v860
        %v1085 = vpack.c.b16 %v877, %v861
        %v1086 = vpack.c.b16 %v878, %v862
        %v1087 = vpack.c.b16 %v879, %v863
        %v1088 = vpack.c.b16 %v880, %v864
        %v1089 = vpack.c.b16 %v881, %v865
        %v1090 = vpack.c.b16 %v882, %v866
        %v1091 = vpack.c.b16 %v883, %v867
        %v1092 = vpack.c.b16 %v884, %v868
        %v1093 = vpack.c.b16 %v885, %v869
        %v1094 = vpack.c.b16 %v902, %v886
        %v1095 = vpack.c.b16 %v903, %v887
        %v1096 = vpack.c.b16 %v904, %v888
        %v1097 = vpack.c.b16 %v905, %v889
        %v1098 = vpack.c.b16 %v906, %v890
        %v1099 = vpack.c.b16 %v907, %v891
        %v1100 = vpack.c.b16 %v908, %v892
        %v1101 = vpack.c.b16 %v909, %v893
        %v1102 = vpack.c.b16 %v910, %v894
        %v1103 = vpack.c.b16 %v911, %v895
        %v1104 = vpack.c.b16 %v912, %v896
        %v1105 = vpack.c.b16 %v913, %v897
        %v1106 = vpack.c.b16 %v914, %v898
        %v1107 = vpack.c.b16 %v915, %v899
        %v1108 = vpack.c.b16 %v916, %v900
        %v1109 = vpack.c.b16 %v917, %v901
        %v1110 = vpack.c.b16 %v934, %v918
        %v1111 = vpack.c.b16 %v935, %v919
        %v1112 = vpack.c.b16 %v936, %v920
        %v1113 = vpack.c.b16 %v937, %v921
        %v1114 = vpack.c.b16 %v938, %v922
        %v1115 = vpack.c.b16 %v939, %v923
        %v1116 = vpack.c.b16 %v940, %v924
        %v1117 = vpack.c.b16 %v941, %v925
        %v1118 = vpack.c.b16 %v942, %v926
        %v1119 = vpack.c.b16 %v943, %v927
        %v1120 = vpack.c.b16 %v944, %v928
        %v1121 = vpack.c.b16 %v945, %v929
        %v1122 = vpack.c.b16 %v946, %v930
        %v1123 = vpack.c.b16 %v947, %v931
        %v1124 = vpack.c.b16 %v948, %v932
        %v1125 = vpack.c.b16 %v949, %v933
        %v1126 = vpack.c.b16 %v966, %v950
        %v1127 = vpack.c.b16 %v967, %v951
        %v1128 = vpack.c.b16 %v968, %v952
        %v1129 = vpack.c.b16 %v969, %v953
        %v1130 = vpack.c.b16 %v970, %v954
        %v1131 = vpack.c.b16 %v971, %v955
        %v1132 = vpack.c.b16 %v972, %v956
        %v1133 = vpack.c.b16 %v973, %v957
        %v1134 = vpack.c.b16 %v974, %v958
        %v1135 = vpack.c.b16 %v975, %v959
        %v1136 = vpack.c.b16 %v976, %v960
        %v1137 = vpack.c.b16 %v977, %v961
        %v1138 = vpack.c.b16 %v978, %v962
        %v1139 = vpack.c.b16 %v979, %v963
        %v1140 = vpack.c.b16 %v980, %v964
        %v1141 = vpack.c.b16 %v981, %v965
        %v1142 = vpack.c.b16 %v998, %v982
        %v1143 = vpack.c.b16 %v999, %v983
        %v1144 = vpack.c.b16 %v1000, %v984
        %v1145 = vpack.c.b16 %v1001, %v985
        %v1146 = vpack.c.b16 %v1002, %v986
        %v1147 = vpack.c.b16 %v1003, %v987
        %v1148 = vpack.c.b16 %v1004, %v988
        %v1149 = vpack.c.b16 %v1005, %v989
        %v1150 = vpack.c.b16 %v1006, %v990
        %v1151 = vpack.c.b16 %v1007, %v991
        %v1152 = vpack.c.b16 %v1008, %v992
        %v1153 = vpack.c.b16 %v1009, %v993
        %v1154 = vpack.c.b16 %v1010, %v994
        %v1155 = vpack.c.b16 %v1011, %v995
        %v1156 = vpack.c.b16 %v1012, %v996
        %v1157 = vpack.c.b16 %v1013, %v997
        %v1158 = vpack.c.b16 %v1030, %v1014
        %v1159 = vpack.c.b16 %v1031, %v1015
        %v1160 = vpack.c.b16 %v1032, %v1016
        %v1161 = vpack.c.b16 %v1033, %v1017
        %v1162 = vpack.c.b16 %v1034, %v1018
        %v1163 = vpack.c.b16 %v1035, %v1019
        %v1164 = vpack.c.b16 %v1036, %v1020
        %v1165 = vpack.c.b16 %v1037, %v1021
        %v1166 = vpack.c.b16 %v1038, %v1022
        %v1167 = vpack.c.b16 %v1039, %v1023
        %v1168 = vpack.c.b16 %v1040, %v1024
        %v1169 = vpack.c.b16 %v1041, %v1025
        %v1170 = vpack.c.b16 %v1042, %v1026
        %v1171 = vpack.c.b16 %v1043, %v1027
        %v1172 = vpack.c.b16 %v1044, %v1028
        %v1173 = vpack.c.b16 %v1045, %v1029
        %1302 = vmatpush.bf16.msra.mxu0 %v1158
        %1303 = vmatpush.bf16.msra.mxu0 %v1142
        %1304 = vmatpush.bf16.msra.mxu0 %v1126
        %1305 = vmatpush.bf16.msra.mxu0 %v1110
        %1306 = vmatpush.bf16.msra.mxu0 %v1094
        %1307 = vmatpush.bf16.msra.mxu0 %v1078
        %1308 = vmatpush.bf16.msra.mxu0 %v1062
        %1309 = vmatpush.bf16.msra.mxu0 %v1046
        %1310 = vmatmul.bf16.gmra.mxu0 %v656
        %v1311 = vpop.f32.mrf.mxu0
        %v1312 = vadd.f32 0.0, %v1311
        %v1313 = vpop.f32.mrf.mxu0
        %v1314 = vadd.f32 0.0, %v1313
        %1315 = vmatmul.bf16.gmra.mxu0 %v657
        %v1316 = vpop.f32.mrf.mxu0
        %v1317 = vadd.f32 0.0, %v1316
        %v1318 = vpop.f32.mrf.mxu0
        %v1319 = vadd.f32 0.0, %v1318
        %1320 = vmatmul.bf16.gmra.mxu0 %v658
        %v1321 = vpop.f32.mrf.mxu0
        %v1322 = vadd.f32 0.0, %v1321
        %v1323 = vpop.f32.mrf.mxu0
        %v1324 = vadd.f32 0.0, %v1323
        %1325 = vdwg.mxu0
        %1326 = vmatpush.bf16.msra.mxu0 %v1159
        %1327 = vmatpush.bf16.msra.mxu0 %v1143
        %1328 = vmatpush.bf16.msra.mxu0 %v1127
        %1329 = vmatpush.bf16.msra.mxu0 %v1111
        %1330 = vmatpush.bf16.msra.mxu0 %v1095
        %1331 = vmatpush.bf16.msra.mxu0 %v1079
        %1332 = vmatpush.bf16.msra.mxu0 %v1063
        %1333 = vmatpush.bf16.msra.mxu0 %v1047
        %1334 = vmatmul.bf16.gmra.mxu0 %v656
        %v1335 = vpop.f32.mrf.mxu0
        %v1336 = vadd.f32 0.0, %v1335
        %v1337 = vpop.f32.mrf.mxu0
        %v1338 = vadd.f32 0.0, %v1337
        %1339 = vmatmul.bf16.gmra.mxu0 %v657
        %v1340 = vpop.f32.mrf.mxu0
        %v1341 = vadd.f32 0.0, %v1340
        %v1342 = vpop.f32.mrf.mxu0
        %v1343 = vadd.f32 0.0, %v1342
        %1344 = vmatmul.bf16.gmra.mxu0 %v658
        %v1345 = vpop.f32.mrf.mxu0
        %v1346 = vadd.f32 0.0, %v1345
        %v1347 = vpop.f32.mrf.mxu0
        %v1348 = vadd.f32 0.0, %v1347
        %1349 = vdwg.mxu0
        %1350 = vmatpush.bf16.msra.mxu0 %v1160
        %1351 = vmatpush.bf16.msra.mxu0 %v1144
        %1352 = vmatpush.bf16.msra.mxu0 %v1128
        %1353 = vmatpush.bf16.msra.mxu0 %v1112
        %1354 = vmatpush.bf16.msra.mxu0 %v1096
        %1355 = vmatpush.bf16.msra.mxu0 %v1080
        %1356 = vmatpush.bf16.msra.mxu0 %v1064
        %1357 = vmatpush.bf16.msra.mxu0 %v1048
        %1358 = vmatmul.bf16.gmra.mxu0 %v656
        %v1359 = vpop.f32.mrf.mxu0
        %v1360 = vadd.f32 0.0, %v1359
        %v1361 = vpop.f32.mrf.mxu0
        %v1362 = vadd.f32 0.0, %v1361
        %1363 = vmatmul.bf16.gmra.mxu0 %v657
        %v1364 = vpop.f32.mrf.mxu0
        %v1365 = vadd.f32 0.0, %v1364
        %v1366 = vpop.f32.mrf.mxu0
        %v1367 = vadd.f32 0.0, %v1366
        %1368 = vmatmul.bf16.gmra.mxu0 %v658
        %v1369 = vpop.f32.mrf.mxu0
        %v1370 = vadd.f32 0.0, %v1369
        %v1371 = vpop.f32.mrf.mxu0
        %v1372 = vadd.f32 0.0, %v1371
        %1373 = vdwg.mxu0
        %1374 = vmatpush.bf16.msra.mxu0 %v1161
        %1375 = vmatpush.bf16.msra.mxu0 %v1145
        %1376 = vmatpush.bf16.msra.mxu0 %v1129
        %1377 = vmatpush.bf16.msra.mxu0 %v1113
        %1378 = vmatpush.bf16.msra.mxu0 %v1097
        %1379 = vmatpush.bf16.msra.mxu0 %v1081
        %1380 = vmatpush.bf16.msra.mxu0 %v1065
        %1381 = vmatpush.bf16.msra.mxu0 %v1049
        %1382 = vmatmul.bf16.gmra.mxu0 %v656
        %v1383 = vpop.f32.mrf.mxu0
        %v1384 = vadd.f32 0.0, %v1383
        %v1385 = vpop.f32.mrf.mxu0
        %v1386 = vadd.f32 0.0, %v1385
        %1387 = vmatmul.bf16.gmra.mxu0 %v657
        %v1388 = vpop.f32.mrf.mxu0
        %v1389 = vadd.f32 0.0, %v1388
        %v1390 = vpop.f32.mrf.mxu0
        %v1391 = vadd.f32 0.0, %v1390
        %1392 = vmatmul.bf16.gmra.mxu0 %v658
        %v1393 = vpop.f32.mrf.mxu0
        %v1394 = vadd.f32 0.0, %v1393
        %v1395 = vpop.f32.mrf.mxu0
        %v1396 = vadd.f32 0.0, %v1395
        %1397 = vdwg.mxu0
        %1398 = vmatpush.bf16.msra.mxu0 %v1162
        %1399 = vmatpush.bf16.msra.mxu0 %v1146
        %1400 = vmatpush.bf16.msra.mxu0 %v1130
        %1401 = vmatpush.bf16.msra.mxu0 %v1114
        %1402 = vmatpush.bf16.msra.mxu0 %v1098
        %1403 = vmatpush.bf16.msra.mxu0 %v1082
        %1404 = vmatpush.bf16.msra.mxu0 %v1066
        %1405 = vmatpush.bf16.msra.mxu0 %v1050
        %1406 = vmatmul.bf16.gmra.mxu0 %v656
        %v1407 = vpop.f32.mrf.mxu0
        %v1408 = vadd.f32 0.0, %v1407
        %v1409 = vpop.f32.mrf.mxu0
        %v1410 = vadd.f32 0.0, %v1409
        %1411 = vmatmul.bf16.gmra.mxu0 %v657
        %v1412 = vpop.f32.mrf.mxu0
        %v1413 = vadd.f32 0.0, %v1412
        %v1414 = vpop.f32.mrf.mxu0
        %v1415 = vadd.f32 0.0, %v1414
        %1416 = vmatmul.bf16.gmra.mxu0 %v658
        %v1417 = vpop.f32.mrf.mxu0
        %v1418 = vadd.f32 0.0, %v1417
        %v1419 = vpop.f32.mrf.mxu0
        %v1420 = vadd.f32 0.0, %v1419
        %1421 = vdwg.mxu0
        %1422 = vmatpush.bf16.msra.mxu0 %v1163
        %1423 = vmatpush.bf16.msra.mxu0 %v1147
        %1424 = vmatpush.bf16.msra.mxu0 %v1131
        %1425 = vmatpush.bf16.msra.mxu0 %v1115
        %1426 = vmatpush.bf16.msra.mxu0 %v1099
        %1427 = vmatpush.bf16.msra.mxu0 %v1083
        %1428 = vmatpush.bf16.msra.mxu0 %v1067
        %1429 = vmatpush.bf16.msra.mxu0 %v1051
        %1430 = vmatmul.bf16.gmra.mxu0 %v656
        %v1431 = vpop.f32.mrf.mxu0
        %v1432 = vadd.f32 0.0, %v1431
        %v1433 = vpop.f32.mrf.mxu0
        %v1434 = vadd.f32 0.0, %v1433
        %1435 = vmatmul.bf16.gmra.mxu0 %v657
        %v1436 = vpop.f32.mrf.mxu0
        %v1437 = vadd.f32 0.0, %v1436
        %v1438 = vpop.f32.mrf.mxu0
        %v1439 = vadd.f32 0.0, %v1438
        %1440 = vmatmul.bf16.gmra.mxu0 %v658
        %v1441 = vpop.f32.mrf.mxu0
        %v1442 = vadd.f32 0.0, %v1441
        %v1443 = vpop.f32.mrf.mxu0
        %v1444 = vadd.f32 0.0, %v1443
        %1445 = vdwg.mxu0
        %1446 = vmatpush.bf16.msra.mxu0 %v1164
        %1447 = vmatpush.bf16.msra.mxu0 %v1148
        %1448 = vmatpush.bf16.msra.mxu0 %v1132
        %1449 = vmatpush.bf16.msra.mxu0 %v1116
        %1450 = vmatpush.bf16.msra.mxu0 %v1100
        %1451 = vmatpush.bf16.msra.mxu0 %v1084
        %1452 = vmatpush.bf16.msra.mxu0 %v1068
        %1453 = vmatpush.bf16.msra.mxu0 %v1052
        %1454 = vmatmul.bf16.gmra.mxu0 %v656
        %v1455 = vpop.f32.mrf.mxu0
        %v1456 = vadd.f32 0.0, %v1455
        %v1457 = vpop.f32.mrf.mxu0
        %v1458 = vadd.f32 0.0, %v1457
        %1459 = vmatmul.bf16.gmra.mxu0 %v657
        %v1460 = vpop.f32.mrf.mxu0
        %v1461 = vadd.f32 0.0, %v1460
        %v1462 = vpop.f32.mrf.mxu0
        %v1463 = vadd.f32 0.0, %v1462
        %1464 = vmatmul.bf16.gmra.mxu0 %v658
        %v1465 = vpop.f32.mrf.mxu0
        %v1466 = vadd.f32 0.0, %v1465
        %v1467 = vpop.f32.mrf.mxu0
        %v1468 = vadd.f32 0.0, %v1467
        %1469 = vdwg.mxu0
        %1470 = vmatpush.bf16.msra.mxu0 %v1165
        %1471 = vmatpush.bf16.msra.mxu0 %v1149
        %1472 = vmatpush.bf16.msra.mxu0 %v1133
        %1473 = vmatpush.bf16.msra.mxu0 %v1117
        %1474 = vmatpush.bf16.msra.mxu0 %v1101
        %1475 = vmatpush.bf16.msra.mxu0 %v1085
        %1476 = vmatpush.bf16.msra.mxu0 %v1069
        %1477 = vmatpush.bf16.msra.mxu0 %v1053
        %1478 = vmatmul.bf16.gmra.mxu0 %v656
        %v1479 = vpop.f32.mrf.mxu0
        %v1480 = vadd.f32 0.0, %v1479
        %v1481 = vpop.f32.mrf.mxu0
        %v1482 = vadd.f32 0.0, %v1481
        %1483 = vmatmul.bf16.gmra.mxu0 %v657
        %v1484 = vpop.f32.mrf.mxu0
        %v1485 = vadd.f32 0.0, %v1484
        %v1486 = vpop.f32.mrf.mxu0
        %v1487 = vadd.f32 0.0, %v1486
        %1488 = vmatmul.bf16.gmra.mxu0 %v658
        %v1489 = vpop.f32.mrf.mxu0
        %v1490 = vadd.f32 0.0, %v1489
        %v1491 = vpop.f32.mrf.mxu0
        %v1492 = vadd.f32 0.0, %v1491
        %1493 = vdwg.mxu0
        %1494 = vmatpush.bf16.msra.mxu0 %v1166
        %1495 = vmatpush.bf16.msra.mxu0 %v1150
        %1496 = vmatpush.bf16.msra.mxu0 %v1134
        %1497 = vmatpush.bf16.msra.mxu0 %v1118
        %1498 = vmatpush.bf16.msra.mxu0 %v1102
        %1499 = vmatpush.bf16.msra.mxu0 %v1086
        %1500 = vmatpush.bf16.msra.mxu0 %v1070
        %1501 = vmatpush.bf16.msra.mxu0 %v1054
        %1502 = vmatmul.bf16.gmra.mxu0 %v656
        %v1503 = vpop.f32.mrf.mxu0
        %v1504 = vadd.f32 0.0, %v1503
        %v1505 = vpop.f32.mrf.mxu0
        %v1506 = vadd.f32 0.0, %v1505
        %1507 = vmatmul.bf16.gmra.mxu0 %v657
        %v1508 = vpop.f32.mrf.mxu0
        %v1509 = vadd.f32 0.0, %v1508
        %v1510 = vpop.f32.mrf.mxu0
        %v1511 = vadd.f32 0.0, %v1510
        %1512 = vmatmul.bf16.gmra.mxu0 %v658
        %v1513 = vpop.f32.mrf.mxu0
        %v1514 = vadd.f32 0.0, %v1513
        %v1515 = vpop.f32.mrf.mxu0
        %v1516 = vadd.f32 0.0, %v1515
        %1517 = vdwg.mxu0
        %1518 = vmatpush.bf16.msra.mxu0 %v1167
        %1519 = vmatpush.bf16.msra.mxu0 %v1151
        %1520 = vmatpush.bf16.msra.mxu0 %v1135
        %1521 = vmatpush.bf16.msra.mxu0 %v1119
        %1522 = vmatpush.bf16.msra.mxu0 %v1103
        %1523 = vmatpush.bf16.msra.mxu0 %v1087
        %1524 = vmatpush.bf16.msra.mxu0 %v1071
        %1525 = vmatpush.bf16.msra.mxu0 %v1055
        %1526 = vmatmul.bf16.gmra.mxu0 %v656
        %v1527 = vpop.f32.mrf.mxu0
        %v1528 = vadd.f32 0.0, %v1527
        %v1529 = vpop.f32.mrf.mxu0
        %v1530 = vadd.f32 0.0, %v1529
        %1531 = vmatmul.bf16.gmra.mxu0 %v657
        %v1532 = vpop.f32.mrf.mxu0
        %v1533 = vadd.f32 0.0, %v1532
        %v1534 = vpop.f32.mrf.mxu0
        %v1535 = vadd.f32 0.0, %v1534
        %1536 = vmatmul.bf16.gmra.mxu0 %v658
        %v1537 = vpop.f32.mrf.mxu0
        %v1538 = vadd.f32 0.0, %v1537
        %v1539 = vpop.f32.mrf.mxu0
        %v1540 = vadd.f32 0.0, %v1539
        %1541 = vdwg.mxu0
        %1542 = vmatpush.bf16.msra.mxu0 %v1168
        %1543 = vmatpush.bf16.msra.mxu0 %v1152
        %1544 = vmatpush.bf16.msra.mxu0 %v1136
        %1545 = vmatpush.bf16.msra.mxu0 %v1120
        %1546 = vmatpush.bf16.msra.mxu0 %v1104
        %1547 = vmatpush.bf16.msra.mxu0 %v1088
        %1548 = vmatpush.bf16.msra.mxu0 %v1072
        %1549 = vmatpush.bf16.msra.mxu0 %v1056
        %1550 = vmatmul.bf16.gmra.mxu0 %v656
        %v1551 = vpop.f32.mrf.mxu0
        %v1552 = vadd.f32 0.0, %v1551
        %v1553 = vpop.f32.mrf.mxu0
        %v1554 = vadd.f32 0.0, %v1553
        %1555 = vmatmul.bf16.gmra.mxu0 %v657
        %v1556 = vpop.f32.mrf.mxu0
        %v1557 = vadd.f32 0.0, %v1556
        %v1558 = vpop.f32.mrf.mxu0
        %v1559 = vadd.f32 0.0, %v1558
        %1560 = vmatmul.bf16.gmra.mxu0 %v658
        %v1561 = vpop.f32.mrf.mxu0
        %v1562 = vadd.f32 0.0, %v1561
        %v1563 = vpop.f32.mrf.mxu0
        %v1564 = vadd.f32 0.0, %v1563
        %1565 = vdwg.mxu0
        %1566 = vmatpush.bf16.msra.mxu0 %v1169
        %1567 = vmatpush.bf16.msra.mxu0 %v1153
        %1568 = vmatpush.bf16.msra.mxu0 %v1137
        %1569 = vmatpush.bf16.msra.mxu0 %v1121
        %1570 = vmatpush.bf16.msra.mxu0 %v1105
        %1571 = vmatpush.bf16.msra.mxu0 %v1089
        %1572 = vmatpush.bf16.msra.mxu0 %v1073
        %1573 = vmatpush.bf16.msra.mxu0 %v1057
        %1574 = vmatmul.bf16.gmra.mxu0 %v656
        %v1575 = vpop.f32.mrf.mxu0
        %v1576 = vadd.f32 0.0, %v1575
        %v1577 = vpop.f32.mrf.mxu0
        %v1578 = vadd.f32 0.0, %v1577
        %1579 = vmatmul.bf16.gmra.mxu0 %v657
        %v1580 = vpop.f32.mrf.mxu0
        %v1581 = vadd.f32 0.0, %v1580
        %v1582 = vpop.f32.mrf.mxu0
        %v1583 = vadd.f32 0.0, %v1582
        %1584 = vmatmul.bf16.gmra.mxu0 %v658
        %v1585 = vpop.f32.mrf.mxu0
        %v1586 = vadd.f32 0.0, %v1585
        %v1587 = vpop.f32.mrf.mxu0
        %v1588 = vadd.f32 0.0, %v1587
        %1589 = vdwg.mxu0
        %1590 = vmatpush.bf16.msra.mxu0 %v1170
        %1591 = vmatpush.bf16.msra.mxu0 %v1154
        %1592 = vmatpush.bf16.msra.mxu0 %v1138
        %1593 = vmatpush.bf16.msra.mxu0 %v1122
        %1594 = vmatpush.bf16.msra.mxu0 %v1106
        %1595 = vmatpush.bf16.msra.mxu0 %v1090
        %1596 = vmatpush.bf16.msra.mxu0 %v1074
        %1597 = vmatpush.bf16.msra.mxu0 %v1058
        %1598 = vmatmul.bf16.gmra.mxu0 %v656
        %v1599 = vpop.f32.mrf.mxu0
        %v1600 = vadd.f32 0.0, %v1599
        %v1601 = vpop.f32.mrf.mxu0
        %v1602 = vadd.f32 0.0, %v1601
        %1603 = vmatmul.bf16.gmra.mxu0 %v657
        %v1604 = vpop.f32.mrf.mxu0
        %v1605 = vadd.f32 0.0, %v1604
        %v1606 = vpop.f32.mrf.mxu0
        %v1607 = vadd.f32 0.0, %v1606
        %1608 = vmatmul.bf16.gmra.mxu0 %v658
        %v1609 = vpop.f32.mrf.mxu0
        %v1610 = vadd.f32 0.0, %v1609
        %v1611 = vpop.f32.mrf.mxu0
        %v1612 = vadd.f32 0.0, %v1611
        %1613 = vdwg.mxu0
        %1614 = vmatpush.bf16.msra.mxu0 %v1171
        %1615 = vmatpush.bf16.msra.mxu0 %v1155
        %1616 = vmatpush.bf16.msra.mxu0 %v1139
        %1617 = vmatpush.bf16.msra.mxu0 %v1123
        %1618 = vmatpush.bf16.msra.mxu0 %v1107
        %1619 = vmatpush.bf16.msra.mxu0 %v1091
        %1620 = vmatpush.bf16.msra.mxu0 %v1075
        %1621 = vmatpush.bf16.msra.mxu0 %v1059
        %1622 = vmatmul.bf16.gmra.mxu0 %v656
        %v1623 = vpop.f32.mrf.mxu0
        %v1624 = vadd.f32 0.0, %v1623
        %v1625 = vpop.f32.mrf.mxu0
        %v1626 = vadd.f32 0.0, %v1625
        %1627 = vmatmul.bf16.gmra.mxu0 %v657
        %v1628 = vpop.f32.mrf.mxu0
        %v1629 = vadd.f32 0.0, %v1628
        %v1630 = vpop.f32.mrf.mxu0
        %v1631 = vadd.f32 0.0, %v1630
        %1632 = vmatmul.bf16.gmra.mxu0 %v658
        %v1633 = vpop.f32.mrf.mxu0
        %v1634 = vadd.f32 0.0, %v1633
        %v1635 = vpop.f32.mrf.mxu0
        %v1636 = vadd.f32 0.0, %v1635
        %1637 = vdwg.mxu0
        %1638 = vmatpush.bf16.msra.mxu0 %v1172
        %1639 = vmatpush.bf16.msra.mxu0 %v1156
        %1640 = vmatpush.bf16.msra.mxu0 %v1140
        %1641 = vmatpush.bf16.msra.mxu0 %v1124
        %1642 = vmatpush.bf16.msra.mxu0 %v1108
        %1643 = vmatpush.bf16.msra.mxu0 %v1092
        %1644 = vmatpush.bf16.msra.mxu0 %v1076
        %1645 = vmatpush.bf16.msra.mxu0 %v1060
        %1646 = vmatmul.bf16.gmra.mxu0 %v656
        %v1647 = vpop.f32.mrf.mxu0
        %v1648 = vadd.f32 0.0, %v1647
        %v1649 = vpop.f32.mrf.mxu0
        %v1650 = vadd.f32 0.0, %v1649
        %1651 = vmatmul.bf16.gmra.mxu0 %v657
        %v1652 = vpop.f32.mrf.mxu0
        %v1653 = vadd.f32 0.0, %v1652
        %v1654 = vpop.f32.mrf.mxu0
        %v1655 = vadd.f32 0.0, %v1654
        %1656 = vmatmul.bf16.gmra.mxu0 %v658
        %v1657 = vpop.f32.mrf.mxu0
        %v1658 = vadd.f32 0.0, %v1657
        %v1659 = vpop.f32.mrf.mxu0
        %v1660 = vadd.f32 0.0, %v1659
        %1661 = vdwg.mxu0
        %1662 = vmatpush.bf16.msra.mxu0 %v1173
        %1663 = vmatpush.bf16.msra.mxu0 %v1157
        %1664 = vmatpush.bf16.msra.mxu0 %v1141
        %1665 = vmatpush.bf16.msra.mxu0 %v1125
        %1666 = vmatpush.bf16.msra.mxu0 %v1109
        %1667 = vmatpush.bf16.msra.mxu0 %v1093
        %1668 = vmatpush.bf16.msra.mxu0 %v1077
        %1669 = vmatpush.bf16.msra.mxu0 %v1061
        %1670 = vmatmul.bf16.gmra.mxu0 %v656
        %v1671 = vpop.f32.mrf.mxu0
        %v1672 = vadd.f32 0.0, %v1671
        %v1673 = vpop.f32.mrf.mxu0
        %v1674 = vadd.f32 0.0, %v1673
        %1675 = vmatmul.bf16.gmra.mxu0 %v657
        %v1676 = vpop.f32.mrf.mxu0
        %v1677 = vadd.f32 0.0, %v1676
        %v1678 = vpop.f32.mrf.mxu0
        %v1679 = vadd.f32 0.0, %v1678
        %1680 = vmatmul.bf16.gmra.mxu0 %v658
        %v1681 = vpop.f32.mrf.mxu0
        %v1682 = vadd.f32 0.0, %v1681
        %v1683 = vpop.f32.mrf.mxu0
        %v1684 = vadd.f32 0.0, %v1683
        %1685 = vdwg.mxu0
        %v1686 = vadd.f32 %v414, %v1312
        %v1687 = vadd.f32 %v415, %v1336
        %v1688 = vadd.f32 %v416, %v1360
        %v1689 = vadd.f32 %v417, %v1384
        %v1690 = vadd.f32 %v418, %v1408
        %v1691 = vadd.f32 %v419, %v1432
        %v1692 = vadd.f32 %v420, %v1456
        %v1693 = vadd.f32 %v421, %v1480
        %v1694 = vadd.f32 %v422, %v1504
        %v1695 = vadd.f32 %v423, %v1528
        %v1696 = vadd.f32 %v424, %v1552
        %v1697 = vadd.f32 %v425, %v1576
        %v1698 = vadd.f32 %v426, %v1600
        %v1699 = vadd.f32 %v427, %v1624
        %v1700 = vadd.f32 %v428, %v1648
        %v1701 = vadd.f32 %v429, %v1672
        %v1702 = vadd.f32 %v430, %v1314
        %v1703 = vadd.f32 %v431, %v1338
        %v1704 = vadd.f32 %v432, %v1362
        %v1705 = vadd.f32 %v433, %v1386
        %v1706 = vadd.f32 %v434, %v1410
        %v1707 = vadd.f32 %v435, %v1434
        %v1708 = vadd.f32 %v436, %v1458
        %v1709 = vadd.f32 %v437, %v1482
        %v1710 = vadd.f32 %v438, %v1506
        %v1711 = vadd.f32 %v439, %v1530
        %v1712 = vadd.f32 %v440, %v1554
        %v1713 = vadd.f32 %v441, %v1578
        %v1714 = vadd.f32 %v442, %v1602
        %v1715 = vadd.f32 %v443, %v1626
        %v1716 = vadd.f32 %v444, %v1650
        %v1717 = vadd.f32 %v445, %v1674
        %v1718 = vadd.f32 %v446, %v1317
        %v1719 = vadd.f32 %v447, %v1341
        %v1720 = vadd.f32 %v448, %v1365
        %v1721 = vadd.f32 %v449, %v1389
        %v1722 = vadd.f32 %v450, %v1413
        %v1723 = vadd.f32 %v451, %v1437
        %v1724 = vadd.f32 %v452, %v1461
        %v1725 = vadd.f32 %v453, %v1485
        %v1726 = vadd.f32 %v454, %v1509
        %v1727 = vadd.f32 %v455, %v1533
        %v1728 = vadd.f32 %v456, %v1557
        %v1729 = vadd.f32 %v457, %v1581
        %v1730 = vadd.f32 %v458, %v1605
        %v1731 = vadd.f32 %v459, %v1629
        %v1732 = vadd.f32 %v460, %v1653
        %v1733 = vadd.f32 %v461, %v1677
        %v1734 = vadd.f32 %v462, %v1319
        %v1735 = vadd.f32 %v463, %v1343
        %v1736 = vadd.f32 %v464, %v1367
        %v1737 = vadd.f32 %v465, %v1391
        %v1738 = vadd.f32 %v466, %v1415
        %v1739 = vadd.f32 %v467, %v1439
        %v1740 = vadd.f32 %v468, %v1463
        %v1741 = vadd.f32 %v469, %v1487
        %v1742 = vadd.f32 %v470, %v1511
        %v1743 = vadd.f32 %v471, %v1535
        %v1744 = vadd.f32 %v472, %v1559
        %v1745 = vadd.f32 %v473, %v1583
        %v1746 = vadd.f32 %v474, %v1607
        %v1747 = vadd.f32 %v475, %v1631
        %v1748 = vadd.f32 %v476, %v1655
        %v1749 = vadd.f32 %v477, %v1679
        %v1750 = vadd.f32 %v478, %v1322
        %v1751 = vadd.f32 %v479, %v1346
        %v1752 = vadd.f32 %v480, %v1370
        %v1753 = vadd.f32 %v481, %v1394
        %v1754 = vadd.f32 %v482, %v1418
        %v1755 = vadd.f32 %v483, %v1442
        %v1756 = vadd.f32 %v484, %v1466
        %v1757 = vadd.f32 %v485, %v1490
        %v1758 = vadd.f32 %v486, %v1514
        %v1759 = vadd.f32 %v487, %v1538
        %v1760 = vadd.f32 %v488, %v1562
        %v1761 = vadd.f32 %v489, %v1586
        %v1762 = vadd.f32 %v490, %v1610
        %v1763 = vadd.f32 %v491, %v1634
        %v1764 = vadd.f32 %v492, %v1658
        %v1765 = vadd.f32 %v493, %v1682
        %v1766 = vadd.f32 %v494, %v1324
        %v1767 = vadd.f32 %v495, %v1348
        %v1768 = vadd.f32 %v496, %v1372
        %v1769 = vadd.f32 %v497, %v1396
        %v1770 = vadd.f32 %v498, %v1420
        %v1771 = vadd.f32 %v499, %v1444
        %v1772 = vadd.f32 %v500, %v1468
        %v1773 = vadd.f32 %v501, %v1492
        %v1774 = vadd.f32 %v502, %v1516
        %v1775 = vadd.f32 %v503, %v1540
        %v1776 = vadd.f32 %v504, %v1564
        %v1777 = vadd.f32 %v505, %v1588
        %v1778 = vadd.f32 %v506, %v1612
        %v1779 = vadd.f32 %v507, %v1636
        %v1780 = vadd.f32 %v508, %v1660
        %v1781 = vadd.f32 %v509, %v1684
        %1782 = vst [vmem:[#allocation2] sm:$0xff] %v1686
        %1783 = vst [vmem:[#allocation2 + $0x8] sm:$0xff] %v1687
        %1784 = vst [vmem:[#allocation2 + $0x10] sm:$0xff] %v1688
        %1785 = vst [vmem:[#allocation2 + $0x18] sm:$0xff] %v1689
        %1786 = vst [vmem:[#allocation2 + $0x20] sm:$0xff] %v1690
        %1787 = vst [vmem:[#allocation2 + $0x28] sm:$0xff] %v1691
        %1788 = vst [vmem:[#allocation2 + $0x30] sm:$0xff] %v1692
        %1789 = vst [vmem:[#allocation2 + $0x38] sm:$0xff] %v1693
        %1790 = vst [vmem:[#allocation2 + $0x40] sm:$0xff] %v1694
        %1791 = vst [vmem:[#allocation2 + $0x48] sm:$0xff] %v1695
        %1792 = vst [vmem:[#allocation2 + $0x50] sm:$0xff] %v1696
        %1793 = vst [vmem:[#allocation2 + $0x58] sm:$0xff] %v1697
        %1794 = vst [vmem:[#allocation2 + $0x60] sm:$0xff] %v1698
        %1795 = vst [vmem:[#allocation2 + $0x68] sm:$0xff] %v1699
        %1796 = vst [vmem:[#allocation2 + $0x70] sm:$0xff] %v1700
        %1797 = vst [vmem:[#allocation2 + $0x78] sm:$0xff] %v1701
        %1798 = vst [vmem:[#allocation2 + $0x80] sm:$0xff] %v1702
        %1799 = vst [vmem:[#allocation2 + $0x88] sm:$0xff] %v1703
        %1800 = vst [vmem:[#allocation2 + $0x90] sm:$0xff] %v1704
        %1801 = vst [vmem:[#allocation2 + $0x98] sm:$0xff] %v1705
        %1802 = vst [vmem:[#allocation2 + $0xa0] sm:$0xff] %v1706
        %1803 = vst [vmem:[#allocation2 + $0xa8] sm:$0xff] %v1707
        %1804 = vst [vmem:[#allocation2 + $0xb0] sm:$0xff] %v1708
        %1805 = vst [vmem:[#allocation2 + $0xb8] sm:$0xff] %v1709
        %1806 = vst [vmem:[#allocation2 + $0xc0] sm:$0xff] %v1710
        %1807 = vst [vmem:[#allocation2 + $0xc8] sm:$0xff] %v1711
        %1808 = vst [vmem:[#allocation2 + $0xd0] sm:$0xff] %v1712
        %1809 = vst [vmem:[#allocation2 + $0xd8] sm:$0xff] %v1713
        %1810 = vst [vmem:[#allocation2 + $0xe0] sm:$0xff] %v1714
        %1811 = vst [vmem:[#allocation2 + $0xe8] sm:$0xff] %v1715
        %1812 = vst [vmem:[#allocation2 + $0xf0] sm:$0xff] %v1716
        %1813 = vst [vmem:[#allocation2 + $0xf8] sm:$0xff] %v1717
        %1814 = vst [vmem:[#allocation2 + $0x100] sm:$0xff] %v1718
        %1815 = vst [vmem:[#allocation2 + $0x108] sm:$0xff] %v1719
        %1816 = vst [vmem:[#allocation2 + $0x110] sm:$0xff] %v1720
        %1817 = vst [vmem:[#allocation2 + $0x118] sm:$0xff] %v1721
        %1818 = vst [vmem:[#allocation2 + $0x120] sm:$0xff] %v1722
        %1819 = vst [vmem:[#allocation2 + $0x128] sm:$0xff] %v1723
        %1820 = vst [vmem:[#allocation2 + $0x130] sm:$0xff] %v1724
        %1821 = vst [vmem:[#allocation2 + $0x138] sm:$0xff] %v1725
        %1822 = vst [vmem:[#allocation2 + $0x140] sm:$0xff] %v1726
        %1823 = vst [vmem:[#allocation2 + $0x148] sm:$0xff] %v1727
        %1824 = vst [vmem:[#allocation2 + $0x150] sm:$0xff] %v1728
        %1825 = vst [vmem:[#allocation2 + $0x158] sm:$0xff] %v1729
        %1826 = vst [vmem:[#allocation2 + $0x160] sm:$0xff] %v1730
        %1827 = vst [vmem:[#allocation2 + $0x168] sm:$0xff] %v1731
        %1828 = vst [vmem:[#allocation2 + $0x170] sm:$0xff] %v1732
        %1829 = vst [vmem:[#allocation2 + $0x178] sm:$0xff] %v1733
        %1830 = vst [vmem:[#allocation2 + $0x180] sm:$0xff] %v1734
        %1831 = vst [vmem:[#allocation2 + $0x188] sm:$0xff] %v1735
        %1832 = vst [vmem:[#allocation2 + $0x190] sm:$0xff] %v1736
        %1833 = vst [vmem:[#allocation2 + $0x198] sm:$0xff] %v1737
        %1834 = vst [vmem:[#allocation2 + $0x1a0] sm:$0xff] %v1738
        %1835 = vst [vmem:[#allocation2 + $0x1a8] sm:$0xff] %v1739
        %1836 = vst [vmem:[#allocation2 + $0x1b0] sm:$0xff] %v1740
        %1837 = vst [vmem:[#allocation2 + $0x1b8] sm:$0xff] %v1741
        %1838 = vst [vmem:[#allocation2 + $0x1c0] sm:$0xff] %v1742
        %1839 = vst [vmem:[#allocation2 + $0x1c8] sm:$0xff] %v1743
        %1840 = vst [vmem:[#allocation2 + $0x1d0] sm:$0xff] %v1744
        %1841 = vst [vmem:[#allocation2 + $0x1d8] sm:$0xff] %v1745
        %1842 = vst [vmem:[#allocation2 + $0x1e0] sm:$0xff] %v1746
        %1843 = vst [vmem:[#allocation2 + $0x1e8] sm:$0xff] %v1747
        %1844 = vst [vmem:[#allocation2 + $0x1f0] sm:$0xff] %v1748
        %1845 = vst [vmem:[#allocation2 + $0x1f8] sm:$0xff] %v1749
        %1846 = vst [vmem:[#allocation2 + $0x200] sm:$0xff] %v1750
        %1847 = vst [vmem:[#allocation2 + $0x208] sm:$0xff] %v1751
        %1848 = vst [vmem:[#allocation2 + $0x210] sm:$0xff] %v1752
        %1849 = vst [vmem:[#allocation2 + $0x218] sm:$0xff] %v1753
        %1850 = vst [vmem:[#allocation2 + $0x220] sm:$0xff] %v1754
        %1851 = vst [vmem:[#allocation2 + $0x228] sm:$0xff] %v1755
        %1852 = vst [vmem:[#allocation2 + $0x230] sm:$0xff] %v1756
        %1853 = vst [vmem:[#allocation2 + $0x238] sm:$0xff] %v1757
        %1854 = vst [vmem:[#allocation2 + $0x240] sm:$0xff] %v1758
        %1855 = vst [vmem:[#allocation2 + $0x248] sm:$0xff] %v1759
        %1856 = vst [vmem:[#allocation2 + $0x250] sm:$0xff] %v1760
        %1857 = vst [vmem:[#allocation2 + $0x258] sm:$0xff] %v1761
        %1858 = vst [vmem:[#allocation2 + $0x260] sm:$0xff] %v1762
        %1859 = vst [vmem:[#allocation2 + $0x268] sm:$0xff] %v1763
        %1860 = vst [vmem:[#allocation2 + $0x270] sm:$0xff] %v1764
        %1861 = vst [vmem:[#allocation2 + $0x278] sm:$0xff] %v1765
        %1862 = vst [vmem:[#allocation2 + $0x280] sm:$0xff] %v1766
        %1863 = vst [vmem:[#allocation2 + $0x288] sm:$0xff] %v1767
        %1864 = vst [vmem:[#allocation2 + $0x290] sm:$0xff] %v1768
        %1865 = vst [vmem:[#allocation2 + $0x298] sm:$0xff] %v1769
        %1866 = vst [vmem:[#allocation2 + $0x2a0] sm:$0xff] %v1770
        %1867 = vst [vmem:[#allocation2 + $0x2a8] sm:$0xff] %v1771
        %1868 = vst [vmem:[#allocation2 + $0x2b0] sm:$0xff] %v1772
        %1869 = vst [vmem:[#allocation2 + $0x2b8] sm:$0xff] %v1773
        %1870 = vst [vmem:[#allocation2 + $0x2c0] sm:$0xff] %v1774
        %1871 = vst [vmem:[#allocation2 + $0x2c8] sm:$0xff] %v1775
        %1872 = vst [vmem:[#allocation2 + $0x2d0] sm:$0xff] %v1776
        %1873 = vst [vmem:[#allocation2 + $0x2d8] sm:$0xff] %v1777
        %1874 = vst [vmem:[#allocation2 + $0x2e0] sm:$0xff] %v1778
        %1875 = vst [vmem:[#allocation2 + $0x2e8] sm:$0xff] %v1779
        %1876 = vst [vmem:[#allocation2 + $0x2f0] sm:$0xff] %v1780
        %1877 = vst [vmem:[#allocation2 + $0x2f8] sm:$0xff] %v1781
        %p1878 = scmp.eq.s32.totalorder %s27, 1
        // Predicated region
        $region57: #{tpu_custom_call.1} parent=35 // pred_check
          %p1879 = pneg %p1878
        $region58: #{tpu_custom_call.1} parent=35 // pred_check_branch
          %1881 = sbr.rel (%p1879) target = $region60
        $region59: #{tpu_custom_call.1} parent=35 // pred_region
          %v1882 = vld [vmem:[#allocation2] sm:$0xff]
          %v1883 = vld [vmem:[#allocation2 + $0x8] sm:$0xff]
          %v1884 = vld [vmem:[#allocation2 + $0x10] sm:$0xff]
          %v1885 = vld [vmem:[#allocation2 + $0x18] sm:$0xff]
          %v1886 = vld [vmem:[#allocation2 + $0x80] sm:$0xff]
          %v1887 = vld [vmem:[#allocation2 + $0x88] sm:$0xff]
          %v1888 = vld [vmem:[#allocation2 + $0x90] sm:$0xff]
          %v1889 = vld [vmem:[#allocation2 + $0x98] sm:$0xff]
          %v1890 = vld [vmem:[#allocation2 + $0x100] sm:$0xff]
          %v1891 = vld [vmem:[#allocation2 + $0x108] sm:$0xff]
          %v1892 = vld [vmem:[#allocation2 + $0x110] sm:$0xff]
          %v1893 = vld [vmem:[#allocation2 + $0x118] sm:$0xff]
          %v1894 = vld [vmem:[#allocation2 + $0x180] sm:$0xff]
          %v1895 = vld [vmem:[#allocation2 + $0x188] sm:$0xff]
          %v1896 = vld [vmem:[#allocation2 + $0x190] sm:$0xff]
          %v1897 = vld [vmem:[#allocation2 + $0x198] sm:$0xff]
          %v1898 = vld [vmem:[#allocation2 + $0x200] sm:$0xff]
          %v1899 = vld [vmem:[#allocation2 + $0x208] sm:$0xff]
          %v1900 = vld [vmem:[#allocation2 + $0x210] sm:$0xff]
          %v1901 = vld [vmem:[#allocation2 + $0x218] sm:$0xff]
          %v1902 = vld [vmem:[#allocation2 + $0x280] sm:$0xff]
          %v1903 = vld [vmem:[#allocation2 + $0x288] sm:$0xff]
          %v1904 = vld [vmem:[#allocation2 + $0x290] sm:$0xff]
          %v1905 = vld [vmem:[#allocation2 + $0x298] sm:$0xff]
          %v1906 = vmax.f32 %v1882, 0.0
          %v1907 = vmax.f32 %v1883, 0.0
          %v1908 = vmax.f32 %v1884, 0.0
          %v1909 = vmax.f32 %v1885, 0.0
          %v1910 = vmax.f32 %v1886, 0.0
          %v1911 = vmax.f32 %v1887, 0.0
          %v1912 = vmax.f32 %v1888, 0.0
          %v1913 = vmax.f32 %v1889, 0.0
          %v1914 = vmax.f32 %v1890, 0.0
          %v1915 = vmax.f32 %v1891, 0.0
          %v1916 = vmax.f32 %v1892, 0.0
          %v1917 = vmax.f32 %v1893, 0.0
          %v1918 = vmax.f32 %v1894, 0.0
          %v1919 = vmax.f32 %v1895, 0.0
          %v1920 = vmax.f32 %v1896, 0.0
          %v1921 = vmax.f32 %v1897, 0.0
          %v1922 = vmax.f32 %v1898, 0.0
          %v1923 = vmax.f32 %v1899, 0.0
          %v1924 = vmax.f32 %v1900, 0.0
          %v1925 = vmax.f32 %v1901, 0.0
          %v1926 = vmax.f32 %v1902, 0.0
          %v1927 = vmax.f32 %v1903, 0.0
          %v1928 = vmax.f32 %v1904, 0.0
          %v1929 = vmax.f32 %v1905, 0.0
          %v1930 = vpack.c.bf16 %v1910, %v1906
          %v1931 = vpack.c.bf16 %v1911, %v1907
          %v1932 = vpack.c.bf16 %v1912, %v1908
          %v1933 = vpack.c.bf16 %v1913, %v1909
          %v1934 = vpack.c.bf16 %v1918, %v1914
          %v1935 = vpack.c.bf16 %v1919, %v1915
          %v1936 = vpack.c.bf16 %v1920, %v1916
          %v1937 = vpack.c.bf16 %v1921, %v1917
          %v1938 = vpack.c.bf16 %v1926, %v1922
          %v1939 = vpack.c.bf16 %v1927, %v1923
          %v1940 = vpack.c.bf16 %v1928, %v1924
          %v1941 = vpack.c.bf16 %v1929, %v1925
          %v1942 = vld [vmem:[#allocation7] sm:$0xff]
          %v1943 = vld [vmem:[#allocation7 + $0x8] sm:$0xff]
          %v1944 = vld [vmem:[#allocation7 + $0x10] sm:$0xff]
          %v1945 = vld [vmem:[#allocation7 + $0x18] sm:$0xff]
          %v1946 = vld [vmem:[#allocation7 + $0x20] sm:$0xff]
          %v1947 = vld [vmem:[#allocation7 + $0x28] sm:$0xff]
          %v1948 = vld [vmem:[#allocation7 + $0x30] sm:$0xff]
          %v1949 = vld [vmem:[#allocation7 + $0x38] sm:$0xff]
          %v1950 = vld [vmem:[#allocation7 + $0x40] sm:$0xff]
          %v1951 = vld [vmem:[#allocation7 + $0x48] sm:$0xff]
          %v1952 = vld [vmem:[#allocation7 + $0x50] sm:$0xff]
          %v1953 = vld [vmem:[#allocation7 + $0x58] sm:$0xff]
          %v1954 = vld [vmem:[#allocation7 + $0x60] sm:$0xff]
          %v1955 = vld [vmem:[#allocation7 + $0x68] sm:$0xff]
          %v1956 = vld [vmem:[#allocation7 + $0x70] sm:$0xff]
          %v1957 = vld [vmem:[#allocation7 + $0x78] sm:$0xff]
          %v1958 = vld [vmem:[#allocation7 + $0x80] sm:$0xff]
          %v1959 = vld [vmem:[#allocation7 + $0x88] sm:$0xff]
          %v1960 = vld [vmem:[#allocation7 + $0x90] sm:$0xff]
          %v1961 = vld [vmem:[#allocation7 + $0x98] sm:$0xff]
          %v1962 = vld [vmem:[#allocation7 + $0xa0] sm:$0xff]
          %v1963 = vld [vmem:[#allocation7 + $0xa8] sm:$0xff]
          %v1964 = vld [vmem:[#allocation7 + $0xb0] sm:$0xff]
          %v1965 = vld [vmem:[#allocation7 + $0xb8] sm:$0xff]
          %v1966 = vld [vmem:[#allocation7 + $0xc0] sm:$0xff]
          %v1967 = vld [vmem:[#allocation7 + $0xc8] sm:$0xff]
          %v1968 = vld [vmem:[#allocation7 + $0xd0] sm:$0xff]
          %v1969 = vld [vmem:[#allocation7 + $0xd8] sm:$0xff]
          %v1970 = vld [vmem:[#allocation7 + $0xe0] sm:$0xff]
          %v1971 = vld [vmem:[#allocation7 + $0xe8] sm:$0xff]
          %v1972 = vld [vmem:[#allocation7 + $0xf0] sm:$0xff]
          %v1973 = vld [vmem:[#allocation7 + $0xf8] sm:$0xff]
          %v1974 = vld [vmem:[#allocation7 + $0x100] sm:$0xff]
          %v1975 = vld [vmem:[#allocation7 + $0x108] sm:$0xff]
          %v1976 = vld [vmem:[#allocation7 + $0x110] sm:$0xff]
          %v1977 = vld [vmem:[#allocation7 + $0x118] sm:$0xff]
          %v1978 = vld [vmem:[#allocation7 + $0x120] sm:$0xff]
          %v1979 = vld [vmem:[#allocation7 + $0x128] sm:$0xff]
          %v1980 = vld [vmem:[#allocation7 + $0x130] sm:$0xff]
          %v1981 = vld [vmem:[#allocation7 + $0x138] sm:$0xff]
          %v1982 = vld [vmem:[#allocation7 + $0x140] sm:$0xff]
          %v1983 = vld [vmem:[#allocation7 + $0x148] sm:$0xff]
          %v1984 = vld [vmem:[#allocation7 + $0x150] sm:$0xff]
          %v1985 = vld [vmem:[#allocation7 + $0x158] sm:$0xff]
          %v1986 = vld [vmem:[#allocation7 + $0x160] sm:$0xff]
          %v1987 = vld [vmem:[#allocation7 + $0x168] sm:$0xff]
          %v1988 = vld [vmem:[#allocation7 + $0x170] sm:$0xff]
          %v1989 = vld [vmem:[#allocation7 + $0x178] sm:$0xff]
          %v1990 = vld [vmem:[#allocation7 + $0x180] sm:$0xff]
          %v1991 = vld [vmem:[#allocation7 + $0x188] sm:$0xff]
          %v1992 = vld [vmem:[#allocation7 + $0x190] sm:$0xff]
          %v1993 = vld [vmem:[#allocation7 + $0x198] sm:$0xff]
          %v1994 = vld [vmem:[#allocation7 + $0x1a0] sm:$0xff]
          %v1995 = vld [vmem:[#allocation7 + $0x1a8] sm:$0xff]
          %v1996 = vld [vmem:[#allocation7 + $0x1b0] sm:$0xff]
          %v1997 = vld [vmem:[#allocation7 + $0x1b8] sm:$0xff]
          %v1998 = vld [vmem:[#allocation7 + $0x1c0] sm:$0xff]
          %v1999 = vld [vmem:[#allocation7 + $0x1c8] sm:$0xff]
          %v2000 = vld [vmem:[#allocation7 + $0x1d0] sm:$0xff]
          %v2001 = vld [vmem:[#allocation7 + $0x1d8] sm:$0xff]
          %v2002 = vld [vmem:[#allocation7 + $0x1e0] sm:$0xff]
          %v2003 = vld [vmem:[#allocation7 + $0x1e8] sm:$0xff]
          %v2004 = vld [vmem:[#allocation7 + $0x1f0] sm:$0xff]
          %v2005 = vld [vmem:[#allocation7 + $0x1f8] sm:$0xff]
          %v2006 = vld [vmem:[#allocation7 + $0x200] sm:$0xff]
          %v2007 = vld [vmem:[#allocation7 + $0x208] sm:$0xff]
          %v2008 = vld [vmem:[#allocation7 + $0x210] sm:$0xff]
          %v2009 = vld [vmem:[#allocation7 + $0x218] sm:$0xff]
          %v2010 = vld [vmem:[#allocation7 + $0x220] sm:$0xff]
          %v2011 = vld [vmem:[#allocation7 + $0x228] sm:$0xff]
          %v2012 = vld [vmem:[#allocation7 + $0x230] sm:$0xff]
          %v2013 = vld [vmem:[#allocation7 + $0x238] sm:$0xff]
          %v2014 = vld [vmem:[#allocation7 + $0x240] sm:$0xff]
          %v2015 = vld [vmem:[#allocation7 + $0x248] sm:$0xff]
          %v2016 = vld [vmem:[#allocation7 + $0x250] sm:$0xff]
          %v2017 = vld [vmem:[#allocation7 + $0x258] sm:$0xff]
          %v2018 = vld [vmem:[#allocation7 + $0x260] sm:$0xff]
          %v2019 = vld [vmem:[#allocation7 + $0x268] sm:$0xff]
          %v2020 = vld [vmem:[#allocation7 + $0x270] sm:$0xff]
          %v2021 = vld [vmem:[#allocation7 + $0x278] sm:$0xff]
          %v2022 = vld [vmem:[#allocation7 + $0x280] sm:$0xff]
          %v2023 = vld [vmem:[#allocation7 + $0x288] sm:$0xff]
          %v2024 = vld [vmem:[#allocation7 + $0x290] sm:$0xff]
          %v2025 = vld [vmem:[#allocation7 + $0x298] sm:$0xff]
          %v2026 = vld [vmem:[#allocation7 + $0x2a0] sm:$0xff]
          %v2027 = vld [vmem:[#allocation7 + $0x2a8] sm:$0xff]
          %v2028 = vld [vmem:[#allocation7 + $0x2b0] sm:$0xff]
          %v2029 = vld [vmem:[#allocation7 + $0x2b8] sm:$0xff]
          %v2030 = vld [vmem:[#allocation7 + $0x2c0] sm:$0xff]
          %v2031 = vld [vmem:[#allocation7 + $0x2c8] sm:$0xff]
          %v2032 = vld [vmem:[#allocation7 + $0x2d0] sm:$0xff]
          %v2033 = vld [vmem:[#allocation7 + $0x2d8] sm:$0xff]
          %v2034 = vld [vmem:[#allocation7 + $0x2e0] sm:$0xff]
          %v2035 = vld [vmem:[#allocation7 + $0x2e8] sm:$0xff]
          %v2036 = vld [vmem:[#allocation7 + $0x2f0] sm:$0xff]
          %v2037 = vld [vmem:[#allocation7 + $0x2f8] sm:$0xff]
          %v2038 = vld [vmem:[#allocation7 + $0x300] sm:$0xff]
          %v2039 = vld [vmem:[#allocation7 + $0x308] sm:$0xff]
          %v2040 = vld [vmem:[#allocation7 + $0x310] sm:$0xff]
          %v2041 = vld [vmem:[#allocation7 + $0x318] sm:$0xff]
          %v2042 = vld [vmem:[#allocation7 + $0x320] sm:$0xff]
          %v2043 = vld [vmem:[#allocation7 + $0x328] sm:$0xff]
          %v2044 = vld [vmem:[#allocation7 + $0x330] sm:$0xff]
          %v2045 = vld [vmem:[#allocation7 + $0x338] sm:$0xff]
          %v2046 = vld [vmem:[#allocation7 + $0x340] sm:$0xff]
          %v2047 = vld [vmem:[#allocation7 + $0x348] sm:$0xff]
          %v2048 = vld [vmem:[#allocation7 + $0x350] sm:$0xff]
          %v2049 = vld [vmem:[#allocation7 + $0x358] sm:$0xff]
          %v2050 = vld [vmem:[#allocation7 + $0x360] sm:$0xff]
          %v2051 = vld [vmem:[#allocation7 + $0x368] sm:$0xff]
          %v2052 = vld [vmem:[#allocation7 + $0x370] sm:$0xff]
          %v2053 = vld [vmem:[#allocation7 + $0x378] sm:$0xff]
          %v2054 = vld [vmem:[#allocation7 + $0x380] sm:$0xff]
          %v2055 = vld [vmem:[#allocation7 + $0x388] sm:$0xff]
          %v2056 = vld [vmem:[#allocation7 + $0x390] sm:$0xff]
          %v2057 = vld [vmem:[#allocation7 + $0x398] sm:$0xff]
          %v2058 = vld [vmem:[#allocation7 + $0x3a0] sm:$0xff]
          %v2059 = vld [vmem:[#allocation7 + $0x3a8] sm:$0xff]
          %v2060 = vld [vmem:[#allocation7 + $0x3b0] sm:$0xff]
          %v2061 = vld [vmem:[#allocation7 + $0x3b8] sm:$0xff]
          %v2062 = vld [vmem:[#allocation7 + $0x3c0] sm:$0xff]
          %v2063 = vld [vmem:[#allocation7 + $0x3c8] sm:$0xff]
          %v2064 = vld [vmem:[#allocation7 + $0x3d0] sm:$0xff]
          %v2065 = vld [vmem:[#allocation7 + $0x3d8] sm:$0xff]
          %v2066 = vld [vmem:[#allocation7 + $0x3e0] sm:$0xff]
          %v2067 = vld [vmem:[#allocation7 + $0x3e8] sm:$0xff]
          %v2068 = vld [vmem:[#allocation7 + $0x3f0] sm:$0xff]
          %v2069 = vld [vmem:[#allocation7 + $0x3f8] sm:$0xff]
          %v2070 = vld [vmem:[#allocation2 + $0x20] sm:$0xff]
          %v2071 = vld [vmem:[#allocation2 + $0x28] sm:$0xff]
          %v2072 = vld [vmem:[#allocation2 + $0x30] sm:$0xff]
          %v2073 = vld [vmem:[#allocation2 + $0x38] sm:$0xff]
          %v2074 = vld [vmem:[#allocation2 + $0xa0] sm:$0xff]
          %v2075 = vld [vmem:[#allocation2 + $0xa8] sm:$0xff]
          %v2076 = vld [vmem:[#allocation2 + $0xb0] sm:$0xff]
          %v2077 = vld [vmem:[#allocation2 + $0xb8] sm:$0xff]
          %v2078 = vld [vmem:[#allocation2 + $0x120] sm:$0xff]
          %v2079 = vld [vmem:[#allocation2 + $0x128] sm:$0xff]
          %v2080 = vld [vmem:[#allocation2 + $0x130] sm:$0xff]
          %v2081 = vld [vmem:[#allocation2 + $0x138] sm:$0xff]
          %v2082 = vld [vmem:[#allocation2 + $0x1a0] sm:$0xff]
          %v2083 = vld [vmem:[#allocation2 + $0x1a8] sm:$0xff]
          %v2084 = vld [vmem:[#allocation2 + $0x1b0] sm:$0xff]
          %v2085 = vld [vmem:[#allocation2 + $0x1b8] sm:$0xff]
          %v2086 = vld [vmem:[#allocation2 + $0x220] sm:$0xff]
          %v2087 = vld [vmem:[#allocation2 + $0x228] sm:$0xff]
          %v2088 = vld [vmem:[#allocation2 + $0x230] sm:$0xff]
          %v2089 = vld [vmem:[#allocation2 + $0x238] sm:$0xff]
          %v2090 = vld [vmem:[#allocation2 + $0x2a0] sm:$0xff]
          %v2091 = vld [vmem:[#allocation2 + $0x2a8] sm:$0xff]
          %v2092 = vld [vmem:[#allocation2 + $0x2b0] sm:$0xff]
          %v2093 = vld [vmem:[#allocation2 + $0x2b8] sm:$0xff]
          %v2094 = vmax.f32 %v2070, 0.0
          %v2095 = vmax.f32 %v2071, 0.0
          %v2096 = vmax.f32 %v2072, 0.0
          %v2097 = vmax.f32 %v2073, 0.0
          %v2098 = vmax.f32 %v2074, 0.0
          %v2099 = vmax.f32 %v2075, 0.0
          %v2100 = vmax.f32 %v2076, 0.0
          %v2101 = vmax.f32 %v2077, 0.0
          %v2102 = vmax.f32 %v2078, 0.0
          %v2103 = vmax.f32 %v2079, 0.0
          %v2104 = vmax.f32 %v2080, 0.0
          %v2105 = vmax.f32 %v2081, 0.0
          %v2106 = vmax.f32 %v2082, 0.0
          %v2107 = vmax.f32 %v2083, 0.0
          %v2108 = vmax.f32 %v2084, 0.0
          %v2109 = vmax.f32 %v2085, 0.0
          %v2110 = vmax.f32 %v2086, 0.0
          %v2111 = vmax.f32 %v2087, 0.0
          %v2112 = vmax.f32 %v2088, 0.0
          %v2113 = vmax.f32 %v2089, 0.0
          %v2114 = vmax.f32 %v2090, 0.0
          %v2115 = vmax.f32 %v2091, 0.0
          %v2116 = vmax.f32 %v2092, 0.0
          %v2117 = vmax.f32 %v2093, 0.0
          %v2118 = vpack.c.bf16 %v2098, %v2094
          %v2119 = vpack.c.bf16 %v2099, %v2095
          %v2120 = vpack.c.bf16 %v2100, %v2096
          %v2121 = vpack.c.bf16 %v2101, %v2097
          %v2122 = vpack.c.bf16 %v2106, %v2102
          %v2123 = vpack.c.bf16 %v2107, %v2103
          %v2124 = vpack.c.bf16 %v2108, %v2104
          %v2125 = vpack.c.bf16 %v2109, %v2105
          %v2126 = vpack.c.bf16 %v2114, %v2110
          %v2127 = vpack.c.bf16 %v2115, %v2111
          %v2128 = vpack.c.bf16 %v2116, %v2112
          %v2129 = vpack.c.bf16 %v2117, %v2113
          %v2130 = vld [vmem:[#allocation7 + $0x400] sm:$0xff]
          %v2131 = vld [vmem:[#allocation7 + $0x408] sm:$0xff]
          %v2132 = vld [vmem:[#allocation7 + $0x410] sm:$0xff]
          %v2133 = vld [vmem:[#allocation7 + $0x418] sm:$0xff]
          %v2134 = vld [vmem:[#allocation7 + $0x420] sm:$0xff]
          %v2135 = vld [vmem:[#allocation7 + $0x428] sm:$0xff]
          %v2136 = vld [vmem:[#allocation7 + $0x430] sm:$0xff]
          %v2137 = vld [vmem:[#allocation7 + $0x438] sm:$0xff]
          %v2138 = vld [vmem:[#allocation7 + $0x440] sm:$0xff]
          %v2139 = vld [vmem:[#allocation7 + $0x448] sm:$0xff]
          %v2140 = vld [vmem:[#allocation7 + $0x450] sm:$0xff]
          %v2141 = vld [vmem:[#allocation7 + $0x458] sm:$0xff]
          %v2142 = vld [vmem:[#allocation7 + $0x460] sm:$0xff]
          %v2143 = vld [vmem:[#allocation7 + $0x468] sm:$0xff]
          %v2144 = vld [vmem:[#allocation7 + $0x470] sm:$0xff]
          %v2145 = vld [vmem:[#allocation7 + $0x478] sm:$0xff]
          %v2146 = vld [vmem:[#allocation7 + $0x480] sm:$0xff]
          %v2147 = vld [vmem:[#allocation7 + $0x488] sm:$0xff]
          %v2148 = vld [vmem:[#allocation7 + $0x490] sm:$0xff]
          %v2149 = vld [vmem:[#allocation7 + $0x498] sm:$0xff]
          %v2150 = vld [vmem:[#allocation7 + $0x4a0] sm:$0xff]
          %v2151 = vld [vmem:[#allocation7 + $0x4a8] sm:$0xff]
          %v2152 = vld [vmem:[#allocation7 + $0x4b0] sm:$0xff]
          %v2153 = vld [vmem:[#allocation7 + $0x4b8] sm:$0xff]
          %v2154 = vld [vmem:[#allocation7 + $0x4c0] sm:$0xff]
          %v2155 = vld [vmem:[#allocation7 + $0x4c8] sm:$0xff]
          %v2156 = vld [vmem:[#allocation7 + $0x4d0] sm:$0xff]
          %v2157 = vld [vmem:[#allocation7 + $0x4d8] sm:$0xff]
          %v2158 = vld [vmem:[#allocation7 + $0x4e0] sm:$0xff]
          %v2159 = vld [vmem:[#allocation7 + $0x4e8] sm:$0xff]
          %v2160 = vld [vmem:[#allocation7 + $0x4f0] sm:$0xff]
          %v2161 = vld [vmem:[#allocation7 + $0x4f8] sm:$0xff]
          %v2162 = vld [vmem:[#allocation7 + $0x500] sm:$0xff]
          %v2163 = vld [vmem:[#allocation7 + $0x508] sm:$0xff]
          %v2164 = vld [vmem:[#allocation7 + $0x510] sm:$0xff]
          %v2165 = vld [vmem:[#allocation7 + $0x518] sm:$0xff]
          %v2166 = vld [vmem:[#allocation7 + $0x520] sm:$0xff]
          %v2167 = vld [vmem:[#allocation7 + $0x528] sm:$0xff]
          %v2168 = vld [vmem:[#allocation7 + $0x530] sm:$0xff]
          %v2169 = vld [vmem:[#allocation7 + $0x538] sm:$0xff]
          %v2170 = vld [vmem:[#allocation7 + $0x540] sm:$0xff]
          %v2171 = vld [vmem:[#allocation7 + $0x548] sm:$0xff]
          %v2172 = vld [vmem:[#allocation7 + $0x550] sm:$0xff]
          %v2173 = vld [vmem:[#allocation7 + $0x558] sm:$0xff]
          %v2174 = vld [vmem:[#allocation7 + $0x560] sm:$0xff]
          %v2175 = vld [vmem:[#allocation7 + $0x568] sm:$0xff]
          %v2176 = vld [vmem:[#allocation7 + $0x570] sm:$0xff]
          %v2177 = vld [vmem:[#allocation7 + $0x578] sm:$0xff]
          %v2178 = vld [vmem:[#allocation7 + $0x580] sm:$0xff]
          %v2179 = vld [vmem:[#allocation7 + $0x588] sm:$0xff]
          %v2180 = vld [vmem:[#allocation7 + $0x590] sm:$0xff]
          %v2181 = vld [vmem:[#allocation7 + $0x598] sm:$0xff]
          %v2182 = vld [vmem:[#allocation7 + $0x5a0] sm:$0xff]
          %v2183 = vld [vmem:[#allocation7 + $0x5a8] sm:$0xff]
          %v2184 = vld [vmem:[#allocation7 + $0x5b0] sm:$0xff]
          %v2185 = vld [vmem:[#allocation7 + $0x5b8] sm:$0xff]
          %v2186 = vld [vmem:[#allocation7 + $0x5c0] sm:$0xff]
          %v2187 = vld [vmem:[#allocation7 + $0x5c8] sm:$0xff]
          %v2188 = vld [vmem:[#allocation7 + $0x5d0] sm:$0xff]
          %v2189 = vld [vmem:[#allocation7 + $0x5d8] sm:$0xff]
          %v2190 = vld [vmem:[#allocation7 + $0x5e0] sm:$0xff]
          %v2191 = vld [vmem:[#allocation7 + $0x5e8] sm:$0xff]
          %v2192 = vld [vmem:[#allocation7 + $0x5f0] sm:$0xff]
          %v2193 = vld [vmem:[#allocation7 + $0x5f8] sm:$0xff]
          %v2194 = vld [vmem:[#allocation7 + $0x600] sm:$0xff]
          %v2195 = vld [vmem:[#allocation7 + $0x608] sm:$0xff]
          %v2196 = vld [vmem:[#allocation7 + $0x610] sm:$0xff]
          %v2197 = vld [vmem:[#allocation7 + $0x618] sm:$0xff]
          %v2198 = vld [vmem:[#allocation7 + $0x620] sm:$0xff]
          %v2199 = vld [vmem:[#allocation7 + $0x628] sm:$0xff]
          %v2200 = vld [vmem:[#allocation7 + $0x630] sm:$0xff]
          %v2201 = vld [vmem:[#allocation7 + $0x638] sm:$0xff]
          %v2202 = vld [vmem:[#allocation7 + $0x640] sm:$0xff]
          %v2203 = vld [vmem:[#allocation7 + $0x648] sm:$0xff]
          %v2204 = vld [vmem:[#allocation7 + $0x650] sm:$0xff]
          %v2205 = vld [vmem:[#allocation7 + $0x658] sm:$0xff]
          %v2206 = vld [vmem:[#allocation7 + $0x660] sm:$0xff]
          %v2207 = vld [vmem:[#allocation7 + $0x668] sm:$0xff]
          %v2208 = vld [vmem:[#allocation7 + $0x670] sm:$0xff]
          %v2209 = vld [vmem:[#allocation7 + $0x678] sm:$0xff]
          %v2210 = vld [vmem:[#allocation7 + $0x680] sm:$0xff]
          %v2211 = vld [vmem:[#allocation7 + $0x688] sm:$0xff]
          %v2212 = vld [vmem:[#allocation7 + $0x690] sm:$0xff]
          %v2213 = vld [vmem:[#allocation7 + $0x698] sm:$0xff]
          %v2214 = vld [vmem:[#allocation7 + $0x6a0] sm:$0xff]
          %v2215 = vld [vmem:[#allocation7 + $0x6a8] sm:$0xff]
          %v2216 = vld [vmem:[#allocation7 + $0x6b0] sm:$0xff]
          %v2217 = vld [vmem:[#allocation7 + $0x6b8] sm:$0xff]
          %v2218 = vld [vmem:[#allocation7 + $0x6c0] sm:$0xff]
          %v2219 = vld [vmem:[#allocation7 + $0x6c8] sm:$0xff]
          %v2220 = vld [vmem:[#allocation7 + $0x6d0] sm:$0xff]
          %v2221 = vld [vmem:[#allocation7 + $0x6d8] sm:$0xff]
          %v2222 = vld [vmem:[#allocation7 + $0x6e0] sm:$0xff]
          %v2223 = vld [vmem:[#allocation7 + $0x6e8] sm:$0xff]
          %v2224 = vld [vmem:[#allocation7 + $0x6f0] sm:$0xff]
          %v2225 = vld [vmem:[#allocation7 + $0x6f8] sm:$0xff]
          %v2226 = vld [vmem:[#allocation7 + $0x700] sm:$0xff]
          %v2227 = vld [vmem:[#allocation7 + $0x708] sm:$0xff]
          %v2228 = vld [vmem:[#allocation7 + $0x710] sm:$0xff]
          %v2229 = vld [vmem:[#allocation7 + $0x718] sm:$0xff]
          %v2230 = vld [vmem:[#allocation7 + $0x720] sm:$0xff]
          %v2231 = vld [vmem:[#allocation7 + $0x728] sm:$0xff]
          %v2232 = vld [vmem:[#allocation7 + $0x730] sm:$0xff]
          %v2233 = vld [vmem:[#allocation7 + $0x738] sm:$0xff]
          %v2234 = vld [vmem:[#allocation7 + $0x740] sm:$0xff]
          %v2235 = vld [vmem:[#allocation7 + $0x748] sm:$0xff]
          %v2236 = vld [vmem:[#allocation7 + $0x750] sm:$0xff]
          %v2237 = vld [vmem:[#allocation7 + $0x758] sm:$0xff]
          %v2238 = vld [vmem:[#allocation7 + $0x760] sm:$0xff]
          %v2239 = vld [vmem:[#allocation7 + $0x768] sm:$0xff]
          %v2240 = vld [vmem:[#allocation7 + $0x770] sm:$0xff]
          %v2241 = vld [vmem:[#allocation7 + $0x778] sm:$0xff]
          %v2242 = vld [vmem:[#allocation7 + $0x780] sm:$0xff]
          %v2243 = vld [vmem:[#allocation7 + $0x788] sm:$0xff]
          %v2244 = vld [vmem:[#allocation7 + $0x790] sm:$0xff]
          %v2245 = vld [vmem:[#allocation7 + $0x798] sm:$0xff]
          %v2246 = vld [vmem:[#allocation7 + $0x7a0] sm:$0xff]
          %v2247 = vld [vmem:[#allocation7 + $0x7a8] sm:$0xff]
          %v2248 = vld [vmem:[#allocation7 + $0x7b0] sm:$0xff]
          %v2249 = vld [vmem:[#allocation7 + $0x7b8] sm:$0xff]
          %v2250 = vld [vmem:[#allocation7 + $0x7c0] sm:$0xff]
          %v2251 = vld [vmem:[#allocation7 + $0x7c8] sm:$0xff]
          %v2252 = vld [vmem:[#allocation7 + $0x7d0] sm:$0xff]
          %v2253 = vld [vmem:[#allocation7 + $0x7d8] sm:$0xff]
          %v2254 = vld [vmem:[#allocation7 + $0x7e0] sm:$0xff]
          %v2255 = vld [vmem:[#allocation7 + $0x7e8] sm:$0xff]
          %v2256 = vld [vmem:[#allocation7 + $0x7f0] sm:$0xff]
          %v2257 = vld [vmem:[#allocation7 + $0x7f8] sm:$0xff]
          %v2386 = vunpack.c.l.b16 %v2130
          %v2387 = vunpack.c.h.b16 %v2130
          %v2388 = vunpack.c.l.b16 %v2131
          %v2389 = vunpack.c.h.b16 %v2131
          %v2390 = vunpack.c.l.b16 %v2132
          %v2391 = vunpack.c.h.b16 %v2132
          %v2392 = vunpack.c.l.b16 %v2133
          %v2393 = vunpack.c.h.b16 %v2133
          %v2394 = vunpack.c.l.b16 %v2134
          %v2395 = vunpack.c.h.b16 %v2134
          %v2396 = vunpack.c.l.b16 %v2135
          %v2397 = vunpack.c.h.b16 %v2135
          %v2398 = vunpack.c.l.b16 %v2136
          %v2399 = vunpack.c.h.b16 %v2136
          %v2400 = vunpack.c.l.b16 %v2137
          %v2401 = vunpack.c.h.b16 %v2137
          %v2402 = vunpack.c.l.b16 %v2138
          %v2403 = vunpack.c.h.b16 %v2138
          %v2404 = vunpack.c.l.b16 %v2139
          %v2405 = vunpack.c.h.b16 %v2139
          %v2406 = vunpack.c.l.b16 %v2140
          %v2407 = vunpack.c.h.b16 %v2140
          %v2408 = vunpack.c.l.b16 %v2141
          %v2409 = vunpack.c.h.b16 %v2141
          %v2410 = vunpack.c.l.b16 %v2142
          %v2411 = vunpack.c.h.b16 %v2142
          %v2412 = vunpack.c.l.b16 %v2143
          %v2413 = vunpack.c.h.b16 %v2143
          %v2414 = vunpack.c.l.b16 %v2144
          %v2415 = vunpack.c.h.b16 %v2144
          %v2416 = vunpack.c.l.b16 %v2145
          %v2417 = vunpack.c.h.b16 %v2145
          %v2418 = vunpack.c.l.b16 %v2146
          %v2419 = vunpack.c.h.b16 %v2146
          %v2420 = vunpack.c.l.b16 %v2147
          %v2421 = vunpack.c.h.b16 %v2147
          %v2422 = vunpack.c.l.b16 %v2148
          %v2423 = vunpack.c.h.b16 %v2148
          %v2424 = vunpack.c.l.b16 %v2149
          %v2425 = vunpack.c.h.b16 %v2149
          %v2426 = vunpack.c.l.b16 %v2150
          %v2427 = vunpack.c.h.b16 %v2150
          %v2428 = vunpack.c.l.b16 %v2151
          %v2429 = vunpack.c.h.b16 %v2151
          %v2430 = vunpack.c.l.b16 %v2152
          %v2431 = vunpack.c.h.b16 %v2152
          %v2432 = vunpack.c.l.b16 %v2153
          %v2433 = vunpack.c.h.b16 %v2153
          %v2434 = vunpack.c.l.b16 %v2154
          %v2435 = vunpack.c.h.b16 %v2154
          %v2436 = vunpack.c.l.b16 %v2155
          %v2437 = vunpack.c.h.b16 %v2155
          %v2438 = vunpack.c.l.b16 %v2156
          %v2439 = vunpack.c.h.b16 %v2156
          %v2440 = vunpack.c.l.b16 %v2157
          %v2441 = vunpack.c.h.b16 %v2157
          %v2442 = vunpack.c.l.b16 %v2158
          %v2443 = vunpack.c.h.b16 %v2158
          %v2444 = vunpack.c.l.b16 %v2159
          %v2445 = vunpack.c.h.b16 %v2159
          %v2446 = vunpack.c.l.b16 %v2160
          %v2447 = vunpack.c.h.b16 %v2160
          %v2448 = vunpack.c.l.b16 %v2161
          %v2449 = vunpack.c.h.b16 %v2161
          %v2450 = vunpack.c.l.b16 %v2162
          %v2451 = vunpack.c.h.b16 %v2162
          %v2452 = vunpack.c.l.b16 %v2163
          %v2453 = vunpack.c.h.b16 %v2163
          %v2454 = vunpack.c.l.b16 %v2164
          %v2455 = vunpack.c.h.b16 %v2164
          %v2456 = vunpack.c.l.b16 %v2165
          %v2457 = vunpack.c.h.b16 %v2165
          %v2458 = vunpack.c.l.b16 %v2166
          %v2459 = vunpack.c.h.b16 %v2166
          %v2460 = vunpack.c.l.b16 %v2167
          %v2461 = vunpack.c.h.b16 %v2167
          %v2462 = vunpack.c.l.b16 %v2168
          %v2463 = vunpack.c.h.b16 %v2168
          %v2464 = vunpack.c.l.b16 %v2169
          %v2465 = vunpack.c.h.b16 %v2169
          %v2466 = vunpack.c.l.b16 %v2170
          %v2467 = vunpack.c.h.b16 %v2170
          %v2468 = vunpack.c.l.b16 %v2171
          %v2469 = vunpack.c.h.b16 %v2171
          %v2470 = vunpack.c.l.b16 %v2172
          %v2471 = vunpack.c.h.b16 %v2172
          %v2472 = vunpack.c.l.b16 %v2173
          %v2473 = vunpack.c.h.b16 %v2173
          %v2474 = vunpack.c.l.b16 %v2174
          %v2475 = vunpack.c.h.b16 %v2174
          %v2476 = vunpack.c.l.b16 %v2175
          %v2477 = vunpack.c.h.b16 %v2175
          %v2478 = vunpack.c.l.b16 %v2176
          %v2479 = vunpack.c.h.b16 %v2176
          %v2480 = vunpack.c.l.b16 %v2177
          %v2481 = vunpack.c.h.b16 %v2177
          %v2482 = vunpack.c.l.b16 %v2178
          %v2483 = vunpack.c.h.b16 %v2178
          %v2484 = vunpack.c.l.b16 %v2179
          %v2485 = vunpack.c.h.b16 %v2179
          %v2486 = vunpack.c.l.b16 %v2180
          %v2487 = vunpack.c.h.b16 %v2180
          %v2488 = vunpack.c.l.b16 %v2181
          %v2489 = vunpack.c.h.b16 %v2181
          %v2490 = vunpack.c.l.b16 %v2182
          %v2491 = vunpack.c.h.b16 %v2182
          %v2492 = vunpack.c.l.b16 %v2183
          %v2493 = vunpack.c.h.b16 %v2183
          %v2494 = vunpack.c.l.b16 %v2184
          %v2495 = vunpack.c.h.b16 %v2184
          %v2496 = vunpack.c.l.b16 %v2185
          %v2497 = vunpack.c.h.b16 %v2185
          %v2498 = vunpack.c.l.b16 %v2186
          %v2499 = vunpack.c.h.b16 %v2186
          %v2500 = vunpack.c.l.b16 %v2187
          %v2501 = vunpack.c.h.b16 %v2187
          %v2502 = vunpack.c.l.b16 %v2188
          %v2503 = vunpack.c.h.b16 %v2188
          %v2504 = vunpack.c.l.b16 %v2189
          %v2505 = vunpack.c.h.b16 %v2189
          %v2506 = vunpack.c.l.b16 %v2190
          %v2507 = vunpack.c.h.b16 %v2190
          %v2508 = vunpack.c.l.b16 %v2191
          %v2509 = vunpack.c.h.b16 %v2191
          %v2510 = vunpack.c.l.b16 %v2192
          %v2511 = vunpack.c.h.b16 %v2192
          %v2512 = vunpack.c.l.b16 %v2193
          %v2513 = vunpack.c.h.b16 %v2193
          %v2514 = vunpack.c.l.b16 %v2194
          %v2515 = vunpack.c.h.b16 %v2194
          %v2516 = vunpack.c.l.b16 %v2195
          %v2517 = vunpack.c.h.b16 %v2195
          %v2518 = vunpack.c.l.b16 %v2196
          %v2519 = vunpack.c.h.b16 %v2196
          %v2520 = vunpack.c.l.b16 %v2197
          %v2521 = vunpack.c.h.b16 %v2197
          %v2522 = vunpack.c.l.b16 %v2198
          %v2523 = vunpack.c.h.b16 %v2198
          %v2524 = vunpack.c.l.b16 %v2199
          %v2525 = vunpack.c.h.b16 %v2199
          %v2526 = vunpack.c.l.b16 %v2200
          %v2527 = vunpack.c.h.b16 %v2200
          %v2528 = vunpack.c.l.b16 %v2201
          %v2529 = vunpack.c.h.b16 %v2201
          %v2530 = vunpack.c.l.b16 %v2202
          %v2531 = vunpack.c.h.b16 %v2202
          %v2532 = vunpack.c.l.b16 %v2203
          %v2533 = vunpack.c.h.b16 %v2203
          %v2534 = vunpack.c.l.b16 %v2204
          %v2535 = vunpack.c.h.b16 %v2204
          %v2536 = vunpack.c.l.b16 %v2205
          %v2537 = vunpack.c.h.b16 %v2205
          %v2538 = vunpack.c.l.b16 %v2206
          %v2539 = vunpack.c.h.b16 %v2206
          %v2540 = vunpack.c.l.b16 %v2207
          %v2541 = vunpack.c.h.b16 %v2207
          %v2542 = vunpack.c.l.b16 %v2208
          %v2543 = vunpack.c.h.b16 %v2208
          %v2544 = vunpack.c.l.b16 %v2209
          %v2545 = vunpack.c.h.b16 %v2209
          %v2546 = vunpack.c.l.b16 %v2210
          %v2547 = vunpack.c.h.b16 %v2210
          %v2548 = vunpack.c.l.b16 %v2211
          %v2549 = vunpack.c.h.b16 %v2211
          %v2550 = vunpack.c.l.b16 %v2212
          %v2551 = vunpack.c.h.b16 %v2212
          %v2552 = vunpack.c.l.b16 %v2213
          %v2553 = vunpack.c.h.b16 %v2213
          %v2554 = vunpack.c.l.b16 %v2214
          %v2555 = vunpack.c.h.b16 %v2214
          %v2556 = vunpack.c.l.b16 %v2215
          %v2557 = vunpack.c.h.b16 %v2215
          %v2558 = vunpack.c.l.b16 %v2216
          %v2559 = vunpack.c.h.b16 %v2216
          %v2560 = vunpack.c.l.b16 %v2217
          %v2561 = vunpack.c.h.b16 %v2217
          %v2562 = vunpack.c.l.b16 %v2218
          %v2563 = vunpack.c.h.b16 %v2218
          %v2564 = vunpack.c.l.b16 %v2219
          %v2565 = vunpack.c.h.b16 %v2219
          %v2566 = vunpack.c.l.b16 %v2220
          %v2567 = vunpack.c.h.b16 %v2220
          %v2568 = vunpack.c.l.b16 %v2221
          %v2569 = vunpack.c.h.b16 %v2221
          %v2570 = vunpack.c.l.b16 %v2222
          %v2571 = vunpack.c.h.b16 %v2222
          %v2572 = vunpack.c.l.b16 %v2223
          %v2573 = vunpack.c.h.b16 %v2223
          %v2574 = vunpack.c.l.b16 %v2224
          %v2575 = vunpack.c.h.b16 %v2224
          %v2576 = vunpack.c.l.b16 %v2225
          %v2577 = vunpack.c.h.b16 %v2225
          %v2578 = vunpack.c.l.b16 %v2226
          %v2579 = vunpack.c.h.b16 %v2226
          %v2580 = vunpack.c.l.b16 %v2227
          %v2581 = vunpack.c.h.b16 %v2227
          %v2582 = vunpack.c.l.b16 %v2228
          %v2583 = vunpack.c.h.b16 %v2228
          %v2584 = vunpack.c.l.b16 %v2229
          %v2585 = vunpack.c.h.b16 %v2229
          %v2586 = vunpack.c.l.b16 %v2230
          %v2587 = vunpack.c.h.b16 %v2230
          %v2588 = vunpack.c.l.b16 %v2231
          %v2589 = vunpack.c.h.b16 %v2231
          %v2590 = vunpack.c.l.b16 %v2232
          %v2591 = vunpack.c.h.b16 %v2232
          %v2592 = vunpack.c.l.b16 %v2233
          %v2593 = vunpack.c.h.b16 %v2233
          %v2594 = vunpack.c.l.b16 %v2234
          %v2595 = vunpack.c.h.b16 %v2234
          %v2596 = vunpack.c.l.b16 %v2235
          %v2597 = vunpack.c.h.b16 %v2235
          %v2598 = vunpack.c.l.b16 %v2236
          %v2599 = vunpack.c.h.b16 %v2236
          %v2600 = vunpack.c.l.b16 %v2237
          %v2601 = vunpack.c.h.b16 %v2237
          %v2602 = vunpack.c.l.b16 %v2238
          %v2603 = vunpack.c.h.b16 %v2238
          %v2604 = vunpack.c.l.b16 %v2239
          %v2605 = vunpack.c.h.b16 %v2239
          %v2606 = vunpack.c.l.b16 %v2240
          %v2607 = vunpack.c.h.b16 %v2240
          %v2608 = vunpack.c.l.b16 %v2241
          %v2609 = vunpack.c.h.b16 %v2241
          %v2610 = vunpack.c.l.b16 %v2242
          %v2611 = vunpack.c.h.b16 %v2242
          %v2612 = vunpack.c.l.b16 %v2243
          %v2613 = vunpack.c.h.b16 %v2243
          %v2614 = vunpack.c.l.b16 %v2244
          %v2615 = vunpack.c.h.b16 %v2244
          %v2616 = vunpack.c.l.b16 %v2245
          %v2617 = vunpack.c.h.b16 %v2245
          %v2618 = vunpack.c.l.b16 %v2246
          %v2619 = vunpack.c.h.b16 %v2246
          %v2620 = vunpack.c.l.b16 %v2247
          %v2621 = vunpack.c.h.b16 %v2247
          %v2622 = vunpack.c.l.b16 %v2248
          %v2623 = vunpack.c.h.b16 %v2248
          %v2624 = vunpack.c.l.b16 %v2249
          %v2625 = vunpack.c.h.b16 %v2249
          %v2626 = vunpack.c.l.b16 %v2250
          %v2627 = vunpack.c.h.b16 %v2250
          %v2628 = vunpack.c.l.b16 %v2251
          %v2629 = vunpack.c.h.b16 %v2251
          %v2630 = vunpack.c.l.b16 %v2252
          %v2631 = vunpack.c.h.b16 %v2252
          %v2632 = vunpack.c.l.b16 %v2253
          %v2633 = vunpack.c.h.b16 %v2253
          %v2634 = vunpack.c.l.b16 %v2254
          %v2635 = vunpack.c.h.b16 %v2254
          %v2636 = vunpack.c.l.b16 %v2255
          %v2637 = vunpack.c.h.b16 %v2255
          %v2638 = vunpack.c.l.b16 %v2256
          %v2639 = vunpack.c.h.b16 %v2256
          %v2640 = vunpack.c.l.b16 %v2257
          %v2641 = vunpack.c.h.b16 %v2257
          %v2642 = vpack.c.b16 %v2390, %v2386
          %v2643 = vpack.c.b16 %v2391, %v2387
          %v2644 = vpack.c.b16 %v2392, %v2388
          %v2645 = vpack.c.b16 %v2393, %v2389
          %v2646 = vpack.c.b16 %v2398, %v2394
          %v2647 = vpack.c.b16 %v2399, %v2395
          %v2648 = vpack.c.b16 %v2400, %v2396
          %v2649 = vpack.c.b16 %v2401, %v2397
          %v2650 = vpack.c.b16 %v2406, %v2402
          %v2651 = vpack.c.b16 %v2407, %v2403
          %v2652 = vpack.c.b16 %v2408, %v2404
          %v2653 = vpack.c.b16 %v2409, %v2405
          %v2654 = vpack.c.b16 %v2414, %v2410
          %v2655 = vpack.c.b16 %v2415, %v2411
          %v2656 = vpack.c.b16 %v2416, %v2412
          %v2657 = vpack.c.b16 %v2417, %v2413
          %v2658 = vpack.c.b16 %v2422, %v2418
          %v2659 = vpack.c.b16 %v2423, %v2419
          %v2660 = vpack.c.b16 %v2424, %v2420
          %v2661 = vpack.c.b16 %v2425, %v2421
          %v2662 = vpack.c.b16 %v2430, %v2426
          %v2663 = vpack.c.b16 %v2431, %v2427
          %v2664 = vpack.c.b16 %v2432, %v2428
          %v2665 = vpack.c.b16 %v2433, %v2429
          %v2666 = vpack.c.b16 %v2438, %v2434
          %v2667 = vpack.c.b16 %v2439, %v2435
          %v2668 = vpack.c.b16 %v2440, %v2436
          %v2669 = vpack.c.b16 %v2441, %v2437
          %v2670 = vpack.c.b16 %v2446, %v2442
          %v2671 = vpack.c.b16 %v2447, %v2443
          %v2672 = vpack.c.b16 %v2448, %v2444
          %v2673 = vpack.c.b16 %v2449, %v2445
          %v2674 = vpack.c.b16 %v2454, %v2450
          %v2675 = vpack.c.b16 %v2455, %v2451
          %v2676 = vpack.c.b16 %v2456, %v2452
          %v2677 = vpack.c.b16 %v2457, %v2453
          %v2678 = vpack.c.b16 %v2462, %v2458
          %v2679 = vpack.c.b16 %v2463, %v2459
          %v2680 = vpack.c.b16 %v2464, %v2460
          %v2681 = vpack.c.b16 %v2465, %v2461
          %v2682 = vpack.c.b16 %v2470, %v2466
          %v2683 = vpack.c.b16 %v2471, %v2467
          %v2684 = vpack.c.b16 %v2472, %v2468
          %v2685 = vpack.c.b16 %v2473, %v2469
          %v2686 = vpack.c.b16 %v2478, %v2474
          %v2687 = vpack.c.b16 %v2479, %v2475
          %v2688 = vpack.c.b16 %v2480, %v2476
          %v2689 = vpack.c.b16 %v2481, %v2477
          %v2690 = vpack.c.b16 %v2486, %v2482
          %v2691 = vpack.c.b16 %v2487, %v2483
          %v2692 = vpack.c.b16 %v2488, %v2484
          %v2693 = vpack.c.b16 %v2489, %v2485
          %v2694 = vpack.c.b16 %v2494, %v2490
          %v2695 = vpack.c.b16 %v2495, %v2491
          %v2696 = vpack.c.b16 %v2496, %v2492
          %v2697 = vpack.c.b16 %v2497, %v2493
          %v2698 = vpack.c.b16 %v2502, %v2498
          %v2699 = vpack.c.b16 %v2503, %v2499
          %v2700 = vpack.c.b16 %v2504, %v2500
          %v2701 = vpack.c.b16 %v2505, %v2501
          %v2702 = vpack.c.b16 %v2510, %v2506
          %v2703 = vpack.c.b16 %v2511, %v2507
          %v2704 = vpack.c.b16 %v2512, %v2508
          %v2705 = vpack.c.b16 %v2513, %v2509
          %v2706 = vpack.c.b16 %v2518, %v2514
          %v2707 = vpack.c.b16 %v2519, %v2515
          %v2708 = vpack.c.b16 %v2520, %v2516
          %v2709 = vpack.c.b16 %v2521, %v2517
          %v2710 = vpack.c.b16 %v2526, %v2522
          %v2711 = vpack.c.b16 %v2527, %v2523
          %v2712 = vpack.c.b16 %v2528, %v2524
          %v2713 = vpack.c.b16 %v2529, %v2525
          %v2714 = vpack.c.b16 %v2534, %v2530
          %v2715 = vpack.c.b16 %v2535, %v2531
          %v2716 = vpack.c.b16 %v2536, %v2532
          %v2717 = vpack.c.b16 %v2537, %v2533
          %v2718 = vpack.c.b16 %v2542, %v2538
          %v2719 = vpack.c.b16 %v2543, %v2539
          %v2720 = vpack.c.b16 %v2544, %v2540
          %v2721 = vpack.c.b16 %v2545, %v2541
          %v2722 = vpack.c.b16 %v2550, %v2546
          %v2723 = vpack.c.b16 %v2551, %v2547
          %v2724 = vpack.c.b16 %v2552, %v2548
          %v2725 = vpack.c.b16 %v2553, %v2549
          %v2726 = vpack.c.b16 %v2558, %v2554
          %v2727 = vpack.c.b16 %v2559, %v2555
          %v2728 = vpack.c.b16 %v2560, %v2556
          %v2729 = vpack.c.b16 %v2561, %v2557
          %v2730 = vpack.c.b16 %v2566, %v2562
          %v2731 = vpack.c.b16 %v2567, %v2563
          %v2732 = vpack.c.b16 %v2568, %v2564
          %v2733 = vpack.c.b16 %v2569, %v2565
          %v2734 = vpack.c.b16 %v2574, %v2570
          %v2735 = vpack.c.b16 %v2575, %v2571
          %v2736 = vpack.c.b16 %v2576, %v2572
          %v2737 = vpack.c.b16 %v2577, %v2573
          %v2738 = vpack.c.b16 %v2582, %v2578
          %v2739 = vpack.c.b16 %v2583, %v2579
          %v2740 = vpack.c.b16 %v2584, %v2580
          %v2741 = vpack.c.b16 %v2585, %v2581
          %v2742 = vpack.c.b16 %v2590, %v2586
          %v2743 = vpack.c.b16 %v2591, %v2587
          %v2744 = vpack.c.b16 %v2592, %v2588
          %v2745 = vpack.c.b16 %v2593, %v2589
          %v2746 = vpack.c.b16 %v2598, %v2594
          %v2747 = vpack.c.b16 %v2599, %v2595
          %v2748 = vpack.c.b16 %v2600, %v2596
          %v2749 = vpack.c.b16 %v2601, %v2597
          %v2750 = vpack.c.b16 %v2606, %v2602
          %v2751 = vpack.c.b16 %v2607, %v2603
          %v2752 = vpack.c.b16 %v2608, %v2604
          %v2753 = vpack.c.b16 %v2609, %v2605
          %v2754 = vpack.c.b16 %v2614, %v2610
          %v2755 = vpack.c.b16 %v2615, %v2611
          %v2756 = vpack.c.b16 %v2616, %v2612
          %v2757 = vpack.c.b16 %v2617, %v2613
          %v2758 = vpack.c.b16 %v2622, %v2618
          %v2759 = vpack.c.b16 %v2623, %v2619
          %v2760 = vpack.c.b16 %v2624, %v2620
          %v2761 = vpack.c.b16 %v2625, %v2621
          %v2762 = vpack.c.b16 %v2630, %v2626
          %v2763 = vpack.c.b16 %v2631, %v2627
          %v2764 = vpack.c.b16 %v2632, %v2628
          %v2765 = vpack.c.b16 %v2633, %v2629
          %v2766 = vpack.c.b16 %v2638, %v2634
          %v2767 = vpack.c.b16 %v2639, %v2635
          %v2768 = vpack.c.b16 %v2640, %v2636
          %v2769 = vpack.c.b16 %v2641, %v2637
          %2898 = vmatpush.bf16.msra.mxu0 %v2670
          %2899 = vmatpush.bf16.msra.mxu0 %v2666
          %2900 = vmatpush.bf16.msra.mxu0 %v2662
          %2901 = vmatpush.bf16.msra.mxu0 %v2658
          %2902 = vmatpush.bf16.msra.mxu0 %v2654
          %2903 = vmatpush.bf16.msra.mxu0 %v2650
          %2904 = vmatpush.bf16.msra.mxu0 %v2646
          %2905 = vmatpush.bf16.msra.mxu0 %v2642
          %2906 = vmatmul.bf16.gmra.mxu0 %v2118
          %v2907 = vpop.f32.mrf.mxu0
          %v2908 = vadd.f32 0.0, %v2907
          %v2909 = vpop.f32.mrf.mxu0
          %v2910 = vadd.f32 0.0, %v2909
          %2911 = vmatmul.bf16.gmra.mxu0 %v2122
          %v2912 = vpop.f32.mrf.mxu0
          %v2913 = vadd.f32 0.0, %v2912
          %v2914 = vpop.f32.mrf.mxu0
          %v2915 = vadd.f32 0.0, %v2914
          %2916 = vmatmul.bf16.gmra.mxu0 %v2126
          %v2917 = vpop.f32.mrf.mxu0
          %v2918 = vadd.f32 0.0, %v2917
          %v2919 = vpop.f32.mrf.mxu0
          %v2920 = vadd.f32 0.0, %v2919
          %2921 = vdwg.mxu0
          %2922 = vmatpush.bf16.msra.mxu0 %v2702
          %2923 = vmatpush.bf16.msra.mxu0 %v2698
          %2924 = vmatpush.bf16.msra.mxu0 %v2694
          %2925 = vmatpush.bf16.msra.mxu0 %v2690
          %2926 = vmatpush.bf16.msra.mxu0 %v2686
          %2927 = vmatpush.bf16.msra.mxu0 %v2682
          %2928 = vmatpush.bf16.msra.mxu0 %v2678
          %2929 = vmatpush.bf16.msra.mxu0 %v2674
          %2930 = vmatmul.bf16.gmra.mxu0 %v2119
          %v2931 = vpop.f32.mrf.mxu0
          %v2932 = vadd.f32 %v2908, %v2931
          %v2933 = vpop.f32.mrf.mxu0
          %v2934 = vadd.f32 %v2910, %v2933
          %2935 = vmatmul.bf16.gmra.mxu0 %v2123
          %v2936 = vpop.f32.mrf.mxu0
          %v2937 = vadd.f32 %v2913, %v2936
          %v2938 = vpop.f32.mrf.mxu0
          %v2939 = vadd.f32 %v2915, %v2938
          %2940 = vmatmul.bf16.gmra.mxu0 %v2127
          %v2941 = vpop.f32.mrf.mxu0
          %v2942 = vadd.f32 %v2918, %v2941
          %v2943 = vpop.f32.mrf.mxu0
          %v2944 = vadd.f32 %v2920, %v2943
          %2945 = vdwg.mxu0
          %2946 = vmatpush.bf16.msra.mxu0 %v2734
          %2947 = vmatpush.bf16.msra.mxu0 %v2730
          %2948 = vmatpush.bf16.msra.mxu0 %v2726
          %2949 = vmatpush.bf16.msra.mxu0 %v2722
          %2950 = vmatpush.bf16.msra.mxu0 %v2718
          %2951 = vmatpush.bf16.msra.mxu0 %v2714
          %2952 = vmatpush.bf16.msra.mxu0 %v2710
          %2953 = vmatpush.bf16.msra.mxu0 %v2706
          %2954 = vmatmul.bf16.gmra.mxu0 %v2120
          %v2955 = vpop.f32.mrf.mxu0
          %v2956 = vadd.f32 %v2932, %v2955
          %v2957 = vpop.f32.mrf.mxu0
          %v2958 = vadd.f32 %v2934, %v2957
          %2959 = vmatmul.bf16.gmra.mxu0 %v2124
          %v2960 = vpop.f32.mrf.mxu0
          %v2961 = vadd.f32 %v2937, %v2960
          %v2962 = vpop.f32.mrf.mxu0
          %v2963 = vadd.f32 %v2939, %v2962
          %2964 = vmatmul.bf16.gmra.mxu0 %v2128
          %v2965 = vpop.f32.mrf.mxu0
          %v2966 = vadd.f32 %v2942, %v2965
          %v2967 = vpop.f32.mrf.mxu0
          %v2968 = vadd.f32 %v2944, %v2967
          %2969 = vdwg.mxu0
          %2970 = vmatpush.bf16.msra.mxu0 %v2766
          %2971 = vmatpush.bf16.msra.mxu0 %v2762
          %2972 = vmatpush.bf16.msra.mxu0 %v2758
          %2973 = vmatpush.bf16.msra.mxu0 %v2754
          %2974 = vmatpush.bf16.msra.mxu0 %v2750
          %2975 = vmatpush.bf16.msra.mxu0 %v2746
          %2976 = vmatpush.bf16.msra.mxu0 %v2742
          %2977 = vmatpush.bf16.msra.mxu0 %v2738
          %2978 = vmatmul.bf16.gmra.mxu0 %v2121
          %v2979 = vpop.f32.mrf.mxu0
          %v2980 = vadd.f32 %v2956, %v2979
          %v2981 = vpop.f32.mrf.mxu0
          %v2982 = vadd.f32 %v2958, %v2981
          %2983 = vmatmul.bf16.gmra.mxu0 %v2125
          %v2984 = vpop.f32.mrf.mxu0
          %v2985 = vadd.f32 %v2961, %v2984
          %v2986 = vpop.f32.mrf.mxu0
          %v2987 = vadd.f32 %v2963, %v2986
          %2988 = vmatmul.bf16.gmra.mxu0 %v2129
          %v2989 = vpop.f32.mrf.mxu0
          %v2990 = vadd.f32 %v2966, %v2989
          %v2991 = vpop.f32.mrf.mxu0
          %v2992 = vadd.f32 %v2968, %v2991
          %2993 = vdwg.mxu0
          %2994 = vmatpush.bf16.msra.mxu0 %v2671
          %2995 = vmatpush.bf16.msra.mxu0 %v2667
          %2996 = vmatpush.bf16.msra.mxu0 %v2663
          %2997 = vmatpush.bf16.msra.mxu0 %v2659
          %2998 = vmatpush.bf16.msra.mxu0 %v2655
          %2999 = vmatpush.bf16.msra.mxu0 %v2651
          %3000 = vmatpush.bf16.msra.mxu0 %v2647
          %3001 = vmatpush.bf16.msra.mxu0 %v2643
          %3002 = vmatmul.bf16.gmra.mxu0 %v2118
          %v3003 = vpop.f32.mrf.mxu0
          %v3004 = vadd.f32 0.0, %v3003
          %v3005 = vpop.f32.mrf.mxu0
          %v3006 = vadd.f32 0.0, %v3005
          %3007 = vmatmul.bf16.gmra.mxu0 %v2122
          %v3008 = vpop.f32.mrf.mxu0
          %v3009 = vadd.f32 0.0, %v3008
          %v3010 = vpop.f32.mrf.mxu0
          %v3011 = vadd.f32 0.0, %v3010
          %3012 = vmatmul.bf16.gmra.mxu0 %v2126
          %v3013 = vpop.f32.mrf.mxu0
          %v3014 = vadd.f32 0.0, %v3013
          %v3015 = vpop.f32.mrf.mxu0
          %v3016 = vadd.f32 0.0, %v3015
          %3017 = vdwg.mxu0
          %3018 = vmatpush.bf16.msra.mxu0 %v2703
          %3019 = vmatpush.bf16.msra.mxu0 %v2699
          %3020 = vmatpush.bf16.msra.mxu0 %v2695
          %3021 = vmatpush.bf16.msra.mxu0 %v2691
          %3022 = vmatpush.bf16.msra.mxu0 %v2687
          %3023 = vmatpush.bf16.msra.mxu0 %v2683
          %3024 = vmatpush.bf16.msra.mxu0 %v2679
          %3025 = vmatpush.bf16.msra.mxu0 %v2675
          %3026 = vmatmul.bf16.gmra.mxu0 %v2119
          %v3027 = vpop.f32.mrf.mxu0
          %v3028 = vadd.f32 %v3004, %v3027
          %v3029 = vpop.f32.mrf.mxu0
          %v3030 = vadd.f32 %v3006, %v3029
          %3031 = vmatmul.bf16.gmra.mxu0 %v2123
          %v3032 = vpop.f32.mrf.mxu0
          %v3033 = vadd.f32 %v3009, %v3032
          %v3034 = vpop.f32.mrf.mxu0
          %v3035 = vadd.f32 %v3011, %v3034
          %3036 = vmatmul.bf16.gmra.mxu0 %v2127
          %v3037 = vpop.f32.mrf.mxu0
          %v3038 = vadd.f32 %v3014, %v3037
          %v3039 = vpop.f32.mrf.mxu0
          %v3040 = vadd.f32 %v3016, %v3039
          %3041 = vdwg.mxu0
          %3042 = vmatpush.bf16.msra.mxu0 %v2735
          %3043 = vmatpush.bf16.msra.mxu0 %v2731
          %3044 = vmatpush.bf16.msra.mxu0 %v2727
          %3045 = vmatpush.bf16.msra.mxu0 %v2723
          %3046 = vmatpush.bf16.msra.mxu0 %v2719
          %3047 = vmatpush.bf16.msra.mxu0 %v2715
          %3048 = vmatpush.bf16.msra.mxu0 %v2711
          %3049 = vmatpush.bf16.msra.mxu0 %v2707
          %3050 = vmatmul.bf16.gmra.mxu0 %v2120
          %v3051 = vpop.f32.mrf.mxu0
          %v3052 = vadd.f32 %v3028, %v3051
          %v3053 = vpop.f32.mrf.mxu0
          %v3054 = vadd.f32 %v3030, %v3053
          %3055 = vmatmul.bf16.gmra.mxu0 %v2124
          %v3056 = vpop.f32.mrf.mxu0
          %v3057 = vadd.f32 %v3033, %v3056
          %v3058 = vpop.f32.mrf.mxu0
          %v3059 = vadd.f32 %v3035, %v3058
          %3060 = vmatmul.bf16.gmra.mxu0 %v2128
          %v3061 = vpop.f32.mrf.mxu0
          %v3062 = vadd.f32 %v3038, %v3061
          %v3063 = vpop.f32.mrf.mxu0
          %v3064 = vadd.f32 %v3040, %v3063
          %3065 = vdwg.mxu0
          %3066 = vmatpush.bf16.msra.mxu0 %v2767
          %3067 = vmatpush.bf16.msra.mxu0 %v2763
          %3068 = vmatpush.bf16.msra.mxu0 %v2759
          %3069 = vmatpush.bf16.msra.mxu0 %v2755
          %3070 = vmatpush.bf16.msra.mxu0 %v2751
          %3071 = vmatpush.bf16.msra.mxu0 %v2747
          %3072 = vmatpush.bf16.msra.mxu0 %v2743
          %3073 = vmatpush.bf16.msra.mxu0 %v2739
          %3074 = vmatmul.bf16.gmra.mxu0 %v2121
          %v3075 = vpop.f32.mrf.mxu0
          %v3076 = vadd.f32 %v3052, %v3075
          %v3077 = vpop.f32.mrf.mxu0
          %v3078 = vadd.f32 %v3054, %v3077
          %3079 = vmatmul.bf16.gmra.mxu0 %v2125
          %v3080 = vpop.f32.mrf.mxu0
          %v3081 = vadd.f32 %v3057, %v3080
          %v3082 = vpop.f32.mrf.mxu0
          %v3083 = vadd.f32 %v3059, %v3082
          %3084 = vmatmul.bf16.gmra.mxu0 %v2129
          %v3085 = vpop.f32.mrf.mxu0
          %v3086 = vadd.f32 %v3062, %v3085
          %v3087 = vpop.f32.mrf.mxu0
          %v3088 = vadd.f32 %v3064, %v3087
          %3089 = vdwg.mxu0
          %3090 = vmatpush.bf16.msra.mxu0 %v2672
          %3091 = vmatpush.bf16.msra.mxu0 %v2668
          %3092 = vmatpush.bf16.msra.mxu0 %v2664
          %3093 = vmatpush.bf16.msra.mxu0 %v2660
          %3094 = vmatpush.bf16.msra.mxu0 %v2656
          %3095 = vmatpush.bf16.msra.mxu0 %v2652
          %3096 = vmatpush.bf16.msra.mxu0 %v2648
          %3097 = vmatpush.bf16.msra.mxu0 %v2644
          %3098 = vmatmul.bf16.gmra.mxu0 %v2118
          %v3099 = vpop.f32.mrf.mxu0
          %v3100 = vadd.f32 0.0, %v3099
          %v3101 = vpop.f32.mrf.mxu0
          %v3102 = vadd.f32 0.0, %v3101
          %3103 = vmatmul.bf16.gmra.mxu0 %v2122
          %v3104 = vpop.f32.mrf.mxu0
          %v3105 = vadd.f32 0.0, %v3104
          %v3106 = vpop.f32.mrf.mxu0
          %v3107 = vadd.f32 0.0, %v3106
          %3108 = vmatmul.bf16.gmra.mxu0 %v2126
          %v3109 = vpop.f32.mrf.mxu0
          %v3110 = vadd.f32 0.0, %v3109
          %v3111 = vpop.f32.mrf.mxu0
          %v3112 = vadd.f32 0.0, %v3111
          %3113 = vdwg.mxu0
          %3114 = vmatpush.bf16.msra.mxu0 %v2704
          %3115 = vmatpush.bf16.msra.mxu0 %v2700
          %3116 = vmatpush.bf16.msra.mxu0 %v2696
          %3117 = vmatpush.bf16.msra.mxu0 %v2692
          %3118 = vmatpush.bf16.msra.mxu0 %v2688
          %3119 = vmatpush.bf16.msra.mxu0 %v2684
          %3120 = vmatpush.bf16.msra.mxu0 %v2680
          %3121 = vmatpush.bf16.msra.mxu0 %v2676
          %3122 = vmatmul.bf16.gmra.mxu0 %v2119
          %v3123 = vpop.f32.mrf.mxu0
          %v3124 = vadd.f32 %v3100, %v3123
          %v3125 = vpop.f32.mrf.mxu0
          %v3126 = vadd.f32 %v3102, %v3125
          %3127 = vmatmul.bf16.gmra.mxu0 %v2123
          %v3128 = vpop.f32.mrf.mxu0
          %v3129 = vadd.f32 %v3105, %v3128
          %v3130 = vpop.f32.mrf.mxu0
          %v3131 = vadd.f32 %v3107, %v3130
          %3132 = vmatmul.bf16.gmra.mxu0 %v2127
          %v3133 = vpop.f32.mrf.mxu0
          %v3134 = vadd.f32 %v3110, %v3133
          %v3135 = vpop.f32.mrf.mxu0
          %v3136 = vadd.f32 %v3112, %v3135
          %3137 = vdwg.mxu0
          %3138 = vmatpush.bf16.msra.mxu0 %v2736
          %3139 = vmatpush.bf16.msra.mxu0 %v2732
          %3140 = vmatpush.bf16.msra.mxu0 %v2728
          %3141 = vmatpush.bf16.msra.mxu0 %v2724
          %3142 = vmatpush.bf16.msra.mxu0 %v2720
          %3143 = vmatpush.bf16.msra.mxu0 %v2716
          %3144 = vmatpush.bf16.msra.mxu0 %v2712
          %3145 = vmatpush.bf16.msra.mxu0 %v2708
          %3146 = vmatmul.bf16.gmra.mxu0 %v2120
          %v3147 = vpop.f32.mrf.mxu0
          %v3148 = vadd.f32 %v3124, %v3147
          %v3149 = vpop.f32.mrf.mxu0
          %v3150 = vadd.f32 %v3126, %v3149
          %3151 = vmatmul.bf16.gmra.mxu0 %v2124
          %v3152 = vpop.f32.mrf.mxu0
          %v3153 = vadd.f32 %v3129, %v3152
          %v3154 = vpop.f32.mrf.mxu0
          %v3155 = vadd.f32 %v3131, %v3154
          %3156 = vmatmul.bf16.gmra.mxu0 %v2128
          %v3157 = vpop.f32.mrf.mxu0
          %v3158 = vadd.f32 %v3134, %v3157
          %v3159 = vpop.f32.mrf.mxu0
          %v3160 = vadd.f32 %v3136, %v3159
          %3161 = vdwg.mxu0
          %3162 = vmatpush.bf16.msra.mxu0 %v2768
          %3163 = vmatpush.bf16.msra.mxu0 %v2764
          %3164 = vmatpush.bf16.msra.mxu0 %v2760
          %3165 = vmatpush.bf16.msra.mxu0 %v2756
          %3166 = vmatpush.bf16.msra.mxu0 %v2752
          %3167 = vmatpush.bf16.msra.mxu0 %v2748
          %3168 = vmatpush.bf16.msra.mxu0 %v2744
          %3169 = vmatpush.bf16.msra.mxu0 %v2740
          %3170 = vmatmul.bf16.gmra.mxu0 %v2121
          %v3171 = vpop.f32.mrf.mxu0
          %v3172 = vadd.f32 %v3148, %v3171
          %v3173 = vpop.f32.mrf.mxu0
          %v3174 = vadd.f32 %v3150, %v3173
          %3175 = vmatmul.bf16.gmra.mxu0 %v2125
          %v3176 = vpop.f32.mrf.mxu0
          %v3177 = vadd.f32 %v3153, %v3176
          %v3178 = vpop.f32.mrf.mxu0
          %v3179 = vadd.f32 %v3155, %v3178
          %3180 = vmatmul.bf16.gmra.mxu0 %v2129
          %v3181 = vpop.f32.mrf.mxu0
          %v3182 = vadd.f32 %v3158, %v3181
          %v3183 = vpop.f32.mrf.mxu0
          %v3184 = vadd.f32 %v3160, %v3183
          %3185 = vdwg.mxu0
          %3186 = vmatpush.bf16.msra.mxu0 %v2673
          %3187 = vmatpush.bf16.msra.mxu0 %v2669
          %3188 = vmatpush.bf16.msra.mxu0 %v2665
          %3189 = vmatpush.bf16.msra.mxu0 %v2661
          %3190 = vmatpush.bf16.msra.mxu0 %v2657
          %3191 = vmatpush.bf16.msra.mxu0 %v2653
          %3192 = vmatpush.bf16.msra.mxu0 %v2649
          %3193 = vmatpush.bf16.msra.mxu0 %v2645
          %3194 = vmatmul.bf16.gmra.mxu0 %v2118
          %v3195 = vpop.f32.mrf.mxu0
          %v3196 = vadd.f32 0.0, %v3195
          %v3197 = vpop.f32.mrf.mxu0
          %v3198 = vadd.f32 0.0, %v3197
          %3199 = vmatmul.bf16.gmra.mxu0 %v2122
          %v3200 = vpop.f32.mrf.mxu0
          %v3201 = vadd.f32 0.0, %v3200
          %v3202 = vpop.f32.mrf.mxu0
          %v3203 = vadd.f32 0.0, %v3202
          %3204 = vmatmul.bf16.gmra.mxu0 %v2126
          %v3205 = vpop.f32.mrf.mxu0
          %v3206 = vadd.f32 0.0, %v3205
          %v3207 = vpop.f32.mrf.mxu0
          %v3208 = vadd.f32 0.0, %v3207
          %3209 = vdwg.mxu0
          %3210 = vmatpush.bf16.msra.mxu0 %v2705
          %3211 = vmatpush.bf16.msra.mxu0 %v2701
          %3212 = vmatpush.bf16.msra.mxu0 %v2697
          %3213 = vmatpush.bf16.msra.mxu0 %v2693
          %3214 = vmatpush.bf16.msra.mxu0 %v2689
          %3215 = vmatpush.bf16.msra.mxu0 %v2685
          %3216 = vmatpush.bf16.msra.mxu0 %v2681
          %3217 = vmatpush.bf16.msra.mxu0 %v2677
          %3218 = vmatmul.bf16.gmra.mxu0 %v2119
          %v3219 = vpop.f32.mrf.mxu0
          %v3220 = vadd.f32 %v3196, %v3219
          %v3221 = vpop.f32.mrf.mxu0
          %v3222 = vadd.f32 %v3198, %v3221
          %3223 = vmatmul.bf16.gmra.mxu0 %v2123
          %v3224 = vpop.f32.mrf.mxu0
          %v3225 = vadd.f32 %v3201, %v3224
          %v3226 = vpop.f32.mrf.mxu0
          %v3227 = vadd.f32 %v3203, %v3226
          %3228 = vmatmul.bf16.gmra.mxu0 %v2127
          %v3229 = vpop.f32.mrf.mxu0
          %v3230 = vadd.f32 %v3206, %v3229
          %v3231 = vpop.f32.mrf.mxu0
          %v3232 = vadd.f32 %v3208, %v3231
          %3233 = vdwg.mxu0
          %3234 = vmatpush.bf16.msra.mxu0 %v2737
          %3235 = vmatpush.bf16.msra.mxu0 %v2733
          %3236 = vmatpush.bf16.msra.mxu0 %v2729
          %3237 = vmatpush.bf16.msra.mxu0 %v2725
          %3238 = vmatpush.bf16.msra.mxu0 %v2721
          %3239 = vmatpush.bf16.msra.mxu0 %v2717
          %3240 = vmatpush.bf16.msra.mxu0 %v2713
          %3241 = vmatpush.bf16.msra.mxu0 %v2709
          %3242 = vmatmul.bf16.gmra.mxu0 %v2120
          %v3243 = vpop.f32.mrf.mxu0
          %v3244 = vadd.f32 %v3220, %v3243
          %v3245 = vpop.f32.mrf.mxu0
          %v3246 = vadd.f32 %v3222, %v3245
          %3247 = vmatmul.bf16.gmra.mxu0 %v2124
          %v3248 = vpop.f32.mrf.mxu0
          %v3249 = vadd.f32 %v3225, %v3248
          %v3250 = vpop.f32.mrf.mxu0
          %v3251 = vadd.f32 %v3227, %v3250
          %3252 = vmatmul.bf16.gmra.mxu0 %v2128
          %v3253 = vpop.f32.mrf.mxu0
          %v3254 = vadd.f32 %v3230, %v3253
          %v3255 = vpop.f32.mrf.mxu0
          %v3256 = vadd.f32 %v3232, %v3255
          %3257 = vdwg.mxu0
          %3258 = vmatpush.bf16.msra.mxu0 %v2769
          %3259 = vmatpush.bf16.msra.mxu0 %v2765
          %3260 = vmatpush.bf16.msra.mxu0 %v2761
          %3261 = vmatpush.bf16.msra.mxu0 %v2757
          %3262 = vmatpush.bf16.msra.mxu0 %v2753
          %3263 = vmatpush.bf16.msra.mxu0 %v2749
          %3264 = vmatpush.bf16.msra.mxu0 %v2745
          %3265 = vmatpush.bf16.msra.mxu0 %v2741
          %3266 = vmatmul.bf16.gmra.mxu0 %v2121
          %v3267 = vpop.f32.mrf.mxu0
          %v3268 = vadd.f32 %v3244, %v3267
          %v3269 = vpop.f32.mrf.mxu0
          %v3270 = vadd.f32 %v3246, %v3269
          %3271 = vmatmul.bf16.gmra.mxu0 %v2125
          %v3272 = vpop.f32.mrf.mxu0
          %v3273 = vadd.f32 %v3249, %v3272
          %v3274 = vpop.f32.mrf.mxu0
          %v3275 = vadd.f32 %v3251, %v3274
          %3276 = vmatmul.bf16.gmra.mxu0 %v2129
          %v3277 = vpop.f32.mrf.mxu0
          %v3278 = vadd.f32 %v3254, %v3277
          %v3279 = vpop.f32.mrf.mxu0
          %v3280 = vadd.f32 %v3256, %v3279
          %3281 = vdwg.mxu0
          %v3410 = vunpack.c.l.b16 %v1942
          %v3411 = vunpack.c.h.b16 %v1942
          %v3412 = vunpack.c.l.b16 %v1943
          %v3413 = vunpack.c.h.b16 %v1943
          %v3414 = vunpack.c.l.b16 %v1944
          %v3415 = vunpack.c.h.b16 %v1944
          %v3416 = vunpack.c.l.b16 %v1945
          %v3417 = vunpack.c.h.b16 %v1945
          %v3418 = vunpack.c.l.b16 %v1946
          %v3419 = vunpack.c.h.b16 %v1946
          %v3420 = vunpack.c.l.b16 %v1947
          %v3421 = vunpack.c.h.b16 %v1947
          %v3422 = vunpack.c.l.b16 %v1948
          %v3423 = vunpack.c.h.b16 %v1948
          %v3424 = vunpack.c.l.b16 %v1949
          %v3425 = vunpack.c.h.b16 %v1949
          %v3426 = vunpack.c.l.b16 %v1950
          %v3427 = vunpack.c.h.b16 %v1950
          %v3428 = vunpack.c.l.b16 %v1951
          %v3429 = vunpack.c.h.b16 %v1951
          %v3430 = vunpack.c.l.b16 %v1952
          %v3431 = vunpack.c.h.b16 %v1952
          %v3432 = vunpack.c.l.b16 %v1953
          %v3433 = vunpack.c.h.b16 %v1953
          %v3434 = vunpack.c.l.b16 %v1954
          %v3435 = vunpack.c.h.b16 %v1954
          %v3436 = vunpack.c.l.b16 %v1955
          %v3437 = vunpack.c.h.b16 %v1955
          %v3438 = vunpack.c.l.b16 %v1956
          %v3439 = vunpack.c.h.b16 %v1956
          %v3440 = vunpack.c.l.b16 %v1957
          %v3441 = vunpack.c.h.b16 %v1957
          %v3442 = vunpack.c.l.b16 %v1958
          %v3443 = vunpack.c.h.b16 %v1958
          %v3444 = vunpack.c.l.b16 %v1959
          %v3445 = vunpack.c.h.b16 %v1959
          %v3446 = vunpack.c.l.b16 %v1960
          %v3447 = vunpack.c.h.b16 %v1960
          %v3448 = vunpack.c.l.b16 %v1961
          %v3449 = vunpack.c.h.b16 %v1961
          %v3450 = vunpack.c.l.b16 %v1962
          %v3451 = vunpack.c.h.b16 %v1962
          %v3452 = vunpack.c.l.b16 %v1963
          %v3453 = vunpack.c.h.b16 %v1963
          %v3454 = vunpack.c.l.b16 %v1964
          %v3455 = vunpack.c.h.b16 %v1964
          %v3456 = vunpack.c.l.b16 %v1965
          %v3457 = vunpack.c.h.b16 %v1965
          %v3458 = vunpack.c.l.b16 %v1966
          %v3459 = vunpack.c.h.b16 %v1966
          %v3460 = vunpack.c.l.b16 %v1967
          %v3461 = vunpack.c.h.b16 %v1967
          %v3462 = vunpack.c.l.b16 %v1968
          %v3463 = vunpack.c.h.b16 %v1968
          %v3464 = vunpack.c.l.b16 %v1969
          %v3465 = vunpack.c.h.b16 %v1969
          %v3466 = vunpack.c.l.b16 %v1970
          %v3467 = vunpack.c.h.b16 %v1970
          %v3468 = vunpack.c.l.b16 %v1971
          %v3469 = vunpack.c.h.b16 %v1971
          %v3470 = vunpack.c.l.b16 %v1972
          %v3471 = vunpack.c.h.b16 %v1972
          %v3472 = vunpack.c.l.b16 %v1973
          %v3473 = vunpack.c.h.b16 %v1973
          %v3474 = vunpack.c.l.b16 %v1974
          %v3475 = vunpack.c.h.b16 %v1974
          %v3476 = vunpack.c.l.b16 %v1975
          %v3477 = vunpack.c.h.b16 %v1975
          %v3478 = vunpack.c.l.b16 %v1976
          %v3479 = vunpack.c.h.b16 %v1976
          %v3480 = vunpack.c.l.b16 %v1977
          %v3481 = vunpack.c.h.b16 %v1977
          %v3482 = vunpack.c.l.b16 %v1978
          %v3483 = vunpack.c.h.b16 %v1978
          %v3484 = vunpack.c.l.b16 %v1979
          %v3485 = vunpack.c.h.b16 %v1979
          %v3486 = vunpack.c.l.b16 %v1980
          %v3487 = vunpack.c.h.b16 %v1980
          %v3488 = vunpack.c.l.b16 %v1981
          %v3489 = vunpack.c.h.b16 %v1981
          %v3490 = vunpack.c.l.b16 %v1982
          %v3491 = vunpack.c.h.b16 %v1982
          %v3492 = vunpack.c.l.b16 %v1983
          %v3493 = vunpack.c.h.b16 %v1983
          %v3494 = vunpack.c.l.b16 %v1984
          %v3495 = vunpack.c.h.b16 %v1984
          %v3496 = vunpack.c.l.b16 %v1985
          %v3497 = vunpack.c.h.b16 %v1985
          %v3498 = vunpack.c.l.b16 %v1986
          %v3499 = vunpack.c.h.b16 %v1986
          %v3500 = vunpack.c.l.b16 %v1987
          %v3501 = vunpack.c.h.b16 %v1987
          %v3502 = vunpack.c.l.b16 %v1988
          %v3503 = vunpack.c.h.b16 %v1988
          %v3504 = vunpack.c.l.b16 %v1989
          %v3505 = vunpack.c.h.b16 %v1989
          %v3506 = vunpack.c.l.b16 %v1990
          %v3507 = vunpack.c.h.b16 %v1990
          %v3508 = vunpack.c.l.b16 %v1991
          %v3509 = vunpack.c.h.b16 %v1991
          %v3510 = vunpack.c.l.b16 %v1992
          %v3511 = vunpack.c.h.b16 %v1992
          %v3512 = vunpack.c.l.b16 %v1993
          %v3513 = vunpack.c.h.b16 %v1993
          %v3514 = vunpack.c.l.b16 %v1994
          %v3515 = vunpack.c.h.b16 %v1994
          %v3516 = vunpack.c.l.b16 %v1995
          %v3517 = vunpack.c.h.b16 %v1995
          %v3518 = vunpack.c.l.b16 %v1996
          %v3519 = vunpack.c.h.b16 %v1996
          %v3520 = vunpack.c.l.b16 %v1997
          %v3521 = vunpack.c.h.b16 %v1997
          %v3522 = vunpack.c.l.b16 %v1998
          %v3523 = vunpack.c.h.b16 %v1998
          %v3524 = vunpack.c.l.b16 %v1999
          %v3525 = vunpack.c.h.b16 %v1999
          %v3526 = vunpack.c.l.b16 %v2000
          %v3527 = vunpack.c.h.b16 %v2000
          %v3528 = vunpack.c.l.b16 %v2001
          %v3529 = vunpack.c.h.b16 %v2001
          %v3530 = vunpack.c.l.b16 %v2002
          %v3531 = vunpack.c.h.b16 %v2002
          %v3532 = vunpack.c.l.b16 %v2003
          %v3533 = vunpack.c.h.b16 %v2003
          %v3534 = vunpack.c.l.b16 %v2004
          %v3535 = vunpack.c.h.b16 %v2004
          %v3536 = vunpack.c.l.b16 %v2005
          %v3537 = vunpack.c.h.b16 %v2005
          %v3538 = vunpack.c.l.b16 %v2006
          %v3539 = vunpack.c.h.b16 %v2006
          %v3540 = vunpack.c.l.b16 %v2007
          %v3541 = vunpack.c.h.b16 %v2007
          %v3542 = vunpack.c.l.b16 %v2008
          %v3543 = vunpack.c.h.b16 %v2008
          %v3544 = vunpack.c.l.b16 %v2009
          %v3545 = vunpack.c.h.b16 %v2009
          %v3546 = vunpack.c.l.b16 %v2010
          %v3547 = vunpack.c.h.b16 %v2010
          %v3548 = vunpack.c.l.b16 %v2011
          %v3549 = vunpack.c.h.b16 %v2011
          %v3550 = vunpack.c.l.b16 %v2012
          %v3551 = vunpack.c.h.b16 %v2012
          %v3552 = vunpack.c.l.b16 %v2013
          %v3553 = vunpack.c.h.b16 %v2013
          %v3554 = vunpack.c.l.b16 %v2014
          %v3555 = vunpack.c.h.b16 %v2014
          %v3556 = vunpack.c.l.b16 %v2015
          %v3557 = vunpack.c.h.b16 %v2015
          %v3558 = vunpack.c.l.b16 %v2016
          %v3559 = vunpack.c.h.b16 %v2016
          %v3560 = vunpack.c.l.b16 %v2017
          %v3561 = vunpack.c.h.b16 %v2017
          %v3562 = vunpack.c.l.b16 %v2018
          %v3563 = vunpack.c.h.b16 %v2018
          %v3564 = vunpack.c.l.b16 %v2019
          %v3565 = vunpack.c.h.b16 %v2019
          %v3566 = vunpack.c.l.b16 %v2020
          %v3567 = vunpack.c.h.b16 %v2020
          %v3568 = vunpack.c.l.b16 %v2021
          %v3569 = vunpack.c.h.b16 %v2021
          %v3570 = vunpack.c.l.b16 %v2022
          %v3571 = vunpack.c.h.b16 %v2022
          %v3572 = vunpack.c.l.b16 %v2023
          %v3573 = vunpack.c.h.b16 %v2023
          %v3574 = vunpack.c.l.b16 %v2024
          %v3575 = vunpack.c.h.b16 %v2024
          %v3576 = vunpack.c.l.b16 %v2025
          %v3577 = vunpack.c.h.b16 %v2025
          %v3578 = vunpack.c.l.b16 %v2026
          %v3579 = vunpack.c.h.b16 %v2026
          %v3580 = vunpack.c.l.b16 %v2027
          %v3581 = vunpack.c.h.b16 %v2027
          %v3582 = vunpack.c.l.b16 %v2028
          %v3583 = vunpack.c.h.b16 %v2028
          %v3584 = vunpack.c.l.b16 %v2029
          %v3585 = vunpack.c.h.b16 %v2029
          %v3586 = vunpack.c.l.b16 %v2030
          %v3587 = vunpack.c.h.b16 %v2030
          %v3588 = vunpack.c.l.b16 %v2031
          %v3589 = vunpack.c.h.b16 %v2031
          %v3590 = vunpack.c.l.b16 %v2032
          %v3591 = vunpack.c.h.b16 %v2032
          %v3592 = vunpack.c.l.b16 %v2033
          %v3593 = vunpack.c.h.b16 %v2033
          %v3594 = vunpack.c.l.b16 %v2034
          %v3595 = vunpack.c.h.b16 %v2034
          %v3596 = vunpack.c.l.b16 %v2035
          %v3597 = vunpack.c.h.b16 %v2035
          %v3598 = vunpack.c.l.b16 %v2036
          %v3599 = vunpack.c.h.b16 %v2036
          %v3600 = vunpack.c.l.b16 %v2037
          %v3601 = vunpack.c.h.b16 %v2037
          %v3602 = vunpack.c.l.b16 %v2038
          %v3603 = vunpack.c.h.b16 %v2038
          %v3604 = vunpack.c.l.b16 %v2039
          %v3605 = vunpack.c.h.b16 %v2039
          %v3606 = vunpack.c.l.b16 %v2040
          %v3607 = vunpack.c.h.b16 %v2040
          %v3608 = vunpack.c.l.b16 %v2041
          %v3609 = vunpack.c.h.b16 %v2041
          %v3610 = vunpack.c.l.b16 %v2042
          %v3611 = vunpack.c.h.b16 %v2042
          %v3612 = vunpack.c.l.b16 %v2043
          %v3613 = vunpack.c.h.b16 %v2043
          %v3614 = vunpack.c.l.b16 %v2044
          %v3615 = vunpack.c.h.b16 %v2044
          %v3616 = vunpack.c.l.b16 %v2045
          %v3617 = vunpack.c.h.b16 %v2045
          %v3618 = vunpack.c.l.b16 %v2046
          %v3619 = vunpack.c.h.b16 %v2046
          %v3620 = vunpack.c.l.b16 %v2047
          %v3621 = vunpack.c.h.b16 %v2047
          %v3622 = vunpack.c.l.b16 %v2048
          %v3623 = vunpack.c.h.b16 %v2048
          %v3624 = vunpack.c.l.b16 %v2049
          %v3625 = vunpack.c.h.b16 %v2049
          %v3626 = vunpack.c.l.b16 %v2050
          %v3627 = vunpack.c.h.b16 %v2050
          %v3628 = vunpack.c.l.b16 %v2051
          %v3629 = vunpack.c.h.b16 %v2051
          %v3630 = vunpack.c.l.b16 %v2052
          %v3631 = vunpack.c.h.b16 %v2052
          %v3632 = vunpack.c.l.b16 %v2053
          %v3633 = vunpack.c.h.b16 %v2053
          %v3634 = vunpack.c.l.b16 %v2054
          %v3635 = vunpack.c.h.b16 %v2054
          %v3636 = vunpack.c.l.b16 %v2055
          %v3637 = vunpack.c.h.b16 %v2055
          %v3638 = vunpack.c.l.b16 %v2056
          %v3639 = vunpack.c.h.b16 %v2056
          %v3640 = vunpack.c.l.b16 %v2057
          %v3641 = vunpack.c.h.b16 %v2057
          %v3642 = vunpack.c.l.b16 %v2058
          %v3643 = vunpack.c.h.b16 %v2058
          %v3644 = vunpack.c.l.b16 %v2059
          %v3645 = vunpack.c.h.b16 %v2059
          %v3646 = vunpack.c.l.b16 %v2060
          %v3647 = vunpack.c.h.b16 %v2060
          %v3648 = vunpack.c.l.b16 %v2061
          %v3649 = vunpack.c.h.b16 %v2061
          %v3650 = vunpack.c.l.b16 %v2062
          %v3651 = vunpack.c.h.b16 %v2062
          %v3652 = vunpack.c.l.b16 %v2063
          %v3653 = vunpack.c.h.b16 %v2063
          %v3654 = vunpack.c.l.b16 %v2064
          %v3655 = vunpack.c.h.b16 %v2064
          %v3656 = vunpack.c.l.b16 %v2065
          %v3657 = vunpack.c.h.b16 %v2065
          %v3658 = vunpack.c.l.b16 %v2066
          %v3659 = vunpack.c.h.b16 %v2066
          %v3660 = vunpack.c.l.b16 %v2067
          %v3661 = vunpack.c.h.b16 %v2067
          %v3662 = vunpack.c.l.b16 %v2068
          %v3663 = vunpack.c.h.b16 %v2068
          %v3664 = vunpack.c.l.b16 %v2069
          %v3665 = vunpack.c.h.b16 %v2069
          %v3666 = vpack.c.b16 %v3414, %v3410
          %v3667 = vpack.c.b16 %v3415, %v3411
          %v3668 = vpack.c.b16 %v3416, %v3412
          %v3669 = vpack.c.b16 %v3417, %v3413
          %v3670 = vpack.c.b16 %v3422, %v3418
          %v3671 = vpack.c.b16 %v3423, %v3419
          %v3672 = vpack.c.b16 %v3424, %v3420
          %v3673 = vpack.c.b16 %v3425, %v3421
          %v3674 = vpack.c.b16 %v3430, %v3426
          %v3675 = vpack.c.b16 %v3431, %v3427
          %v3676 = vpack.c.b16 %v3432, %v3428
          %v3677 = vpack.c.b16 %v3433, %v3429
          %v3678 = vpack.c.b16 %v3438, %v3434
          %v3679 = vpack.c.b16 %v3439, %v3435
          %v3680 = vpack.c.b16 %v3440, %v3436
          %v3681 = vpack.c.b16 %v3441, %v3437
          %v3682 = vpack.c.b16 %v3446, %v3442
          %v3683 = vpack.c.b16 %v3447, %v3443
          %v3684 = vpack.c.b16 %v3448, %v3444
          %v3685 = vpack.c.b16 %v3449, %v3445
          %v3686 = vpack.c.b16 %v3454, %v3450
          %v3687 = vpack.c.b16 %v3455, %v3451
          %v3688 = vpack.c.b16 %v3456, %v3452
          %v3689 = vpack.c.b16 %v3457, %v3453
          %v3690 = vpack.c.b16 %v3462, %v3458
          %v3691 = vpack.c.b16 %v3463, %v3459
          %v3692 = vpack.c.b16 %v3464, %v3460
          %v3693 = vpack.c.b16 %v3465, %v3461
          %v3694 = vpack.c.b16 %v3470, %v3466
          %v3695 = vpack.c.b16 %v3471, %v3467
          %v3696 = vpack.c.b16 %v3472, %v3468
          %v3697 = vpack.c.b16 %v3473, %v3469
          %v3698 = vpack.c.b16 %v3478, %v3474
          %v3699 = vpack.c.b16 %v3479, %v3475
          %v3700 = vpack.c.b16 %v3480, %v3476
          %v3701 = vpack.c.b16 %v3481, %v3477
          %v3702 = vpack.c.b16 %v3486, %v3482
          %v3703 = vpack.c.b16 %v3487, %v3483
          %v3704 = vpack.c.b16 %v3488, %v3484
          %v3705 = vpack.c.b16 %v3489, %v3485
          %v3706 = vpack.c.b16 %v3494, %v3490
          %v3707 = vpack.c.b16 %v3495, %v3491
          %v3708 = vpack.c.b16 %v3496, %v3492
          %v3709 = vpack.c.b16 %v3497, %v3493
          %v3710 = vpack.c.b16 %v3502, %v3498
          %v3711 = vpack.c.b16 %v3503, %v3499
          %v3712 = vpack.c.b16 %v3504, %v3500
          %v3713 = vpack.c.b16 %v3505, %v3501
          %v3714 = vpack.c.b16 %v3510, %v3506
          %v3715 = vpack.c.b16 %v3511, %v3507
          %v3716 = vpack.c.b16 %v3512, %v3508
          %v3717 = vpack.c.b16 %v3513, %v3509
          %v3718 = vpack.c.b16 %v3518, %v3514
          %v3719 = vpack.c.b16 %v3519, %v3515
          %v3720 = vpack.c.b16 %v3520, %v3516
          %v3721 = vpack.c.b16 %v3521, %v3517
          %v3722 = vpack.c.b16 %v3526, %v3522
          %v3723 = vpack.c.b16 %v3527, %v3523
          %v3724 = vpack.c.b16 %v3528, %v3524
          %v3725 = vpack.c.b16 %v3529, %v3525
          %v3726 = vpack.c.b16 %v3534, %v3530
          %v3727 = vpack.c.b16 %v3535, %v3531
          %v3728 = vpack.c.b16 %v3536, %v3532
          %v3729 = vpack.c.b16 %v3537, %v3533
          %v3730 = vpack.c.b16 %v3542, %v3538
          %v3731 = vpack.c.b16 %v3543, %v3539
          %v3732 = vpack.c.b16 %v3544, %v3540
          %v3733 = vpack.c.b16 %v3545, %v3541
          %v3734 = vpack.c.b16 %v3550, %v3546
          %v3735 = vpack.c.b16 %v3551, %v3547
          %v3736 = vpack.c.b16 %v3552, %v3548
          %v3737 = vpack.c.b16 %v3553, %v3549
          %v3738 = vpack.c.b16 %v3558, %v3554
          %v3739 = vpack.c.b16 %v3559, %v3555
          %v3740 = vpack.c.b16 %v3560, %v3556
          %v3741 = vpack.c.b16 %v3561, %v3557
          %v3742 = vpack.c.b16 %v3566, %v3562
          %v3743 = vpack.c.b16 %v3567, %v3563
          %v3744 = vpack.c.b16 %v3568, %v3564
          %v3745 = vpack.c.b16 %v3569, %v3565
          %v3746 = vpack.c.b16 %v3574, %v3570
          %v3747 = vpack.c.b16 %v3575, %v3571
          %v3748 = vpack.c.b16 %v3576, %v3572
          %v3749 = vpack.c.b16 %v3577, %v3573
          %v3750 = vpack.c.b16 %v3582, %v3578
          %v3751 = vpack.c.b16 %v3583, %v3579
          %v3752 = vpack.c.b16 %v3584, %v3580
          %v3753 = vpack.c.b16 %v3585, %v3581
          %v3754 = vpack.c.b16 %v3590, %v3586
          %v3755 = vpack.c.b16 %v3591, %v3587
          %v3756 = vpack.c.b16 %v3592, %v3588
          %v3757 = vpack.c.b16 %v3593, %v3589
          %v3758 = vpack.c.b16 %v3598, %v3594
          %v3759 = vpack.c.b16 %v3599, %v3595
          %v3760 = vpack.c.b16 %v3600, %v3596
          %v3761 = vpack.c.b16 %v3601, %v3597
          %v3762 = vpack.c.b16 %v3606, %v3602
          %v3763 = vpack.c.b16 %v3607, %v3603
          %v3764 = vpack.c.b16 %v3608, %v3604
          %v3765 = vpack.c.b16 %v3609, %v3605
          %v3766 = vpack.c.b16 %v3614, %v3610
          %v3767 = vpack.c.b16 %v3615, %v3611
          %v3768 = vpack.c.b16 %v3616, %v3612
          %v3769 = vpack.c.b16 %v3617, %v3613
          %v3770 = vpack.c.b16 %v3622, %v3618
          %v3771 = vpack.c.b16 %v3623, %v3619
          %v3772 = vpack.c.b16 %v3624, %v3620
          %v3773 = vpack.c.b16 %v3625, %v3621
          %v3774 = vpack.c.b16 %v3630, %v3626
          %v3775 = vpack.c.b16 %v3631, %v3627
          %v3776 = vpack.c.b16 %v3632, %v3628
          %v3777 = vpack.c.b16 %v3633, %v3629
          %v3778 = vpack.c.b16 %v3638, %v3634
          %v3779 = vpack.c.b16 %v3639, %v3635
          %v3780 = vpack.c.b16 %v3640, %v3636
          %v3781 = vpack.c.b16 %v3641, %v3637
          %v3782 = vpack.c.b16 %v3646, %v3642
          %v3783 = vpack.c.b16 %v3647, %v3643
          %v3784 = vpack.c.b16 %v3648, %v3644
          %v3785 = vpack.c.b16 %v3649, %v3645
          %v3786 = vpack.c.b16 %v3654, %v3650
          %v3787 = vpack.c.b16 %v3655, %v3651
          %v3788 = vpack.c.b16 %v3656, %v3652
          %v3789 = vpack.c.b16 %v3657, %v3653
          %v3790 = vpack.c.b16 %v3662, %v3658
          %v3791 = vpack.c.b16 %v3663, %v3659
          %v3792 = vpack.c.b16 %v3664, %v3660
          %v3793 = vpack.c.b16 %v3665, %v3661
          %3922 = vmatpush.bf16.msra.mxu0 %v3694
          %3923 = vmatpush.bf16.msra.mxu0 %v3690
          %3924 = vmatpush.bf16.msra.mxu0 %v3686
          %3925 = vmatpush.bf16.msra.mxu0 %v3682
          %3926 = vmatpush.bf16.msra.mxu0 %v3678
          %3927 = vmatpush.bf16.msra.mxu0 %v3674
          %3928 = vmatpush.bf16.msra.mxu0 %v3670
          %3929 = vmatpush.bf16.msra.mxu0 %v3666
          %3930 = vmatmul.bf16.gmra.mxu0 %v1930
          %v3931 = vpop.f32.mrf.mxu0
          %v3932 = vadd.f32 %v2980, %v3931
          %v3933 = vpop.f32.mrf.mxu0
          %v3934 = vadd.f32 %v2982, %v3933
          %3935 = vmatmul.bf16.gmra.mxu0 %v1934
          %v3936 = vpop.f32.mrf.mxu0
          %v3937 = vadd.f32 %v2985, %v3936
          %v3938 = vpop.f32.mrf.mxu0
          %v3939 = vadd.f32 %v2987, %v3938
          %3940 = vmatmul.bf16.gmra.mxu0 %v1938
          %v3941 = vpop.f32.mrf.mxu0
          %v3942 = vadd.f32 %v2990, %v3941
          %v3943 = vpop.f32.mrf.mxu0
          %v3944 = vadd.f32 %v2992, %v3943
          %3945 = vdwg.mxu0
          %3946 = vmatpush.bf16.msra.mxu0 %v3726
          %3947 = vmatpush.bf16.msra.mxu0 %v3722
          %3948 = vmatpush.bf16.msra.mxu0 %v3718
          %3949 = vmatpush.bf16.msra.mxu0 %v3714
          %3950 = vmatpush.bf16.msra.mxu0 %v3710
          %3951 = vmatpush.bf16.msra.mxu0 %v3706
          %3952 = vmatpush.bf16.msra.mxu0 %v3702
          %3953 = vmatpush.bf16.msra.mxu0 %v3698
          %3954 = vmatmul.bf16.gmra.mxu0 %v1931
          %v3955 = vpop.f32.mrf.mxu0
          %v3956 = vadd.f32 %v3932, %v3955
          %v3957 = vpop.f32.mrf.mxu0
          %v3958 = vadd.f32 %v3934, %v3957
          %3959 = vmatmul.bf16.gmra.mxu0 %v1935
          %v3960 = vpop.f32.mrf.mxu0
          %v3961 = vadd.f32 %v3937, %v3960
          %v3962 = vpop.f32.mrf.mxu0
          %v3963 = vadd.f32 %v3939, %v3962
          %3964 = vmatmul.bf16.gmra.mxu0 %v1939
          %v3965 = vpop.f32.mrf.mxu0
          %v3966 = vadd.f32 %v3942, %v3965
          %v3967 = vpop.f32.mrf.mxu0
          %v3968 = vadd.f32 %v3944, %v3967
          %3969 = vdwg.mxu0
          %3970 = vmatpush.bf16.msra.mxu0 %v3758
          %3971 = vmatpush.bf16.msra.mxu0 %v3754
          %3972 = vmatpush.bf16.msra.mxu0 %v3750
          %3973 = vmatpush.bf16.msra.mxu0 %v3746
          %3974 = vmatpush.bf16.msra.mxu0 %v3742
          %3975 = vmatpush.bf16.msra.mxu0 %v3738
          %3976 = vmatpush.bf16.msra.mxu0 %v3734
          %3977 = vmatpush.bf16.msra.mxu0 %v3730
          %3978 = vmatmul.bf16.gmra.mxu0 %v1932
          %v3979 = vpop.f32.mrf.mxu0
          %v3980 = vadd.f32 %v3956, %v3979
          %v3981 = vpop.f32.mrf.mxu0
          %v3982 = vadd.f32 %v3958, %v3981
          %3983 = vmatmul.bf16.gmra.mxu0 %v1936
          %v3984 = vpop.f32.mrf.mxu0
          %v3985 = vadd.f32 %v3961, %v3984
          %v3986 = vpop.f32.mrf.mxu0
          %v3987 = vadd.f32 %v3963, %v3986
          %3988 = vmatmul.bf16.gmra.mxu0 %v1940
          %v3989 = vpop.f32.mrf.mxu0
          %v3990 = vadd.f32 %v3966, %v3989
          %v3991 = vpop.f32.mrf.mxu0
          %v3992 = vadd.f32 %v3968, %v3991
          %3993 = vdwg.mxu0
          %3994 = vmatpush.bf16.msra.mxu0 %v3790
          %3995 = vmatpush.bf16.msra.mxu0 %v3786
          %3996 = vmatpush.bf16.msra.mxu0 %v3782
          %3997 = vmatpush.bf16.msra.mxu0 %v3778
          %3998 = vmatpush.bf16.msra.mxu0 %v3774
          %3999 = vmatpush.bf16.msra.mxu0 %v3770
          %4000 = vmatpush.bf16.msra.mxu0 %v3766
          %4001 = vmatpush.bf16.msra.mxu0 %v3762
          %4002 = vmatmul.bf16.gmra.mxu0 %v1933
          %v4003 = vpop.f32.mrf.mxu0
          %v4004 = vadd.f32 %v3980, %v4003
          %v4005 = vpop.f32.mrf.mxu0
          %v4006 = vadd.f32 %v3982, %v4005
          %4007 = vmatmul.bf16.gmra.mxu0 %v1937
          %v4008 = vpop.f32.mrf.mxu0
          %v4009 = vadd.f32 %v3985, %v4008
          %v4010 = vpop.f32.mrf.mxu0
          %v4011 = vadd.f32 %v3987, %v4010
          %4012 = vmatmul.bf16.gmra.mxu0 %v1941
          %v4013 = vpop.f32.mrf.mxu0
          %v4014 = vadd.f32 %v3990, %v4013
          %v4015 = vpop.f32.mrf.mxu0
          %v4016 = vadd.f32 %v3992, %v4015
          %4017 = vdwg.mxu0
          %4018 = vmatpush.bf16.msra.mxu0 %v3695
          %4019 = vmatpush.bf16.msra.mxu0 %v3691
          %4020 = vmatpush.bf16.msra.mxu0 %v3687
          %4021 = vmatpush.bf16.msra.mxu0 %v3683
          %4022 = vmatpush.bf16.msra.mxu0 %v3679
          %4023 = vmatpush.bf16.msra.mxu0 %v3675
          %4024 = vmatpush.bf16.msra.mxu0 %v3671
          %4025 = vmatpush.bf16.msra.mxu0 %v3667
          %4026 = vmatmul.bf16.gmra.mxu0 %v1930
          %v4027 = vpop.f32.mrf.mxu0
          %v4028 = vadd.f32 %v3076, %v4027
          %v4029 = vpop.f32.mrf.mxu0
          %v4030 = vadd.f32 %v3078, %v4029
          %4031 = vmatmul.bf16.gmra.mxu0 %v1934
          %v4032 = vpop.f32.mrf.mxu0
          %v4033 = vadd.f32 %v3081, %v4032
          %v4034 = vpop.f32.mrf.mxu0
          %v4035 = vadd.f32 %v3083, %v4034
          %4036 = vmatmul.bf16.gmra.mxu0 %v1938
          %v4037 = vpop.f32.mrf.mxu0
          %v4038 = vadd.f32 %v3086, %v4037
          %v4039 = vpop.f32.mrf.mxu0
          %v4040 = vadd.f32 %v3088, %v4039
          %4041 = vdwg.mxu0
          %4042 = vmatpush.bf16.msra.mxu0 %v3727
          %4043 = vmatpush.bf16.msra.mxu0 %v3723
          %4044 = vmatpush.bf16.msra.mxu0 %v3719
          %4045 = vmatpush.bf16.msra.mxu0 %v3715
          %4046 = vmatpush.bf16.msra.mxu0 %v3711
          %4047 = vmatpush.bf16.msra.mxu0 %v3707
          %4048 = vmatpush.bf16.msra.mxu0 %v3703
          %4049 = vmatpush.bf16.msra.mxu0 %v3699
          %4050 = vmatmul.bf16.gmra.mxu0 %v1931
          %v4051 = vpop.f32.mrf.mxu0
          %v4052 = vadd.f32 %v4028, %v4051
          %v4053 = vpop.f32.mrf.mxu0
          %v4054 = vadd.f32 %v4030, %v4053
          %4055 = vmatmul.bf16.gmra.mxu0 %v1935
          %v4056 = vpop.f32.mrf.mxu0
          %v4057 = vadd.f32 %v4033, %v4056
          %v4058 = vpop.f32.mrf.mxu0
          %v4059 = vadd.f32 %v4035, %v4058
          %4060 = vmatmul.bf16.gmra.mxu0 %v1939
          %v4061 = vpop.f32.mrf.mxu0
          %v4062 = vadd.f32 %v4038, %v4061
          %v4063 = vpop.f32.mrf.mxu0
          %v4064 = vadd.f32 %v4040, %v4063
          %4065 = vdwg.mxu0
          %4066 = vmatpush.bf16.msra.mxu0 %v3759
          %4067 = vmatpush.bf16.msra.mxu0 %v3755
          %4068 = vmatpush.bf16.msra.mxu0 %v3751
          %4069 = vmatpush.bf16.msra.mxu0 %v3747
          %4070 = vmatpush.bf16.msra.mxu0 %v3743
          %4071 = vmatpush.bf16.msra.mxu0 %v3739
          %4072 = vmatpush.bf16.msra.mxu0 %v3735
          %4073 = vmatpush.bf16.msra.mxu0 %v3731
          %4074 = vmatmul.bf16.gmra.mxu0 %v1932
          %v4075 = vpop.f32.mrf.mxu0
          %v4076 = vadd.f32 %v4052, %v4075
          %v4077 = vpop.f32.mrf.mxu0
          %v4078 = vadd.f32 %v4054, %v4077
          %4079 = vmatmul.bf16.gmra.mxu0 %v1936
          %v4080 = vpop.f32.mrf.mxu0
          %v4081 = vadd.f32 %v4057, %v4080
          %v4082 = vpop.f32.mrf.mxu0
          %v4083 = vadd.f32 %v4059, %v4082
          %4084 = vmatmul.bf16.gmra.mxu0 %v1940
          %v4085 = vpop.f32.mrf.mxu0
          %v4086 = vadd.f32 %v4062, %v4085
          %v4087 = vpop.f32.mrf.mxu0
          %v4088 = vadd.f32 %v4064, %v4087
          %4089 = vdwg.mxu0
          %4090 = vmatpush.bf16.msra.mxu0 %v3791
          %4091 = vmatpush.bf16.msra.mxu0 %v3787
          %4092 = vmatpush.bf16.msra.mxu0 %v3783
          %4093 = vmatpush.bf16.msra.mxu0 %v3779
          %4094 = vmatpush.bf16.msra.mxu0 %v3775
          %4095 = vmatpush.bf16.msra.mxu0 %v3771
          %4096 = vmatpush.bf16.msra.mxu0 %v3767
          %4097 = vmatpush.bf16.msra.mxu0 %v3763
          %4098 = vmatmul.bf16.gmra.mxu0 %v1933
          %v4099 = vpop.f32.mrf.mxu0
          %v4100 = vadd.f32 %v4076, %v4099
          %v4101 = vpop.f32.mrf.mxu0
          %v4102 = vadd.f32 %v4078, %v4101
          %4103 = vmatmul.bf16.gmra.mxu0 %v1937
          %v4104 = vpop.f32.mrf.mxu0
          %v4105 = vadd.f32 %v4081, %v4104
          %v4106 = vpop.f32.mrf.mxu0
          %v4107 = vadd.f32 %v4083, %v4106
          %4108 = vmatmul.bf16.gmra.mxu0 %v1941
          %v4109 = vpop.f32.mrf.mxu0
          %v4110 = vadd.f32 %v4086, %v4109
          %v4111 = vpop.f32.mrf.mxu0
          %v4112 = vadd.f32 %v4088, %v4111
          %4113 = vdwg.mxu0
          %4114 = vmatpush.bf16.msra.mxu0 %v3696
          %4115 = vmatpush.bf16.msra.mxu0 %v3692
          %4116 = vmatpush.bf16.msra.mxu0 %v3688
          %4117 = vmatpush.bf16.msra.mxu0 %v3684
          %4118 = vmatpush.bf16.msra.mxu0 %v3680
          %4119 = vmatpush.bf16.msra.mxu0 %v3676
          %4120 = vmatpush.bf16.msra.mxu0 %v3672
          %4121 = vmatpush.bf16.msra.mxu0 %v3668
          %4122 = vmatmul.bf16.gmra.mxu0 %v1930
          %v4123 = vpop.f32.mrf.mxu0
          %v4124 = vadd.f32 %v3172, %v4123
          %v4125 = vpop.f32.mrf.mxu0
          %v4126 = vadd.f32 %v3174, %v4125
          %4127 = vmatmul.bf16.gmra.mxu0 %v1934
          %v4128 = vpop.f32.mrf.mxu0
          %v4129 = vadd.f32 %v3177, %v4128
          %v4130 = vpop.f32.mrf.mxu0
          %v4131 = vadd.f32 %v3179, %v4130
          %4132 = vmatmul.bf16.gmra.mxu0 %v1938
          %v4133 = vpop.f32.mrf.mxu0
          %v4134 = vadd.f32 %v3182, %v4133
          %v4135 = vpop.f32.mrf.mxu0
          %v4136 = vadd.f32 %v3184, %v4135
          %4137 = vdwg.mxu0
          %4138 = vmatpush.bf16.msra.mxu0 %v3728
          %4139 = vmatpush.bf16.msra.mxu0 %v3724
          %4140 = vmatpush.bf16.msra.mxu0 %v3720
          %4141 = vmatpush.bf16.msra.mxu0 %v3716
          %4142 = vmatpush.bf16.msra.mxu0 %v3712
          %4143 = vmatpush.bf16.msra.mxu0 %v3708
          %4144 = vmatpush.bf16.msra.mxu0 %v3704
          %4145 = vmatpush.bf16.msra.mxu0 %v3700
          %4146 = vmatmul.bf16.gmra.mxu0 %v1931
          %v4147 = vpop.f32.mrf.mxu0
          %v4148 = vadd.f32 %v4124, %v4147
          %v4149 = vpop.f32.mrf.mxu0
          %v4150 = vadd.f32 %v4126, %v4149
          %4151 = vmatmul.bf16.gmra.mxu0 %v1935
          %v4152 = vpop.f32.mrf.mxu0
          %v4153 = vadd.f32 %v4129, %v4152
          %v4154 = vpop.f32.mrf.mxu0
          %v4155 = vadd.f32 %v4131, %v4154
          %4156 = vmatmul.bf16.gmra.mxu0 %v1939
          %v4157 = vpop.f32.mrf.mxu0
          %v4158 = vadd.f32 %v4134, %v4157
          %v4159 = vpop.f32.mrf.mxu0
          %v4160 = vadd.f32 %v4136, %v4159
          %4161 = vdwg.mxu0
          %4162 = vmatpush.bf16.msra.mxu0 %v3760
          %4163 = vmatpush.bf16.msra.mxu0 %v3756
          %4164 = vmatpush.bf16.msra.mxu0 %v3752
          %4165 = vmatpush.bf16.msra.mxu0 %v3748
          %4166 = vmatpush.bf16.msra.mxu0 %v3744
          %4167 = vmatpush.bf16.msra.mxu0 %v3740
          %4168 = vmatpush.bf16.msra.mxu0 %v3736
          %4169 = vmatpush.bf16.msra.mxu0 %v3732
          %4170 = vmatmul.bf16.gmra.mxu0 %v1932
          %v4171 = vpop.f32.mrf.mxu0
          %v4172 = vadd.f32 %v4148, %v4171
          %v4173 = vpop.f32.mrf.mxu0
          %v4174 = vadd.f32 %v4150, %v4173
          %4175 = vmatmul.bf16.gmra.mxu0 %v1936
          %v4176 = vpop.f32.mrf.mxu0
          %v4177 = vadd.f32 %v4153, %v4176
          %v4178 = vpop.f32.mrf.mxu0
          %v4179 = vadd.f32 %v4155, %v4178
          %4180 = vmatmul.bf16.gmra.mxu0 %v1940
          %v4181 = vpop.f32.mrf.mxu0
          %v4182 = vadd.f32 %v4158, %v4181
          %v4183 = vpop.f32.mrf.mxu0
          %v4184 = vadd.f32 %v4160, %v4183
          %4185 = vdwg.mxu0
          %4186 = vmatpush.bf16.msra.mxu0 %v3792
          %4187 = vmatpush.bf16.msra.mxu0 %v3788
          %4188 = vmatpush.bf16.msra.mxu0 %v3784
          %4189 = vmatpush.bf16.msra.mxu0 %v3780
          %4190 = vmatpush.bf16.msra.mxu0 %v3776
          %4191 = vmatpush.bf16.msra.mxu0 %v3772
          %4192 = vmatpush.bf16.msra.mxu0 %v3768
          %4193 = vmatpush.bf16.msra.mxu0 %v3764
          %4194 = vmatmul.bf16.gmra.mxu0 %v1933
          %v4195 = vpop.f32.mrf.mxu0
          %v4196 = vadd.f32 %v4172, %v4195
          %v4197 = vpop.f32.mrf.mxu0
          %v4198 = vadd.f32 %v4174, %v4197
          %4199 = vmatmul.bf16.gmra.mxu0 %v1937
          %v4200 = vpop.f32.mrf.mxu0
          %v4201 = vadd.f32 %v4177, %v4200
          %v4202 = vpop.f32.mrf.mxu0
          %v4203 = vadd.f32 %v4179, %v4202
          %4204 = vmatmul.bf16.gmra.mxu0 %v1941
          %v4205 = vpop.f32.mrf.mxu0
          %v4206 = vadd.f32 %v4182, %v4205
          %v4207 = vpop.f32.mrf.mxu0
          %v4208 = vadd.f32 %v4184, %v4207
          %4209 = vdwg.mxu0
          %4210 = vmatpush.bf16.msra.mxu0 %v3697
          %4211 = vmatpush.bf16.msra.mxu0 %v3693
          %4212 = vmatpush.bf16.msra.mxu0 %v3689
          %4213 = vmatpush.bf16.msra.mxu0 %v3685
          %4214 = vmatpush.bf16.msra.mxu0 %v3681
          %4215 = vmatpush.bf16.msra.mxu0 %v3677
          %4216 = vmatpush.bf16.msra.mxu0 %v3673
          %4217 = vmatpush.bf16.msra.mxu0 %v3669
          %4218 = vmatmul.bf16.gmra.mxu0 %v1930
          %v4219 = vpop.f32.mrf.mxu0
          %v4220 = vadd.f32 %v3268, %v4219
          %v4221 = vpop.f32.mrf.mxu0
          %v4222 = vadd.f32 %v3270, %v4221
          %4223 = vmatmul.bf16.gmra.mxu0 %v1934
          %v4224 = vpop.f32.mrf.mxu0
          %v4225 = vadd.f32 %v3273, %v4224
          %v4226 = vpop.f32.mrf.mxu0
          %v4227 = vadd.f32 %v3275, %v4226
          %4228 = vmatmul.bf16.gmra.mxu0 %v1938
          %v4229 = vpop.f32.mrf.mxu0
          %v4230 = vadd.f32 %v3278, %v4229
          %v4231 = vpop.f32.mrf.mxu0
          %v4232 = vadd.f32 %v3280, %v4231
          %4233 = vdwg.mxu0
          %4234 = vmatpush.bf16.msra.mxu0 %v3729
          %4235 = vmatpush.bf16.msra.mxu0 %v3725
          %4236 = vmatpush.bf16.msra.mxu0 %v3721
          %4237 = vmatpush.bf16.msra.mxu0 %v3717
          %4238 = vmatpush.bf16.msra.mxu0 %v3713
          %4239 = vmatpush.bf16.msra.mxu0 %v3709
          %4240 = vmatpush.bf16.msra.mxu0 %v3705
          %4241 = vmatpush.bf16.msra.mxu0 %v3701
          %4242 = vmatmul.bf16.gmra.mxu0 %v1931
          %v4243 = vpop.f32.mrf.mxu0
          %v4244 = vadd.f32 %v4220, %v4243
          %v4245 = vpop.f32.mrf.mxu0
          %v4246 = vadd.f32 %v4222, %v4245
          %4247 = vmatmul.bf16.gmra.mxu0 %v1935
          %v4248 = vpop.f32.mrf.mxu0
          %v4249 = vadd.f32 %v4225, %v4248
          %v4250 = vpop.f32.mrf.mxu0
          %v4251 = vadd.f32 %v4227, %v4250
          %4252 = vmatmul.bf16.gmra.mxu0 %v1939
          %v4253 = vpop.f32.mrf.mxu0
          %v4254 = vadd.f32 %v4230, %v4253
          %v4255 = vpop.f32.mrf.mxu0
          %v4256 = vadd.f32 %v4232, %v4255
          %4257 = vdwg.mxu0
          %4258 = vmatpush.bf16.msra.mxu0 %v3761
          %4259 = vmatpush.bf16.msra.mxu0 %v3757
          %4260 = vmatpush.bf16.msra.mxu0 %v3753
          %4261 = vmatpush.bf16.msra.mxu0 %v3749
          %4262 = vmatpush.bf16.msra.mxu0 %v3745
          %4263 = vmatpush.bf16.msra.mxu0 %v3741
          %4264 = vmatpush.bf16.msra.mxu0 %v3737
          %4265 = vmatpush.bf16.msra.mxu0 %v3733
          %4266 = vmatmul.bf16.gmra.mxu0 %v1932
          %v4267 = vpop.f32.mrf.mxu0
          %v4268 = vadd.f32 %v4244, %v4267
          %v4269 = vpop.f32.mrf.mxu0
          %v4270 = vadd.f32 %v4246, %v4269
          %4271 = vmatmul.bf16.gmra.mxu0 %v1936
          %v4272 = vpop.f32.mrf.mxu0
          %v4273 = vadd.f32 %v4249, %v4272
          %v4274 = vpop.f32.mrf.mxu0
          %v4275 = vadd.f32 %v4251, %v4274
          %4276 = vmatmul.bf16.gmra.mxu0 %v1940
          %v4277 = vpop.f32.mrf.mxu0
          %v4278 = vadd.f32 %v4254, %v4277
          %v4279 = vpop.f32.mrf.mxu0
          %v4280 = vadd.f32 %v4256, %v4279
          %4281 = vdwg.mxu0
          %4282 = vmatpush.bf16.msra.mxu0 %v3793
          %4283 = vmatpush.bf16.msra.mxu0 %v3789
          %4284 = vmatpush.bf16.msra.mxu0 %v3785
          %4285 = vmatpush.bf16.msra.mxu0 %v3781
          %4286 = vmatpush.bf16.msra.mxu0 %v3777
          %4287 = vmatpush.bf16.msra.mxu0 %v3773
          %4288 = vmatpush.bf16.msra.mxu0 %v3769
          %4289 = vmatpush.bf16.msra.mxu0 %v3765
          %4290 = vmatmul.bf16.gmra.mxu0 %v1933
          %v4291 = vpop.f32.mrf.mxu0
          %v4292 = vadd.f32 %v4268, %v4291
          %v4293 = vpop.f32.mrf.mxu0
          %v4294 = vadd.f32 %v4270, %v4293
          %4295 = vmatmul.bf16.gmra.mxu0 %v1937
          %v4296 = vpop.f32.mrf.mxu0
          %v4297 = vadd.f32 %v4273, %v4296
          %v4298 = vpop.f32.mrf.mxu0
          %v4299 = vadd.f32 %v4275, %v4298
          %4300 = vmatmul.bf16.gmra.mxu0 %v1941
          %v4301 = vpop.f32.mrf.mxu0
          %v4302 = vadd.f32 %v4278, %v4301
          %v4303 = vpop.f32.mrf.mxu0
          %v4304 = vadd.f32 %v4280, %v4303
          %4305 = vdwg.mxu0
          %v4306 = vld [vmem:[#allocation2 + $0x40] sm:$0xff]
          %v4307 = vld [vmem:[#allocation2 + $0x48] sm:$0xff]
          %v4308 = vld [vmem:[#allocation2 + $0x50] sm:$0xff]
          %v4309 = vld [vmem:[#allocation2 + $0x58] sm:$0xff]
          %v4310 = vld [vmem:[#allocation2 + $0xc0] sm:$0xff]
          %v4311 = vld [vmem:[#allocation2 + $0xc8] sm:$0xff]
          %v4312 = vld [vmem:[#allocation2 + $0xd0] sm:$0xff]
          %v4313 = vld [vmem:[#allocation2 + $0xd8] sm:$0xff]
          %v4314 = vld [vmem:[#allocation2 + $0x140] sm:$0xff]
          %v4315 = vld [vmem:[#allocation2 + $0x148] sm:$0xff]
          %v4316 = vld [vmem:[#allocation2 + $0x150] sm:$0xff]
          %v4317 = vld [vmem:[#allocation2 + $0x158] sm:$0xff]
          %v4318 = vld [vmem:[#allocation2 + $0x1c0] sm:$0xff]
          %v4319 = vld [vmem:[#allocation2 + $0x1c8] sm:$0xff]
          %v4320 = vld [vmem:[#allocation2 + $0x1d0] sm:$0xff]
          %v4321 = vld [vmem:[#allocation2 + $0x1d8] sm:$0xff]
          %v4322 = vld [vmem:[#allocation2 + $0x240] sm:$0xff]
          %v4323 = vld [vmem:[#allocation2 + $0x248] sm:$0xff]
          %v4324 = vld [vmem:[#allocation2 + $0x250] sm:$0xff]
          %v4325 = vld [vmem:[#allocation2 + $0x258] sm:$0xff]
          %v4326 = vld [vmem:[#allocation2 + $0x2c0] sm:$0xff]
          %v4327 = vld [vmem:[#allocation2 + $0x2c8] sm:$0xff]
          %v4328 = vld [vmem:[#allocation2 + $0x2d0] sm:$0xff]
          %v4329 = vld [vmem:[#allocation2 + $0x2d8] sm:$0xff]
          %v4330 = vmax.f32 %v4306, 0.0
          %v4331 = vmax.f32 %v4307, 0.0
          %v4332 = vmax.f32 %v4308, 0.0
          %v4333 = vmax.f32 %v4309, 0.0
          %v4334 = vmax.f32 %v4310, 0.0
          %v4335 = vmax.f32 %v4311, 0.0
          %v4336 = vmax.f32 %v4312, 0.0
          %v4337 = vmax.f32 %v4313, 0.0
          %v4338 = vmax.f32 %v4314, 0.0
          %v4339 = vmax.f32 %v4315, 0.0
          %v4340 = vmax.f32 %v4316, 0.0
          %v4341 = vmax.f32 %v4317, 0.0
          %v4342 = vmax.f32 %v4318, 0.0
          %v4343 = vmax.f32 %v4319, 0.0
          %v4344 = vmax.f32 %v4320, 0.0
          %v4345 = vmax.f32 %v4321, 0.0
          %v4346 = vmax.f32 %v4322, 0.0
          %v4347 = vmax.f32 %v4323, 0.0
          %v4348 = vmax.f32 %v4324, 0.0
          %v4349 = vmax.f32 %v4325, 0.0
          %v4350 = vmax.f32 %v4326, 0.0
          %v4351 = vmax.f32 %v4327, 0.0
          %v4352 = vmax.f32 %v4328, 0.0
          %v4353 = vmax.f32 %v4329, 0.0
          %v4354 = vpack.c.bf16 %v4334, %v4330
          %v4355 = vpack.c.bf16 %v4335, %v4331
          %v4356 = vpack.c.bf16 %v4336, %v4332
          %v4357 = vpack.c.bf16 %v4337, %v4333
          %v4358 = vpack.c.bf16 %v4342, %v4338
          %v4359 = vpack.c.bf16 %v4343, %v4339
          %v4360 = vpack.c.bf16 %v4344, %v4340
          %v4361 = vpack.c.bf16 %v4345, %v4341
          %v4362 = vpack.c.bf16 %v4350, %v4346
          %v4363 = vpack.c.bf16 %v4351, %v4347
          %v4364 = vpack.c.bf16 %v4352, %v4348
          %v4365 = vpack.c.bf16 %v4353, %v4349
          %v4366 = vld [vmem:[#allocation7 + $0x800] sm:$0xff]
          %v4367 = vld [vmem:[#allocation7 + $0x808] sm:$0xff]
          %v4368 = vld [vmem:[#allocation7 + $0x810] sm:$0xff]
          %v4369 = vld [vmem:[#allocation7 + $0x818] sm:$0xff]
          %v4370 = vld [vmem:[#allocation7 + $0x820] sm:$0xff]
          %v4371 = vld [vmem:[#allocation7 + $0x828] sm:$0xff]
          %v4372 = vld [vmem:[#allocation7 + $0x830] sm:$0xff]
          %v4373 = vld [vmem:[#allocation7 + $0x838] sm:$0xff]
          %v4374 = vld [vmem:[#allocation7 + $0x840] sm:$0xff]
          %v4375 = vld [vmem:[#allocation7 + $0x848] sm:$0xff]
          %v4376 = vld [vmem:[#allocation7 + $0x850] sm:$0xff]
          %v4377 = vld [vmem:[#allocation7 + $0x858] sm:$0xff]
          %v4378 = vld [vmem:[#allocation7 + $0x860] sm:$0xff]
          %v4379 = vld [vmem:[#allocation7 + $0x868] sm:$0xff]
          %v4380 = vld [vmem:[#allocation7 + $0x870] sm:$0xff]
          %v4381 = vld [vmem:[#allocation7 + $0x878] sm:$0xff]
          %v4382 = vld [vmem:[#allocation7 + $0x880] sm:$0xff]
          %v4383 = vld [vmem:[#allocation7 + $0x888] sm:$0xff]
          %v4384 = vld [vmem:[#allocation7 + $0x890] sm:$0xff]
          %v4385 = vld [vmem:[#allocation7 + $0x898] sm:$0xff]
          %v4386 = vld [vmem:[#allocation7 + $0x8a0] sm:$0xff]
          %v4387 = vld [vmem:[#allocation7 + $0x8a8] sm:$0xff]
          %v4388 = vld [vmem:[#allocation7 + $0x8b0] sm:$0xff]
          %v4389 = vld [vmem:[#allocation7 + $0x8b8] sm:$0xff]
          %v4390 = vld [vmem:[#allocation7 + $0x8c0] sm:$0xff]
          %v4391 = vld [vmem:[#allocation7 + $0x8c8] sm:$0xff]
          %v4392 = vld [vmem:[#allocation7 + $0x8d0] sm:$0xff]
          %v4393 = vld [vmem:[#allocation7 + $0x8d8] sm:$0xff]
          %v4394 = vld [vmem:[#allocation7 + $0x8e0] sm:$0xff]
          %v4395 = vld [vmem:[#allocation7 + $0x8e8] sm:$0xff]
          %v4396 = vld [vmem:[#allocation7 + $0x8f0] sm:$0xff]
          %v4397 = vld [vmem:[#allocation7 + $0x8f8] sm:$0xff]
          %v4398 = vld [vmem:[#allocation7 + $0x900] sm:$0xff]
          %v4399 = vld [vmem:[#allocation7 + $0x908] sm:$0xff]
          %v4400 = vld [vmem:[#allocation7 + $0x910] sm:$0xff]
          %v4401 = vld [vmem:[#allocation7 + $0x918] sm:$0xff]
          %v4402 = vld [vmem:[#allocation7 + $0x920] sm:$0xff]
          %v4403 = vld [vmem:[#allocation7 + $0x928] sm:$0xff]
          %v4404 = vld [vmem:[#allocation7 + $0x930] sm:$0xff]
          %v4405 = vld [vmem:[#allocation7 + $0x938] sm:$0xff]
          %v4406 = vld [vmem:[#allocation7 + $0x940] sm:$0xff]
          %v4407 = vld [vmem:[#allocation7 + $0x948] sm:$0xff]
          %v4408 = vld [vmem:[#allocation7 + $0x950] sm:$0xff]
          %v4409 = vld [vmem:[#allocation7 + $0x958] sm:$0xff]
          %v4410 = vld [vmem:[#allocation7 + $0x960] sm:$0xff]
          %v4411 = vld [vmem:[#allocation7 + $0x968] sm:$0xff]
          %v4412 = vld [vmem:[#allocation7 + $0x970] sm:$0xff]
          %v4413 = vld [vmem:[#allocation7 + $0x978] sm:$0xff]
          %v4414 = vld [vmem:[#allocation7 + $0x980] sm:$0xff]
          %v4415 = vld [vmem:[#allocation7 + $0x988] sm:$0xff]
          %v4416 = vld [vmem:[#allocation7 + $0x990] sm:$0xff]
          %v4417 = vld [vmem:[#allocation7 + $0x998] sm:$0xff]
          %v4418 = vld [vmem:[#allocation7 + $0x9a0] sm:$0xff]
          %v4419 = vld [vmem:[#allocation7 + $0x9a8] sm:$0xff]
          %v4420 = vld [vmem:[#allocation7 + $0x9b0] sm:$0xff]
          %v4421 = vld [vmem:[#allocation7 + $0x9b8] sm:$0xff]
          %v4422 = vld [vmem:[#allocation7 + $0x9c0] sm:$0xff]
          %v4423 = vld [vmem:[#allocation7 + $0x9c8] sm:$0xff]
          %v4424 = vld [vmem:[#allocation7 + $0x9d0] sm:$0xff]
          %v4425 = vld [vmem:[#allocation7 + $0x9d8] sm:$0xff]
          %v4426 = vld [vmem:[#allocation7 + $0x9e0] sm:$0xff]
          %v4427 = vld [vmem:[#allocation7 + $0x9e8] sm:$0xff]
          %v4428 = vld [vmem:[#allocation7 + $0x9f0] sm:$0xff]
          %v4429 = vld [vmem:[#allocation7 + $0x9f8] sm:$0xff]
          %v4430 = vld [vmem:[#allocation7 + $0xa00] sm:$0xff]
          %v4431 = vld [vmem:[#allocation7 + $0xa08] sm:$0xff]
          %v4432 = vld [vmem:[#allocation7 + $0xa10] sm:$0xff]
          %v4433 = vld [vmem:[#allocation7 + $0xa18] sm:$0xff]
          %v4434 = vld [vmem:[#allocation7 + $0xa20] sm:$0xff]
          %v4435 = vld [vmem:[#allocation7 + $0xa28] sm:$0xff]
          %v4436 = vld [vmem:[#allocation7 + $0xa30] sm:$0xff]
          %v4437 = vld [vmem:[#allocation7 + $0xa38] sm:$0xff]
          %v4438 = vld [vmem:[#allocation7 + $0xa40] sm:$0xff]
          %v4439 = vld [vmem:[#allocation7 + $0xa48] sm:$0xff]
          %v4440 = vld [vmem:[#allocation7 + $0xa50] sm:$0xff]
          %v4441 = vld [vmem:[#allocation7 + $0xa58] sm:$0xff]
          %v4442 = vld [vmem:[#allocation7 + $0xa60] sm:$0xff]
          %v4443 = vld [vmem:[#allocation7 + $0xa68] sm:$0xff]
          %v4444 = vld [vmem:[#allocation7 + $0xa70] sm:$0xff]
          %v4445 = vld [vmem:[#allocation7 + $0xa78] sm:$0xff]
          %v4446 = vld [vmem:[#allocation7 + $0xa80] sm:$0xff]
          %v4447 = vld [vmem:[#allocation7 + $0xa88] sm:$0xff]
          %v4448 = vld [vmem:[#allocation7 + $0xa90] sm:$0xff]
          %v4449 = vld [vmem:[#allocation7 + $0xa98] sm:$0xff]
          %v4450 = vld [vmem:[#allocation7 + $0xaa0] sm:$0xff]
          %v4451 = vld [vmem:[#allocation7 + $0xaa8] sm:$0xff]
          %v4452 = vld [vmem:[#allocation7 + $0xab0] sm:$0xff]
          %v4453 = vld [vmem:[#allocation7 + $0xab8] sm:$0xff]
          %v4454 = vld [vmem:[#allocation7 + $0xac0] sm:$0xff]
          %v4455 = vld [vmem:[#allocation7 + $0xac8] sm:$0xff]
          %v4456 = vld [vmem:[#allocation7 + $0xad0] sm:$0xff]
          %v4457 = vld [vmem:[#allocation7 + $0xad8] sm:$0xff]
          %v4458 = vld [vmem:[#allocation7 + $0xae0] sm:$0xff]
          %v4459 = vld [vmem:[#allocation7 + $0xae8] sm:$0xff]
          %v4460 = vld [vmem:[#allocation7 + $0xaf0] sm:$0xff]
          %v4461 = vld [vmem:[#allocation7 + $0xaf8] sm:$0xff]
          %v4462 = vld [vmem:[#allocation7 + $0xb00] sm:$0xff]
          %v4463 = vld [vmem:[#allocation7 + $0xb08] sm:$0xff]
          %v4464 = vld [vmem:[#allocation7 + $0xb10] sm:$0xff]
          %v4465 = vld [vmem:[#allocation7 + $0xb18] sm:$0xff]
          %v4466 = vld [vmem:[#allocation7 + $0xb20] sm:$0xff]
          %v4467 = vld [vmem:[#allocation7 + $0xb28] sm:$0xff]
          %v4468 = vld [vmem:[#allocation7 + $0xb30] sm:$0xff]
          %v4469 = vld [vmem:[#allocation7 + $0xb38] sm:$0xff]
          %v4470 = vld [vmem:[#allocation7 + $0xb40] sm:$0xff]
          %v4471 = vld [vmem:[#allocation7 + $0xb48] sm:$0xff]
          %v4472 = vld [vmem:[#allocation7 + $0xb50] sm:$0xff]
          %v4473 = vld [vmem:[#allocation7 + $0xb58] sm:$0xff]
          %v4474 = vld [vmem:[#allocation7 + $0xb60] sm:$0xff]
          %v4475 = vld [vmem:[#allocation7 + $0xb68] sm:$0xff]
          %v4476 = vld [vmem:[#allocation7 + $0xb70] sm:$0xff]
          %v4477 = vld [vmem:[#allocation7 + $0xb78] sm:$0xff]
          %v4478 = vld [vmem:[#allocation7 + $0xb80] sm:$0xff]
          %v4479 = vld [vmem:[#allocation7 + $0xb88] sm:$0xff]
          %v4480 = vld [vmem:[#allocation7 + $0xb90] sm:$0xff]
          %v4481 = vld [vmem:[#allocation7 + $0xb98] sm:$0xff]
          %v4482 = vld [vmem:[#allocation7 + $0xba0] sm:$0xff]
          %v4483 = vld [vmem:[#allocation7 + $0xba8] sm:$0xff]
          %v4484 = vld [vmem:[#allocation7 + $0xbb0] sm:$0xff]
          %v4485 = vld [vmem:[#allocation7 + $0xbb8] sm:$0xff]
          %v4486 = vld [vmem:[#allocation7 + $0xbc0] sm:$0xff]
          %v4487 = vld [vmem:[#allocation7 + $0xbc8] sm:$0xff]
          %v4488 = vld [vmem:[#allocation7 + $0xbd0] sm:$0xff]
          %v4489 = vld [vmem:[#allocation7 + $0xbd8] sm:$0xff]
          %v4490 = vld [vmem:[#allocation7 + $0xbe0] sm:$0xff]
          %v4491 = vld [vmem:[#allocation7 + $0xbe8] sm:$0xff]
          %v4492 = vld [vmem:[#allocation7 + $0xbf0] sm:$0xff]
          %v4493 = vld [vmem:[#allocation7 + $0xbf8] sm:$0xff]
          %v4622 = vunpack.c.l.b16 %v4366
          %v4623 = vunpack.c.h.b16 %v4366
          %v4624 = vunpack.c.l.b16 %v4367
          %v4625 = vunpack.c.h.b16 %v4367
          %v4626 = vunpack.c.l.b16 %v4368
          %v4627 = vunpack.c.h.b16 %v4368
          %v4628 = vunpack.c.l.b16 %v4369
          %v4629 = vunpack.c.h.b16 %v4369
          %v4630 = vunpack.c.l.b16 %v4370
          %v4631 = vunpack.c.h.b16 %v4370
          %v4632 = vunpack.c.l.b16 %v4371
          %v4633 = vunpack.c.h.b16 %v4371
          %v4634 = vunpack.c.l.b16 %v4372
          %v4635 = vunpack.c.h.b16 %v4372
          %v4636 = vunpack.c.l.b16 %v4373
          %v4637 = vunpack.c.h.b16 %v4373
          %v4638 = vunpack.c.l.b16 %v4374
          %v4639 = vunpack.c.h.b16 %v4374
          %v4640 = vunpack.c.l.b16 %v4375
          %v4641 = vunpack.c.h.b16 %v4375
          %v4642 = vunpack.c.l.b16 %v4376
          %v4643 = vunpack.c.h.b16 %v4376
          %v4644 = vunpack.c.l.b16 %v4377
          %v4645 = vunpack.c.h.b16 %v4377
          %v4646 = vunpack.c.l.b16 %v4378
          %v4647 = vunpack.c.h.b16 %v4378
          %v4648 = vunpack.c.l.b16 %v4379
          %v4649 = vunpack.c.h.b16 %v4379
          %v4650 = vunpack.c.l.b16 %v4380
          %v4651 = vunpack.c.h.b16 %v4380
          %v4652 = vunpack.c.l.b16 %v4381
          %v4653 = vunpack.c.h.b16 %v4381
          %v4654 = vunpack.c.l.b16 %v4382
          %v4655 = vunpack.c.h.b16 %v4382
          %v4656 = vunpack.c.l.b16 %v4383
          %v4657 = vunpack.c.h.b16 %v4383
          %v4658 = vunpack.c.l.b16 %v4384
          %v4659 = vunpack.c.h.b16 %v4384
          %v4660 = vunpack.c.l.b16 %v4385
          %v4661 = vunpack.c.h.b16 %v4385
          %v4662 = vunpack.c.l.b16 %v4386
          %v4663 = vunpack.c.h.b16 %v4386
          %v4664 = vunpack.c.l.b16 %v4387
          %v4665 = vunpack.c.h.b16 %v4387
          %v4666 = vunpack.c.l.b16 %v4388
          %v4667 = vunpack.c.h.b16 %v4388
          %v4668 = vunpack.c.l.b16 %v4389
          %v4669 = vunpack.c.h.b16 %v4389
          %v4670 = vunpack.c.l.b16 %v4390
          %v4671 = vunpack.c.h.b16 %v4390
          %v4672 = vunpack.c.l.b16 %v4391
          %v4673 = vunpack.c.h.b16 %v4391
          %v4674 = vunpack.c.l.b16 %v4392
          %v4675 = vunpack.c.h.b16 %v4392
          %v4676 = vunpack.c.l.b16 %v4393
          %v4677 = vunpack.c.h.b16 %v4393
          %v4678 = vunpack.c.l.b16 %v4394
          %v4679 = vunpack.c.h.b16 %v4394
          %v4680 = vunpack.c.l.b16 %v4395
          %v4681 = vunpack.c.h.b16 %v4395
          %v4682 = vunpack.c.l.b16 %v4396
          %v4683 = vunpack.c.h.b16 %v4396
          %v4684 = vunpack.c.l.b16 %v4397
          %v4685 = vunpack.c.h.b16 %v4397
          %v4686 = vunpack.c.l.b16 %v4398
          %v4687 = vunpack.c.h.b16 %v4398
          %v4688 = vunpack.c.l.b16 %v4399
          %v4689 = vunpack.c.h.b16 %v4399
          %v4690 = vunpack.c.l.b16 %v4400
          %v4691 = vunpack.c.h.b16 %v4400
          %v4692 = vunpack.c.l.b16 %v4401
          %v4693 = vunpack.c.h.b16 %v4401
          %v4694 = vunpack.c.l.b16 %v4402
          %v4695 = vunpack.c.h.b16 %v4402
          %v4696 = vunpack.c.l.b16 %v4403
          %v4697 = vunpack.c.h.b16 %v4403
          %v4698 = vunpack.c.l.b16 %v4404
          %v4699 = vunpack.c.h.b16 %v4404
          %v4700 = vunpack.c.l.b16 %v4405
          %v4701 = vunpack.c.h.b16 %v4405
          %v4702 = vunpack.c.l.b16 %v4406
          %v4703 = vunpack.c.h.b16 %v4406
          %v4704 = vunpack.c.l.b16 %v4407
          %v4705 = vunpack.c.h.b16 %v4407
          %v4706 = vunpack.c.l.b16 %v4408
          %v4707 = vunpack.c.h.b16 %v4408
          %v4708 = vunpack.c.l.b16 %v4409
          %v4709 = vunpack.c.h.b16 %v4409
          %v4710 = vunpack.c.l.b16 %v4410
          %v4711 = vunpack.c.h.b16 %v4410
          %v4712 = vunpack.c.l.b16 %v4411
          %v4713 = vunpack.c.h.b16 %v4411
          %v4714 = vunpack.c.l.b16 %v4412
          %v4715 = vunpack.c.h.b16 %v4412
          %v4716 = vunpack.c.l.b16 %v4413
          %v4717 = vunpack.c.h.b16 %v4413
          %v4718 = vunpack.c.l.b16 %v4414
          %v4719 = vunpack.c.h.b16 %v4414
          %v4720 = vunpack.c.l.b16 %v4415
          %v4721 = vunpack.c.h.b16 %v4415
          %v4722 = vunpack.c.l.b16 %v4416
          %v4723 = vunpack.c.h.b16 %v4416
          %v4724 = vunpack.c.l.b16 %v4417
          %v4725 = vunpack.c.h.b16 %v4417
          %v4726 = vunpack.c.l.b16 %v4418
          %v4727 = vunpack.c.h.b16 %v4418
          %v4728 = vunpack.c.l.b16 %v4419
          %v4729 = vunpack.c.h.b16 %v4419
          %v4730 = vunpack.c.l.b16 %v4420
          %v4731 = vunpack.c.h.b16 %v4420
          %v4732 = vunpack.c.l.b16 %v4421
          %v4733 = vunpack.c.h.b16 %v4421
          %v4734 = vunpack.c.l.b16 %v4422
          %v4735 = vunpack.c.h.b16 %v4422
          %v4736 = vunpack.c.l.b16 %v4423
          %v4737 = vunpack.c.h.b16 %v4423
          %v4738 = vunpack.c.l.b16 %v4424
          %v4739 = vunpack.c.h.b16 %v4424
          %v4740 = vunpack.c.l.b16 %v4425
          %v4741 = vunpack.c.h.b16 %v4425
          %v4742 = vunpack.c.l.b16 %v4426
          %v4743 = vunpack.c.h.b16 %v4426
          %v4744 = vunpack.c.l.b16 %v4427
          %v4745 = vunpack.c.h.b16 %v4427
          %v4746 = vunpack.c.l.b16 %v4428
          %v4747 = vunpack.c.h.b16 %v4428
          %v4748 = vunpack.c.l.b16 %v4429
          %v4749 = vunpack.c.h.b16 %v4429
          %v4750 = vunpack.c.l.b16 %v4430
          %v4751 = vunpack.c.h.b16 %v4430
          %v4752 = vunpack.c.l.b16 %v4431
          %v4753 = vunpack.c.h.b16 %v4431
          %v4754 = vunpack.c.l.b16 %v4432
          %v4755 = vunpack.c.h.b16 %v4432
          %v4756 = vunpack.c.l.b16 %v4433
          %v4757 = vunpack.c.h.b16 %v4433
          %v4758 = vunpack.c.l.b16 %v4434
          %v4759 = vunpack.c.h.b16 %v4434
          %v4760 = vunpack.c.l.b16 %v4435
          %v4761 = vunpack.c.h.b16 %v4435
          %v4762 = vunpack.c.l.b16 %v4436
          %v4763 = vunpack.c.h.b16 %v4436
          %v4764 = vunpack.c.l.b16 %v4437
          %v4765 = vunpack.c.h.b16 %v4437
          %v4766 = vunpack.c.l.b16 %v4438
          %v4767 = vunpack.c.h.b16 %v4438
          %v4768 = vunpack.c.l.b16 %v4439
          %v4769 = vunpack.c.h.b16 %v4439
          %v4770 = vunpack.c.l.b16 %v4440
          %v4771 = vunpack.c.h.b16 %v4440
          %v4772 = vunpack.c.l.b16 %v4441
          %v4773 = vunpack.c.h.b16 %v4441
          %v4774 = vunpack.c.l.b16 %v4442
          %v4775 = vunpack.c.h.b16 %v4442
          %v4776 = vunpack.c.l.b16 %v4443
          %v4777 = vunpack.c.h.b16 %v4443
          %v4778 = vunpack.c.l.b16 %v4444
          %v4779 = vunpack.c.h.b16 %v4444
          %v4780 = vunpack.c.l.b16 %v4445
          %v4781 = vunpack.c.h.b16 %v4445
          %v4782 = vunpack.c.l.b16 %v4446
          %v4783 = vunpack.c.h.b16 %v4446
          %v4784 = vunpack.c.l.b16 %v4447
          %v4785 = vunpack.c.h.b16 %v4447
          %v4786 = vunpack.c.l.b16 %v4448
          %v4787 = vunpack.c.h.b16 %v4448
          %v4788 = vunpack.c.l.b16 %v4449
          %v4789 = vunpack.c.h.b16 %v4449
          %v4790 = vunpack.c.l.b16 %v4450
          %v4791 = vunpack.c.h.b16 %v4450
          %v4792 = vunpack.c.l.b16 %v4451
          %v4793 = vunpack.c.h.b16 %v4451
          %v4794 = vunpack.c.l.b16 %v4452
          %v4795 = vunpack.c.h.b16 %v4452
          %v4796 = vunpack.c.l.b16 %v4453
          %v4797 = vunpack.c.h.b16 %v4453
          %v4798 = vunpack.c.l.b16 %v4454
          %v4799 = vunpack.c.h.b16 %v4454
          %v4800 = vunpack.c.l.b16 %v4455
          %v4801 = vunpack.c.h.b16 %v4455
          %v4802 = vunpack.c.l.b16 %v4456
          %v4803 = vunpack.c.h.b16 %v4456
          %v4804 = vunpack.c.l.b16 %v4457
          %v4805 = vunpack.c.h.b16 %v4457
          %v4806 = vunpack.c.l.b16 %v4458
          %v4807 = vunpack.c.h.b16 %v4458
          %v4808 = vunpack.c.l.b16 %v4459
          %v4809 = vunpack.c.h.b16 %v4459
          %v4810 = vunpack.c.l.b16 %v4460
          %v4811 = vunpack.c.h.b16 %v4460
          %v4812 = vunpack.c.l.b16 %v4461
          %v4813 = vunpack.c.h.b16 %v4461
          %v4814 = vunpack.c.l.b16 %v4462
          %v4815 = vunpack.c.h.b16 %v4462
          %v4816 = vunpack.c.l.b16 %v4463
          %v4817 = vunpack.c.h.b16 %v4463
          %v4818 = vunpack.c.l.b16 %v4464
          %v4819 = vunpack.c.h.b16 %v4464
          %v4820 = vunpack.c.l.b16 %v4465
          %v4821 = vunpack.c.h.b16 %v4465
          %v4822 = vunpack.c.l.b16 %v4466
          %v4823 = vunpack.c.h.b16 %v4466
          %v4824 = vunpack.c.l.b16 %v4467
          %v4825 = vunpack.c.h.b16 %v4467
          %v4826 = vunpack.c.l.b16 %v4468
          %v4827 = vunpack.c.h.b16 %v4468
          %v4828 = vunpack.c.l.b16 %v4469
          %v4829 = vunpack.c.h.b16 %v4469
          %v4830 = vunpack.c.l.b16 %v4470
          %v4831 = vunpack.c.h.b16 %v4470
          %v4832 = vunpack.c.l.b16 %v4471
          %v4833 = vunpack.c.h.b16 %v4471
          %v4834 = vunpack.c.l.b16 %v4472
          %v4835 = vunpack.c.h.b16 %v4472
          %v4836 = vunpack.c.l.b16 %v4473
          %v4837 = vunpack.c.h.b16 %v4473
          %v4838 = vunpack.c.l.b16 %v4474
          %v4839 = vunpack.c.h.b16 %v4474
          %v4840 = vunpack.c.l.b16 %v4475
          %v4841 = vunpack.c.h.b16 %v4475
          %v4842 = vunpack.c.l.b16 %v4476
          %v4843 = vunpack.c.h.b16 %v4476
          %v4844 = vunpack.c.l.b16 %v4477
          %v4845 = vunpack.c.h.b16 %v4477
          %v4846 = vunpack.c.l.b16 %v4478
          %v4847 = vunpack.c.h.b16 %v4478
          %v4848 = vunpack.c.l.b16 %v4479
          %v4849 = vunpack.c.h.b16 %v4479
          %v4850 = vunpack.c.l.b16 %v4480
          %v4851 = vunpack.c.h.b16 %v4480
          %v4852 = vunpack.c.l.b16 %v4481
          %v4853 = vunpack.c.h.b16 %v4481
          %v4854 = vunpack.c.l.b16 %v4482
          %v4855 = vunpack.c.h.b16 %v4482
          %v4856 = vunpack.c.l.b16 %v4483
          %v4857 = vunpack.c.h.b16 %v4483
          %v4858 = vunpack.c.l.b16 %v4484
          %v4859 = vunpack.c.h.b16 %v4484
          %v4860 = vunpack.c.l.b16 %v4485
          %v4861 = vunpack.c.h.b16 %v4485
          %v4862 = vunpack.c.l.b16 %v4486
          %v4863 = vunpack.c.h.b16 %v4486
          %v4864 = vunpack.c.l.b16 %v4487
          %v4865 = vunpack.c.h.b16 %v4487
          %v4866 = vunpack.c.l.b16 %v4488
          %v4867 = vunpack.c.h.b16 %v4488
          %v4868 = vunpack.c.l.b16 %v4489
          %v4869 = vunpack.c.h.b16 %v4489
          %v4870 = vunpack.c.l.b16 %v4490
          %v4871 = vunpack.c.h.b16 %v4490
          %v4872 = vunpack.c.l.b16 %v4491
          %v4873 = vunpack.c.h.b16 %v4491
          %v4874 = vunpack.c.l.b16 %v4492
          %v4875 = vunpack.c.h.b16 %v4492
          %v4876 = vunpack.c.l.b16 %v4493
          %v4877 = vunpack.c.h.b16 %v4493
          %v4878 = vpack.c.b16 %v4626, %v4622
          %v4879 = vpack.c.b16 %v4627, %v4623
          %v4880 = vpack.c.b16 %v4628, %v4624
          %v4881 = vpack.c.b16 %v4629, %v4625
          %v4882 = vpack.c.b16 %v4634, %v4630
          %v4883 = vpack.c.b16 %v4635, %v4631
          %v4884 = vpack.c.b16 %v4636, %v4632
          %v4885 = vpack.c.b16 %v4637, %v4633
          %v4886 = vpack.c.b16 %v4642, %v4638
          %v4887 = vpack.c.b16 %v4643, %v4639
          %v4888 = vpack.c.b16 %v4644, %v4640
          %v4889 = vpack.c.b16 %v4645, %v4641
          %v4890 = vpack.c.b16 %v4650, %v4646
          %v4891 = vpack.c.b16 %v4651, %v4647
          %v4892 = vpack.c.b16 %v4652, %v4648
          %v4893 = vpack.c.b16 %v4653, %v4649
          %v4894 = vpack.c.b16 %v4658, %v4654
          %v4895 = vpack.c.b16 %v4659, %v4655
          %v4896 = vpack.c.b16 %v4660, %v4656
          %v4897 = vpack.c.b16 %v4661, %v4657
          %v4898 = vpack.c.b16 %v4666, %v4662
          %v4899 = vpack.c.b16 %v4667, %v4663
          %v4900 = vpack.c.b16 %v4668, %v4664
          %v4901 = vpack.c.b16 %v4669, %v4665
          %v4902 = vpack.c.b16 %v4674, %v4670
          %v4903 = vpack.c.b16 %v4675, %v4671
          %v4904 = vpack.c.b16 %v4676, %v4672
          %v4905 = vpack.c.b16 %v4677, %v4673
          %v4906 = vpack.c.b16 %v4682, %v4678
          %v4907 = vpack.c.b16 %v4683, %v4679
          %v4908 = vpack.c.b16 %v4684, %v4680
          %v4909 = vpack.c.b16 %v4685, %v4681
          %v4910 = vpack.c.b16 %v4690, %v4686
          %v4911 = vpack.c.b16 %v4691, %v4687
          %v4912 = vpack.c.b16 %v4692, %v4688
          %v4913 = vpack.c.b16 %v4693, %v4689
          %v4914 = vpack.c.b16 %v4698, %v4694
          %v4915 = vpack.c.b16 %v4699, %v4695
          %v4916 = vpack.c.b16 %v4700, %v4696
          %v4917 = vpack.c.b16 %v4701, %v4697
          %v4918 = vpack.c.b16 %v4706, %v4702
          %v4919 = vpack.c.b16 %v4707, %v4703
          %v4920 = vpack.c.b16 %v4708, %v4704
          %v4921 = vpack.c.b16 %v4709, %v4705
          %v4922 = vpack.c.b16 %v4714, %v4710
          %v4923 = vpack.c.b16 %v4715, %v4711
          %v4924 = vpack.c.b16 %v4716, %v4712
          %v4925 = vpack.c.b16 %v4717, %v4713
          %v4926 = vpack.c.b16 %v4722, %v4718
          %v4927 = vpack.c.b16 %v4723, %v4719
          %v4928 = vpack.c.b16 %v4724, %v4720
          %v4929 = vpack.c.b16 %v4725, %v4721
          %v4930 = vpack.c.b16 %v4730, %v4726
          %v4931 = vpack.c.b16 %v4731, %v4727
          %v4932 = vpack.c.b16 %v4732, %v4728
          %v4933 = vpack.c.b16 %v4733, %v4729
          %v4934 = vpack.c.b16 %v4738, %v4734
          %v4935 = vpack.c.b16 %v4739, %v4735
          %v4936 = vpack.c.b16 %v4740, %v4736
          %v4937 = vpack.c.b16 %v4741, %v4737
          %v4938 = vpack.c.b16 %v4746, %v4742
          %v4939 = vpack.c.b16 %v4747, %v4743
          %v4940 = vpack.c.b16 %v4748, %v4744
          %v4941 = vpack.c.b16 %v4749, %v4745
          %v4942 = vpack.c.b16 %v4754, %v4750
          %v4943 = vpack.c.b16 %v4755, %v4751
          %v4944 = vpack.c.b16 %v4756, %v4752
          %v4945 = vpack.c.b16 %v4757, %v4753
          %v4946 = vpack.c.b16 %v4762, %v4758
          %v4947 = vpack.c.b16 %v4763, %v4759
          %v4948 = vpack.c.b16 %v4764, %v4760
          %v4949 = vpack.c.b16 %v4765, %v4761
          %v4950 = vpack.c.b16 %v4770, %v4766
          %v4951 = vpack.c.b16 %v4771, %v4767
          %v4952 = vpack.c.b16 %v4772, %v4768
          %v4953 = vpack.c.b16 %v4773, %v4769
          %v4954 = vpack.c.b16 %v4778, %v4774
          %v4955 = vpack.c.b16 %v4779, %v4775
          %v4956 = vpack.c.b16 %v4780, %v4776
          %v4957 = vpack.c.b16 %v4781, %v4777
          %v4958 = vpack.c.b16 %v4786, %v4782
          %v4959 = vpack.c.b16 %v4787, %v4783
          %v4960 = vpack.c.b16 %v4788, %v4784
          %v4961 = vpack.c.b16 %v4789, %v4785
          %v4962 = vpack.c.b16 %v4794, %v4790
          %v4963 = vpack.c.b16 %v4795, %v4791
          %v4964 = vpack.c.b16 %v4796, %v4792
          %v4965 = vpack.c.b16 %v4797, %v4793
          %v4966 = vpack.c.b16 %v4802, %v4798
          %v4967 = vpack.c.b16 %v4803, %v4799
          %v4968 = vpack.c.b16 %v4804, %v4800
          %v4969 = vpack.c.b16 %v4805, %v4801
          %v4970 = vpack.c.b16 %v4810, %v4806
          %v4971 = vpack.c.b16 %v4811, %v4807
          %v4972 = vpack.c.b16 %v4812, %v4808
          %v4973 = vpack.c.b16 %v4813, %v4809
          %v4974 = vpack.c.b16 %v4818, %v4814
          %v4975 = vpack.c.b16 %v4819, %v4815
          %v4976 = vpack.c.b16 %v4820, %v4816
          %v4977 = vpack.c.b16 %v4821, %v4817
          %v4978 = vpack.c.b16 %v4826, %v4822
          %v4979 = vpack.c.b16 %v4827, %v4823
          %v4980 = vpack.c.b16 %v4828, %v4824
          %v4981 = vpack.c.b16 %v4829, %v4825
          %v4982 = vpack.c.b16 %v4834, %v4830
          %v4983 = vpack.c.b16 %v4835, %v4831
          %v4984 = vpack.c.b16 %v4836, %v4832
          %v4985 = vpack.c.b16 %v4837, %v4833
          %v4986 = vpack.c.b16 %v4842, %v4838
          %v4987 = vpack.c.b16 %v4843, %v4839
          %v4988 = vpack.c.b16 %v4844, %v4840
          %v4989 = vpack.c.b16 %v4845, %v4841
          %v4990 = vpack.c.b16 %v4850, %v4846
          %v4991 = vpack.c.b16 %v4851, %v4847
          %v4992 = vpack.c.b16 %v4852, %v4848
          %v4993 = vpack.c.b16 %v4853, %v4849
          %v4994 = vpack.c.b16 %v4858, %v4854
          %v4995 = vpack.c.b16 %v4859, %v4855
          %v4996 = vpack.c.b16 %v4860, %v4856
          %v4997 = vpack.c.b16 %v4861, %v4857
          %v4998 = vpack.c.b16 %v4866, %v4862
          %v4999 = vpack.c.b16 %v4867, %v4863
          %v5000 = vpack.c.b16 %v4868, %v4864
          %v5001 = vpack.c.b16 %v4869, %v4865
          %v5002 = vpack.c.b16 %v4874, %v4870
          %v5003 = vpack.c.b16 %v4875, %v4871
          %v5004 = vpack.c.b16 %v4876, %v4872
          %v5005 = vpack.c.b16 %v4877, %v4873
          %5134 = vmatpush.bf16.msra.mxu0 %v4906
          %5135 = vmatpush.bf16.msra.mxu0 %v4902
          %5136 = vmatpush.bf16.msra.mxu0 %v4898
          %5137 = vmatpush.bf16.msra.mxu0 %v4894
          %5138 = vmatpush.bf16.msra.mxu0 %v4890
          %5139 = vmatpush.bf16.msra.mxu0 %v4886
          %5140 = vmatpush.bf16.msra.mxu0 %v4882
          %5141 = vmatpush.bf16.msra.mxu0 %v4878
          %5142 = vmatmul.bf16.gmra.mxu0 %v4354
          %v5143 = vpop.f32.mrf.mxu0
          %v5144 = vadd.f32 0.0, %v5143
          %v5145 = vpop.f32.mrf.mxu0
          %v5146 = vadd.f32 0.0, %v5145
          %5147 = vmatmul.bf16.gmra.mxu0 %v4358
          %v5148 = vpop.f32.mrf.mxu0
          %v5149 = vadd.f32 0.0, %v5148
          %v5150 = vpop.f32.mrf.mxu0
          %v5151 = vadd.f32 0.0, %v5150
          %5152 = vmatmul.bf16.gmra.mxu0 %v4362
          %v5153 = vpop.f32.mrf.mxu0
          %v5154 = vadd.f32 0.0, %v5153
          %v5155 = vpop.f32.mrf.mxu0
          %v5156 = vadd.f32 0.0, %v5155
          %5157 = vdwg.mxu0
          %5158 = vmatpush.bf16.msra.mxu0 %v4938
          %5159 = vmatpush.bf16.msra.mxu0 %v4934
          %5160 = vmatpush.bf16.msra.mxu0 %v4930
          %5161 = vmatpush.bf16.msra.mxu0 %v4926
          %5162 = vmatpush.bf16.msra.mxu0 %v4922
          %5163 = vmatpush.bf16.msra.mxu0 %v4918
          %5164 = vmatpush.bf16.msra.mxu0 %v4914
          %5165 = vmatpush.bf16.msra.mxu0 %v4910
          %5166 = vmatmul.bf16.gmra.mxu0 %v4355
          %v5167 = vpop.f32.mrf.mxu0
          %v5168 = vadd.f32 %v5144, %v5167
          %v5169 = vpop.f32.mrf.mxu0
          %v5170 = vadd.f32 %v5146, %v5169
          %5171 = vmatmul.bf16.gmra.mxu0 %v4359
          %v5172 = vpop.f32.mrf.mxu0
          %v5173 = vadd.f32 %v5149, %v5172
          %v5174 = vpop.f32.mrf.mxu0
          %v5175 = vadd.f32 %v5151, %v5174
          %5176 = vmatmul.bf16.gmra.mxu0 %v4363
          %v5177 = vpop.f32.mrf.mxu0
          %v5178 = vadd.f32 %v5154, %v5177
          %v5179 = vpop.f32.mrf.mxu0
          %v5180 = vadd.f32 %v5156, %v5179
          %5181 = vdwg.mxu0
          %5182 = vmatpush.bf16.msra.mxu0 %v4970
          %5183 = vmatpush.bf16.msra.mxu0 %v4966
          %5184 = vmatpush.bf16.msra.mxu0 %v4962
          %5185 = vmatpush.bf16.msra.mxu0 %v4958
          %5186 = vmatpush.bf16.msra.mxu0 %v4954
          %5187 = vmatpush.bf16.msra.mxu0 %v4950
          %5188 = vmatpush.bf16.msra.mxu0 %v4946
          %5189 = vmatpush.bf16.msra.mxu0 %v4942
          %5190 = vmatmul.bf16.gmra.mxu0 %v4356
          %v5191 = vpop.f32.mrf.mxu0
          %v5192 = vadd.f32 %v5168, %v5191
          %v5193 = vpop.f32.mrf.mxu0
          %v5194 = vadd.f32 %v5170, %v5193
          %5195 = vmatmul.bf16.gmra.mxu0 %v4360
          %v5196 = vpop.f32.mrf.mxu0
          %v5197 = vadd.f32 %v5173, %v5196
          %v5198 = vpop.f32.mrf.mxu0
          %v5199 = vadd.f32 %v5175, %v5198
          %5200 = vmatmul.bf16.gmra.mxu0 %v4364
          %v5201 = vpop.f32.mrf.mxu0
          %v5202 = vadd.f32 %v5178, %v5201
          %v5203 = vpop.f32.mrf.mxu0
          %v5204 = vadd.f32 %v5180, %v5203
          %5205 = vdwg.mxu0
          %5206 = vmatpush.bf16.msra.mxu0 %v5002
          %5207 = vmatpush.bf16.msra.mxu0 %v4998
          %5208 = vmatpush.bf16.msra.mxu0 %v4994
          %5209 = vmatpush.bf16.msra.mxu0 %v4990
          %5210 = vmatpush.bf16.msra.mxu0 %v4986
          %5211 = vmatpush.bf16.msra.mxu0 %v4982
          %5212 = vmatpush.bf16.msra.mxu0 %v4978
          %5213 = vmatpush.bf16.msra.mxu0 %v4974
          %5214 = vmatmul.bf16.gmra.mxu0 %v4357
          %v5215 = vpop.f32.mrf.mxu0
          %v5216 = vadd.f32 %v5192, %v5215
          %v5217 = vpop.f32.mrf.mxu0
          %v5218 = vadd.f32 %v5194, %v5217
          %5219 = vmatmul.bf16.gmra.mxu0 %v4361
          %v5220 = vpop.f32.mrf.mxu0
          %v5221 = vadd.f32 %v5197, %v5220
          %v5222 = vpop.f32.mrf.mxu0
          %v5223 = vadd.f32 %v5199, %v5222
          %5224 = vmatmul.bf16.gmra.mxu0 %v4365
          %v5225 = vpop.f32.mrf.mxu0
          %v5226 = vadd.f32 %v5202, %v5225
          %v5227 = vpop.f32.mrf.mxu0
          %v5228 = vadd.f32 %v5204, %v5227
          %5229 = vdwg.mxu0
          %5230 = vmatpush.bf16.msra.mxu0 %v4907
          %5231 = vmatpush.bf16.msra.mxu0 %v4903
          %5232 = vmatpush.bf16.msra.mxu0 %v4899
          %5233 = vmatpush.bf16.msra.mxu0 %v4895
          %5234 = vmatpush.bf16.msra.mxu0 %v4891
          %5235 = vmatpush.bf16.msra.mxu0 %v4887
          %5236 = vmatpush.bf16.msra.mxu0 %v4883
          %5237 = vmatpush.bf16.msra.mxu0 %v4879
          %5238 = vmatmul.bf16.gmra.mxu0 %v4354
          %v5239 = vpop.f32.mrf.mxu0
          %v5240 = vadd.f32 0.0, %v5239
          %v5241 = vpop.f32.mrf.mxu0
          %v5242 = vadd.f32 0.0, %v5241
          %5243 = vmatmul.bf16.gmra.mxu0 %v4358
          %v5244 = vpop.f32.mrf.mxu0
          %v5245 = vadd.f32 0.0, %v5244
          %v5246 = vpop.f32.mrf.mxu0
          %v5247 = vadd.f32 0.0, %v5246
          %5248 = vmatmul.bf16.gmra.mxu0 %v4362
          %v5249 = vpop.f32.mrf.mxu0
          %v5250 = vadd.f32 0.0, %v5249
          %v5251 = vpop.f32.mrf.mxu0
          %v5252 = vadd.f32 0.0, %v5251
          %5253 = vdwg.mxu0
          %5254 = vmatpush.bf16.msra.mxu0 %v4939
          %5255 = vmatpush.bf16.msra.mxu0 %v4935
          %5256 = vmatpush.bf16.msra.mxu0 %v4931
          %5257 = vmatpush.bf16.msra.mxu0 %v4927
          %5258 = vmatpush.bf16.msra.mxu0 %v4923
          %5259 = vmatpush.bf16.msra.mxu0 %v4919
          %5260 = vmatpush.bf16.msra.mxu0 %v4915
          %5261 = vmatpush.bf16.msra.mxu0 %v4911
          %5262 = vmatmul.bf16.gmra.mxu0 %v4355
          %v5263 = vpop.f32.mrf.mxu0
          %v5264 = vadd.f32 %v5240, %v5263
          %v5265 = vpop.f32.mrf.mxu0
          %v5266 = vadd.f32 %v5242, %v5265
          %5267 = vmatmul.bf16.gmra.mxu0 %v4359
          %v5268 = vpop.f32.mrf.mxu0
          %v5269 = vadd.f32 %v5245, %v5268
          %v5270 = vpop.f32.mrf.mxu0
          %v5271 = vadd.f32 %v5247, %v5270
          %5272 = vmatmul.bf16.gmra.mxu0 %v4363
          %v5273 = vpop.f32.mrf.mxu0
          %v5274 = vadd.f32 %v5250, %v5273
          %v5275 = vpop.f32.mrf.mxu0
          %v5276 = vadd.f32 %v5252, %v5275
          %5277 = vdwg.mxu0
          %5278 = vmatpush.bf16.msra.mxu0 %v4971
          %5279 = vmatpush.bf16.msra.mxu0 %v4967
          %5280 = vmatpush.bf16.msra.mxu0 %v4963
          %5281 = vmatpush.bf16.msra.mxu0 %v4959
          %5282 = vmatpush.bf16.msra.mxu0 %v4955
          %5283 = vmatpush.bf16.msra.mxu0 %v4951
          %5284 = vmatpush.bf16.msra.mxu0 %v4947
          %5285 = vmatpush.bf16.msra.mxu0 %v4943
          %5286 = vmatmul.bf16.gmra.mxu0 %v4356
          %v5287 = vpop.f32.mrf.mxu0
          %v5288 = vadd.f32 %v5264, %v5287
          %v5289 = vpop.f32.mrf.mxu0
          %v5290 = vadd.f32 %v5266, %v5289
          %5291 = vmatmul.bf16.gmra.mxu0 %v4360
          %v5292 = vpop.f32.mrf.mxu0
          %v5293 = vadd.f32 %v5269, %v5292
          %v5294 = vpop.f32.mrf.mxu0
          %v5295 = vadd.f32 %v5271, %v5294
          %5296 = vmatmul.bf16.gmra.mxu0 %v4364
          %v5297 = vpop.f32.mrf.mxu0
          %v5298 = vadd.f32 %v5274, %v5297
          %v5299 = vpop.f32.mrf.mxu0
          %v5300 = vadd.f32 %v5276, %v5299
          %5301 = vdwg.mxu0
          %5302 = vmatpush.bf16.msra.mxu0 %v5003
          %5303 = vmatpush.bf16.msra.mxu0 %v4999
          %5304 = vmatpush.bf16.msra.mxu0 %v4995
          %5305 = vmatpush.bf16.msra.mxu0 %v4991
          %5306 = vmatpush.bf16.msra.mxu0 %v4987
          %5307 = vmatpush.bf16.msra.mxu0 %v4983
          %5308 = vmatpush.bf16.msra.mxu0 %v4979
          %5309 = vmatpush.bf16.msra.mxu0 %v4975
          %5310 = vmatmul.bf16.gmra.mxu0 %v4357
          %v5311 = vpop.f32.mrf.mxu0
          %v5312 = vadd.f32 %v5288, %v5311
          %v5313 = vpop.f32.mrf.mxu0
          %v5314 = vadd.f32 %v5290, %v5313
          %5315 = vmatmul.bf16.gmra.mxu0 %v4361
          %v5316 = vpop.f32.mrf.mxu0
          %v5317 = vadd.f32 %v5293, %v5316
          %v5318 = vpop.f32.mrf.mxu0
          %v5319 = vadd.f32 %v5295, %v5318
          %5320 = vmatmul.bf16.gmra.mxu0 %v4365
          %v5321 = vpop.f32.mrf.mxu0
          %v5322 = vadd.f32 %v5298, %v5321
          %v5323 = vpop.f32.mrf.mxu0
          %v5324 = vadd.f32 %v5300, %v5323
          %5325 = vdwg.mxu0
          %5326 = vmatpush.bf16.msra.mxu0 %v4908
          %5327 = vmatpush.bf16.msra.mxu0 %v4904
          %5328 = vmatpush.bf16.msra.mxu0 %v4900
          %5329 = vmatpush.bf16.msra.mxu0 %v4896
          %5330 = vmatpush.bf16.msra.mxu0 %v4892
          %5331 = vmatpush.bf16.msra.mxu0 %v4888
          %5332 = vmatpush.bf16.msra.mxu0 %v4884
          %5333 = vmatpush.bf16.msra.mxu0 %v4880
          %5334 = vmatmul.bf16.gmra.mxu0 %v4354
          %v5335 = vpop.f32.mrf.mxu0
          %v5336 = vadd.f32 0.0, %v5335
          %v5337 = vpop.f32.mrf.mxu0
          %v5338 = vadd.f32 0.0, %v5337
          %5339 = vmatmul.bf16.gmra.mxu0 %v4358
          %v5340 = vpop.f32.mrf.mxu0
          %v5341 = vadd.f32 0.0, %v5340
          %v5342 = vpop.f32.mrf.mxu0
          %v5343 = vadd.f32 0.0, %v5342
          %5344 = vmatmul.bf16.gmra.mxu0 %v4362
          %v5345 = vpop.f32.mrf.mxu0
          %v5346 = vadd.f32 0.0, %v5345
          %v5347 = vpop.f32.mrf.mxu0
          %v5348 = vadd.f32 0.0, %v5347
          %5349 = vdwg.mxu0
          %5350 = vmatpush.bf16.msra.mxu0 %v4940
          %5351 = vmatpush.bf16.msra.mxu0 %v4936
          %5352 = vmatpush.bf16.msra.mxu0 %v4932
          %5353 = vmatpush.bf16.msra.mxu0 %v4928
          %5354 = vmatpush.bf16.msra.mxu0 %v4924
          %5355 = vmatpush.bf16.msra.mxu0 %v4920
          %5356 = vmatpush.bf16.msra.mxu0 %v4916
          %5357 = vmatpush.bf16.msra.mxu0 %v4912
          %5358 = vmatmul.bf16.gmra.mxu0 %v4355
          %v5359 = vpop.f32.mrf.mxu0
          %v5360 = vadd.f32 %v5336, %v5359
          %v5361 = vpop.f32.mrf.mxu0
          %v5362 = vadd.f32 %v5338, %v5361
          %5363 = vmatmul.bf16.gmra.mxu0 %v4359
          %v5364 = vpop.f32.mrf.mxu0
          %v5365 = vadd.f32 %v5341, %v5364
          %v5366 = vpop.f32.mrf.mxu0
          %v5367 = vadd.f32 %v5343, %v5366
          %5368 = vmatmul.bf16.gmra.mxu0 %v4363
          %v5369 = vpop.f32.mrf.mxu0
          %v5370 = vadd.f32 %v5346, %v5369
          %v5371 = vpop.f32.mrf.mxu0
          %v5372 = vadd.f32 %v5348, %v5371
          %5373 = vdwg.mxu0
          %5374 = vmatpush.bf16.msra.mxu0 %v4972
          %5375 = vmatpush.bf16.msra.mxu0 %v4968
          %5376 = vmatpush.bf16.msra.mxu0 %v4964
          %5377 = vmatpush.bf16.msra.mxu0 %v4960
          %5378 = vmatpush.bf16.msra.mxu0 %v4956
          %5379 = vmatpush.bf16.msra.mxu0 %v4952
          %5380 = vmatpush.bf16.msra.mxu0 %v4948
          %5381 = vmatpush.bf16.msra.mxu0 %v4944
          %5382 = vmatmul.bf16.gmra.mxu0 %v4356
          %v5383 = vpop.f32.mrf.mxu0
          %v5384 = vadd.f32 %v5360, %v5383
          %v5385 = vpop.f32.mrf.mxu0
          %v5386 = vadd.f32 %v5362, %v5385
          %5387 = vmatmul.bf16.gmra.mxu0 %v4360
          %v5388 = vpop.f32.mrf.mxu0
          %v5389 = vadd.f32 %v5365, %v5388
          %v5390 = vpop.f32.mrf.mxu0
          %v5391 = vadd.f32 %v5367, %v5390
          %5392 = vmatmul.bf16.gmra.mxu0 %v4364
          %v5393 = vpop.f32.mrf.mxu0
          %v5394 = vadd.f32 %v5370, %v5393
          %v5395 = vpop.f32.mrf.mxu0
          %v5396 = vadd.f32 %v5372, %v5395
          %5397 = vdwg.mxu0
          %5398 = vmatpush.bf16.msra.mxu0 %v5004
          %5399 = vmatpush.bf16.msra.mxu0 %v5000
          %5400 = vmatpush.bf16.msra.mxu0 %v4996
          %5401 = vmatpush.bf16.msra.mxu0 %v4992
          %5402 = vmatpush.bf16.msra.mxu0 %v4988
          %5403 = vmatpush.bf16.msra.mxu0 %v4984
          %5404 = vmatpush.bf16.msra.mxu0 %v4980
          %5405 = vmatpush.bf16.msra.mxu0 %v4976
          %5406 = vmatmul.bf16.gmra.mxu0 %v4357
          %v5407 = vpop.f32.mrf.mxu0
          %v5408 = vadd.f32 %v5384, %v5407
          %v5409 = vpop.f32.mrf.mxu0
          %v5410 = vadd.f32 %v5386, %v5409
          %5411 = vmatmul.bf16.gmra.mxu0 %v4361
          %v5412 = vpop.f32.mrf.mxu0
          %v5413 = vadd.f32 %v5389, %v5412
          %v5414 = vpop.f32.mrf.mxu0
          %v5415 = vadd.f32 %v5391, %v5414
          %5416 = vmatmul.bf16.gmra.mxu0 %v4365
          %v5417 = vpop.f32.mrf.mxu0
          %v5418 = vadd.f32 %v5394, %v5417
          %v5419 = vpop.f32.mrf.mxu0
          %v5420 = vadd.f32 %v5396, %v5419
          %5421 = vdwg.mxu0
          %5422 = vmatpush.bf16.msra.mxu0 %v4909
          %5423 = vmatpush.bf16.msra.mxu0 %v4905
          %5424 = vmatpush.bf16.msra.mxu0 %v4901
          %5425 = vmatpush.bf16.msra.mxu0 %v4897
          %5426 = vmatpush.bf16.msra.mxu0 %v4893
          %5427 = vmatpush.bf16.msra.mxu0 %v4889
          %5428 = vmatpush.bf16.msra.mxu0 %v4885
          %5429 = vmatpush.bf16.msra.mxu0 %v4881
          %5430 = vmatmul.bf16.gmra.mxu0 %v4354
          %v5431 = vpop.f32.mrf.mxu0
          %v5432 = vadd.f32 0.0, %v5431
          %v5433 = vpop.f32.mrf.mxu0
          %v5434 = vadd.f32 0.0, %v5433
          %5435 = vmatmul.bf16.gmra.mxu0 %v4358
          %v5436 = vpop.f32.mrf.mxu0
          %v5437 = vadd.f32 0.0, %v5436
          %v5438 = vpop.f32.mrf.mxu0
          %v5439 = vadd.f32 0.0, %v5438
          %5440 = vmatmul.bf16.gmra.mxu0 %v4362
          %v5441 = vpop.f32.mrf.mxu0
          %v5442 = vadd.f32 0.0, %v5441
          %v5443 = vpop.f32.mrf.mxu0
          %v5444 = vadd.f32 0.0, %v5443
          %5445 = vdwg.mxu0
          %5446 = vmatpush.bf16.msra.mxu0 %v4941
          %5447 = vmatpush.bf16.msra.mxu0 %v4937
          %5448 = vmatpush.bf16.msra.mxu0 %v4933
          %5449 = vmatpush.bf16.msra.mxu0 %v4929
          %5450 = vmatpush.bf16.msra.mxu0 %v4925
          %5451 = vmatpush.bf16.msra.mxu0 %v4921
          %5452 = vmatpush.bf16.msra.mxu0 %v4917
          %5453 = vmatpush.bf16.msra.mxu0 %v4913
          %5454 = vmatmul.bf16.gmra.mxu0 %v4355
          %v5455 = vpop.f32.mrf.mxu0
          %v5456 = vadd.f32 %v5432, %v5455
          %v5457 = vpop.f32.mrf.mxu0
          %v5458 = vadd.f32 %v5434, %v5457
          %5459 = vmatmul.bf16.gmra.mxu0 %v4359
          %v5460 = vpop.f32.mrf.mxu0
          %v5461 = vadd.f32 %v5437, %v5460
          %v5462 = vpop.f32.mrf.mxu0
          %v5463 = vadd.f32 %v5439, %v5462
          %5464 = vmatmul.bf16.gmra.mxu0 %v4363
          %v5465 = vpop.f32.mrf.mxu0
          %v5466 = vadd.f32 %v5442, %v5465
          %v5467 = vpop.f32.mrf.mxu0
          %v5468 = vadd.f32 %v5444, %v5467
          %5469 = vdwg.mxu0
          %5470 = vmatpush.bf16.msra.mxu0 %v4973
          %5471 = vmatpush.bf16.msra.mxu0 %v4969
          %5472 = vmatpush.bf16.msra.mxu0 %v4965
          %5473 = vmatpush.bf16.msra.mxu0 %v4961
          %5474 = vmatpush.bf16.msra.mxu0 %v4957
          %5475 = vmatpush.bf16.msra.mxu0 %v4953
          %5476 = vmatpush.bf16.msra.mxu0 %v4949
          %5477 = vmatpush.bf16.msra.mxu0 %v4945
          %5478 = vmatmul.bf16.gmra.mxu0 %v4356
          %v5479 = vpop.f32.mrf.mxu0
          %v5480 = vadd.f32 %v5456, %v5479
          %v5481 = vpop.f32.mrf.mxu0
          %v5482 = vadd.f32 %v5458, %v5481
          %5483 = vmatmul.bf16.gmra.mxu0 %v4360
          %v5484 = vpop.f32.mrf.mxu0
          %v5485 = vadd.f32 %v5461, %v5484
          %v5486 = vpop.f32.mrf.mxu0
          %v5487 = vadd.f32 %v5463, %v5486
          %5488 = vmatmul.bf16.gmra.mxu0 %v4364
          %v5489 = vpop.f32.mrf.mxu0
          %v5490 = vadd.f32 %v5466, %v5489
          %v5491 = vpop.f32.mrf.mxu0
          %v5492 = vadd.f32 %v5468, %v5491
          %5493 = vdwg.mxu0
          %5494 = vmatpush.bf16.msra.mxu0 %v5005
          %5495 = vmatpush.bf16.msra.mxu0 %v5001
          %5496 = vmatpush.bf16.msra.mxu0 %v4997
          %5497 = vmatpush.bf16.msra.mxu0 %v4993
          %5498 = vmatpush.bf16.msra.mxu0 %v4989
          %5499 = vmatpush.bf16.msra.mxu0 %v4985
          %5500 = vmatpush.bf16.msra.mxu0 %v4981
          %5501 = vmatpush.bf16.msra.mxu0 %v4977
          %5502 = vmatmul.bf16.gmra.mxu0 %v4357
          %v5503 = vpop.f32.mrf.mxu0
          %v5504 = vadd.f32 %v5480, %v5503
          %v5505 = vpop.f32.mrf.mxu0
          %v5506 = vadd.f32 %v5482, %v5505
          %5507 = vmatmul.bf16.gmra.mxu0 %v4361
          %v5508 = vpop.f32.mrf.mxu0
          %v5509 = vadd.f32 %v5485, %v5508
          %v5510 = vpop.f32.mrf.mxu0
          %v5511 = vadd.f32 %v5487, %v5510
          %5512 = vmatmul.bf16.gmra.mxu0 %v4365
          %v5513 = vpop.f32.mrf.mxu0
          %v5514 = vadd.f32 %v5490, %v5513
          %v5515 = vpop.f32.mrf.mxu0
          %v5516 = vadd.f32 %v5492, %v5515
          %5517 = vdwg.mxu0
          %v5518 = vadd.f32 %v4004, %v5216
          %v5519 = vadd.f32 %v4100, %v5312
          %v5520 = vadd.f32 %v4196, %v5408
          %v5521 = vadd.f32 %v4292, %v5504
          %v5522 = vadd.f32 %v4006, %v5218
          %v5523 = vadd.f32 %v4102, %v5314
          %v5524 = vadd.f32 %v4198, %v5410
          %v5525 = vadd.f32 %v4294, %v5506
          %v5526 = vadd.f32 %v4009, %v5221
          %v5527 = vadd.f32 %v4105, %v5317
          %v5528 = vadd.f32 %v4201, %v5413
          %v5529 = vadd.f32 %v4297, %v5509
          %v5530 = vadd.f32 %v4011, %v5223
          %v5531 = vadd.f32 %v4107, %v5319
          %v5532 = vadd.f32 %v4203, %v5415
          %v5533 = vadd.f32 %v4299, %v5511
          %v5534 = vadd.f32 %v4014, %v5226
          %v5535 = vadd.f32 %v4110, %v5322
          %v5536 = vadd.f32 %v4206, %v5418
          %v5537 = vadd.f32 %v4302, %v5514
          %v5538 = vadd.f32 %v4016, %v5228
          %v5539 = vadd.f32 %v4112, %v5324
          %v5540 = vadd.f32 %v4208, %v5420
          %v5541 = vadd.f32 %v4304, %v5516
          %v5542 = vld [vmem:[#allocation2 + $0x60] sm:$0xff]
          %v5543 = vld [vmem:[#allocation2 + $0x68] sm:$0xff]
          %v5544 = vld [vmem:[#allocation2 + $0x70] sm:$0xff]
          %v5545 = vld [vmem:[#allocation2 + $0x78] sm:$0xff]
          %v5546 = vld [vmem:[#allocation2 + $0xe0] sm:$0xff]
          %v5547 = vld [vmem:[#allocation2 + $0xe8] sm:$0xff]
          %v5548 = vld [vmem:[#allocation2 + $0xf0] sm:$0xff]
          %v5549 = vld [vmem:[#allocation2 + $0xf8] sm:$0xff]
          %v5550 = vld [vmem:[#allocation2 + $0x160] sm:$0xff]
          %v5551 = vld [vmem:[#allocation2 + $0x168] sm:$0xff]
          %v5552 = vld [vmem:[#allocation2 + $0x170] sm:$0xff]
          %v5553 = vld [vmem:[#allocation2 + $0x178] sm:$0xff]
          %v5554 = vld [vmem:[#allocation2 + $0x1e0] sm:$0xff]
          %v5555 = vld [vmem:[#allocation2 + $0x1e8] sm:$0xff]
          %v5556 = vld [vmem:[#allocation2 + $0x1f0] sm:$0xff]
          %v5557 = vld [vmem:[#allocation2 + $0x1f8] sm:$0xff]
          %v5558 = vld [vmem:[#allocation2 + $0x260] sm:$0xff]
          %v5559 = vld [vmem:[#allocation2 + $0x268] sm:$0xff]
          %v5560 = vld [vmem:[#allocation2 + $0x270] sm:$0xff]
          %v5561 = vld [vmem:[#allocation2 + $0x278] sm:$0xff]
          %v5562 = vld [vmem:[#allocation2 + $0x2e0] sm:$0xff]
          %v5563 = vld [vmem:[#allocation2 + $0x2e8] sm:$0xff]
          %v5564 = vld [vmem:[#allocation2 + $0x2f0] sm:$0xff]
          %v5565 = vld [vmem:[#allocation2 + $0x2f8] sm:$0xff]
          %v5566 = vmax.f32 %v5542, 0.0
          %v5567 = vmax.f32 %v5543, 0.0
          %v5568 = vmax.f32 %v5544, 0.0
          %v5569 = vmax.f32 %v5545, 0.0
          %v5570 = vmax.f32 %v5546, 0.0
          %v5571 = vmax.f32 %v5547, 0.0
          %v5572 = vmax.f32 %v5548, 0.0
          %v5573 = vmax.f32 %v5549, 0.0
          %v5574 = vmax.f32 %v5550, 0.0
          %v5575 = vmax.f32 %v5551, 0.0
          %v5576 = vmax.f32 %v5552, 0.0
          %v5577 = vmax.f32 %v5553, 0.0
          %v5578 = vmax.f32 %v5554, 0.0
          %v5579 = vmax.f32 %v5555, 0.0
          %v5580 = vmax.f32 %v5556, 0.0
          %v5581 = vmax.f32 %v5557, 0.0
          %v5582 = vmax.f32 %v5558, 0.0
          %v5583 = vmax.f32 %v5559, 0.0
          %v5584 = vmax.f32 %v5560, 0.0
          %v5585 = vmax.f32 %v5561, 0.0
          %v5586 = vmax.f32 %v5562, 0.0
          %v5587 = vmax.f32 %v5563, 0.0
          %v5588 = vmax.f32 %v5564, 0.0
          %v5589 = vmax.f32 %v5565, 0.0
          %v5590 = vpack.c.bf16 %v5570, %v5566
          %v5591 = vpack.c.bf16 %v5571, %v5567
          %v5592 = vpack.c.bf16 %v5572, %v5568
          %v5593 = vpack.c.bf16 %v5573, %v5569
          %v5594 = vpack.c.bf16 %v5578, %v5574
          %v5595 = vpack.c.bf16 %v5579, %v5575
          %v5596 = vpack.c.bf16 %v5580, %v5576
          %v5597 = vpack.c.bf16 %v5581, %v5577
          %v5598 = vpack.c.bf16 %v5586, %v5582
          %v5599 = vpack.c.bf16 %v5587, %v5583
          %v5600 = vpack.c.bf16 %v5588, %v5584
          %v5601 = vpack.c.bf16 %v5589, %v5585
          %v5602 = vld [vmem:[#allocation7 + $0xc00] sm:$0xff]
          %v5603 = vld [vmem:[#allocation7 + $0xc08] sm:$0xff]
          %v5604 = vld [vmem:[#allocation7 + $0xc10] sm:$0xff]
          %v5605 = vld [vmem:[#allocation7 + $0xc18] sm:$0xff]
          %v5606 = vld [vmem:[#allocation7 + $0xc20] sm:$0xff]
          %v5607 = vld [vmem:[#allocation7 + $0xc28] sm:$0xff]
          %v5608 = vld [vmem:[#allocation7 + $0xc30] sm:$0xff]
          %v5609 = vld [vmem:[#allocation7 + $0xc38] sm:$0xff]
          %v5610 = vld [vmem:[#allocation7 + $0xc40] sm:$0xff]
          %v5611 = vld [vmem:[#allocation7 + $0xc48] sm:$0xff]
          %v5612 = vld [vmem:[#allocation7 + $0xc50] sm:$0xff]
          %v5613 = vld [vmem:[#allocation7 + $0xc58] sm:$0xff]
          %v5614 = vld [vmem:[#allocation7 + $0xc60] sm:$0xff]
          %v5615 = vld [vmem:[#allocation7 + $0xc68] sm:$0xff]
          %v5616 = vld [vmem:[#allocation7 + $0xc70] sm:$0xff]
          %v5617 = vld [vmem:[#allocation7 + $0xc78] sm:$0xff]
          %v5618 = vld [vmem:[#allocation7 + $0xc80] sm:$0xff]
          %v5619 = vld [vmem:[#allocation7 + $0xc88] sm:$0xff]
          %v5620 = vld [vmem:[#allocation7 + $0xc90] sm:$0xff]
          %v5621 = vld [vmem:[#allocation7 + $0xc98] sm:$0xff]
          %v5622 = vld [vmem:[#allocation7 + $0xca0] sm:$0xff]
          %v5623 = vld [vmem:[#allocation7 + $0xca8] sm:$0xff]
          %v5624 = vld [vmem:[#allocation7 + $0xcb0] sm:$0xff]
          %v5625 = vld [vmem:[#allocation7 + $0xcb8] sm:$0xff]
          %v5626 = vld [vmem:[#allocation7 + $0xcc0] sm:$0xff]
          %v5627 = vld [vmem:[#allocation7 + $0xcc8] sm:$0xff]
          %v5628 = vld [vmem:[#allocation7 + $0xcd0] sm:$0xff]
          %v5629 = vld [vmem:[#allocation7 + $0xcd8] sm:$0xff]
          %v5630 = vld [vmem:[#allocation7 + $0xce0] sm:$0xff]
          %v5631 = vld [vmem:[#allocation7 + $0xce8] sm:$0xff]
          %v5632 = vld [vmem:[#allocation7 + $0xcf0] sm:$0xff]
          %v5633 = vld [vmem:[#allocation7 + $0xcf8] sm:$0xff]
          %v5634 = vld [vmem:[#allocation7 + $0xd00] sm:$0xff]
          %v5635 = vld [vmem:[#allocation7 + $0xd08] sm:$0xff]
          %v5636 = vld [vmem:[#allocation7 + $0xd10] sm:$0xff]
          %v5637 = vld [vmem:[#allocation7 + $0xd18] sm:$0xff]
          %v5638 = vld [vmem:[#allocation7 + $0xd20] sm:$0xff]
          %v5639 = vld [vmem:[#allocation7 + $0xd28] sm:$0xff]
          %v5640 = vld [vmem:[#allocation7 + $0xd30] sm:$0xff]
          %v5641 = vld [vmem:[#allocation7 + $0xd38] sm:$0xff]
          %v5642 = vld [vmem:[#allocation7 + $0xd40] sm:$0xff]
          %v5643 = vld [vmem:[#allocation7 + $0xd48] sm:$0xff]
          %v5644 = vld [vmem:[#allocation7 + $0xd50] sm:$0xff]
          %v5645 = vld [vmem:[#allocation7 + $0xd58] sm:$0xff]
          %v5646 = vld [vmem:[#allocation7 + $0xd60] sm:$0xff]
          %v5647 = vld [vmem:[#allocation7 + $0xd68] sm:$0xff]
          %v5648 = vld [vmem:[#allocation7 + $0xd70] sm:$0xff]
          %v5649 = vld [vmem:[#allocation7 + $0xd78] sm:$0xff]
          %v5650 = vld [vmem:[#allocation7 + $0xd80] sm:$0xff]
          %v5651 = vld [vmem:[#allocation7 + $0xd88] sm:$0xff]
          %v5652 = vld [vmem:[#allocation7 + $0xd90] sm:$0xff]
          %v5653 = vld [vmem:[#allocation7 + $0xd98] sm:$0xff]
          %v5654 = vld [vmem:[#allocation7 + $0xda0] sm:$0xff]
          %v5655 = vld [vmem:[#allocation7 + $0xda8] sm:$0xff]
          %v5656 = vld [vmem:[#allocation7 + $0xdb0] sm:$0xff]
          %v5657 = vld [vmem:[#allocation7 + $0xdb8] sm:$0xff]
          %v5658 = vld [vmem:[#allocation7 + $0xdc0] sm:$0xff]
          %v5659 = vld [vmem:[#allocation7 + $0xdc8] sm:$0xff]
          %v5660 = vld [vmem:[#allocation7 + $0xdd0] sm:$0xff]
          %v5661 = vld [vmem:[#allocation7 + $0xdd8] sm:$0xff]
          %v5662 = vld [vmem:[#allocation7 + $0xde0] sm:$0xff]
          %v5663 = vld [vmem:[#allocation7 + $0xde8] sm:$0xff]
          %v5664 = vld [vmem:[#allocation7 + $0xdf0] sm:$0xff]
          %v5665 = vld [vmem:[#allocation7 + $0xdf8] sm:$0xff]
          %v5666 = vld [vmem:[#allocation7 + $0xe00] sm:$0xff]
          %v5667 = vld [vmem:[#allocation7 + $0xe08] sm:$0xff]
          %v5668 = vld [vmem:[#allocation7 + $0xe10] sm:$0xff]
          %v5669 = vld [vmem:[#allocation7 + $0xe18] sm:$0xff]
          %v5670 = vld [vmem:[#allocation7 + $0xe20] sm:$0xff]
          %v5671 = vld [vmem:[#allocation7 + $0xe28] sm:$0xff]
          %v5672 = vld [vmem:[#allocation7 + $0xe30] sm:$0xff]
          %v5673 = vld [vmem:[#allocation7 + $0xe38] sm:$0xff]
          %v5674 = vld [vmem:[#allocation7 + $0xe40] sm:$0xff]
          %v5675 = vld [vmem:[#allocation7 + $0xe48] sm:$0xff]
          %v5676 = vld [vmem:[#allocation7 + $0xe50] sm:$0xff]
          %v5677 = vld [vmem:[#allocation7 + $0xe58] sm:$0xff]
          %v5678 = vld [vmem:[#allocation7 + $0xe60] sm:$0xff]
          %v5679 = vld [vmem:[#allocation7 + $0xe68] sm:$0xff]
          %v5680 = vld [vmem:[#allocation7 + $0xe70] sm:$0xff]
          %v5681 = vld [vmem:[#allocation7 + $0xe78] sm:$0xff]
          %v5682 = vld [vmem:[#allocation7 + $0xe80] sm:$0xff]
          %v5683 = vld [vmem:[#allocation7 + $0xe88] sm:$0xff]
          %v5684 = vld [vmem:[#allocation7 + $0xe90] sm:$0xff]
          %v5685 = vld [vmem:[#allocation7 + $0xe98] sm:$0xff]
          %v5686 = vld [vmem:[#allocation7 + $0xea0] sm:$0xff]
          %v5687 = vld [vmem:[#allocation7 + $0xea8] sm:$0xff]
          %v5688 = vld [vmem:[#allocation7 + $0xeb0] sm:$0xff]
          %v5689 = vld [vmem:[#allocation7 + $0xeb8] sm:$0xff]
          %v5690 = vld [vmem:[#allocation7 + $0xec0] sm:$0xff]
          %v5691 = vld [vmem:[#allocation7 + $0xec8] sm:$0xff]
          %v5692 = vld [vmem:[#allocation7 + $0xed0] sm:$0xff]
          %v5693 = vld [vmem:[#allocation7 + $0xed8] sm:$0xff]
          %v5694 = vld [vmem:[#allocation7 + $0xee0] sm:$0xff]
          %v5695 = vld [vmem:[#allocation7 + $0xee8] sm:$0xff]
          %v5696 = vld [vmem:[#allocation7 + $0xef0] sm:$0xff]
          %v5697 = vld [vmem:[#allocation7 + $0xef8] sm:$0xff]
          %v5698 = vld [vmem:[#allocation7 + $0xf00] sm:$0xff]
          %v5699 = vld [vmem:[#allocation7 + $0xf08] sm:$0xff]
          %v5700 = vld [vmem:[#allocation7 + $0xf10] sm:$0xff]
          %v5701 = vld [vmem:[#allocation7 + $0xf18] sm:$0xff]
          %v5702 = vld [vmem:[#allocation7 + $0xf20] sm:$0xff]
          %v5703 = vld [vmem:[#allocation7 + $0xf28] sm:$0xff]
          %v5704 = vld [vmem:[#allocation7 + $0xf30] sm:$0xff]
          %v5705 = vld [vmem:[#allocation7 + $0xf38] sm:$0xff]
          %v5706 = vld [vmem:[#allocation7 + $0xf40] sm:$0xff]
          %v5707 = vld [vmem:[#allocation7 + $0xf48] sm:$0xff]
          %v5708 = vld [vmem:[#allocation7 + $0xf50] sm:$0xff]
          %v5709 = vld [vmem:[#allocation7 + $0xf58] sm:$0xff]
          %v5710 = vld [vmem:[#allocation7 + $0xf60] sm:$0xff]
          %v5711 = vld [vmem:[#allocation7 + $0xf68] sm:$0xff]
          %v5712 = vld [vmem:[#allocation7 + $0xf70] sm:$0xff]
          %v5713 = vld [vmem:[#allocation7 + $0xf78] sm:$0xff]
          %v5714 = vld [vmem:[#allocation7 + $0xf80] sm:$0xff]
          %v5715 = vld [vmem:[#allocation7 + $0xf88] sm:$0xff]
          %v5716 = vld [vmem:[#allocation7 + $0xf90] sm:$0xff]
          %v5717 = vld [vmem:[#allocation7 + $0xf98] sm:$0xff]
          %v5718 = vld [vmem:[#allocation7 + $0xfa0] sm:$0xff]
          %v5719 = vld [vmem:[#allocation7 + $0xfa8] sm:$0xff]
          %v5720 = vld [vmem:[#allocation7 + $0xfb0] sm:$0xff]
          %v5721 = vld [vmem:[#allocation7 + $0xfb8] sm:$0xff]
          %v5722 = vld [vmem:[#allocation7 + $0xfc0] sm:$0xff]
          %v5723 = vld [vmem:[#allocation7 + $0xfc8] sm:$0xff]
          %v5724 = vld [vmem:[#allocation7 + $0xfd0] sm:$0xff]
          %v5725 = vld [vmem:[#allocation7 + $0xfd8] sm:$0xff]
          %v5726 = vld [vmem:[#allocation7 + $0xfe0] sm:$0xff]
          %v5727 = vld [vmem:[#allocation7 + $0xfe8] sm:$0xff]
          %v5728 = vld [vmem:[#allocation7 + $0xff0] sm:$0xff]
          %v5729 = vld [vmem:[#allocation7 + $0xff8] sm:$0xff]
          %v5858 = vunpack.c.l.b16 %v5602
          %v5859 = vunpack.c.h.b16 %v5602
          %v5860 = vunpack.c.l.b16 %v5603
          %v5861 = vunpack.c.h.b16 %v5603
          %v5862 = vunpack.c.l.b16 %v5604
          %v5863 = vunpack.c.h.b16 %v5604
          %v5864 = vunpack.c.l.b16 %v5605
          %v5865 = vunpack.c.h.b16 %v5605
          %v5866 = vunpack.c.l.b16 %v5606
          %v5867 = vunpack.c.h.b16 %v5606
          %v5868 = vunpack.c.l.b16 %v5607
          %v5869 = vunpack.c.h.b16 %v5607
          %v5870 = vunpack.c.l.b16 %v5608
          %v5871 = vunpack.c.h.b16 %v5608
          %v5872 = vunpack.c.l.b16 %v5609
          %v5873 = vunpack.c.h.b16 %v5609
          %v5874 = vunpack.c.l.b16 %v5610
          %v5875 = vunpack.c.h.b16 %v5610
          %v5876 = vunpack.c.l.b16 %v5611
          %v5877 = vunpack.c.h.b16 %v5611
          %v5878 = vunpack.c.l.b16 %v5612
          %v5879 = vunpack.c.h.b16 %v5612
          %v5880 = vunpack.c.l.b16 %v5613
          %v5881 = vunpack.c.h.b16 %v5613
          %v5882 = vunpack.c.l.b16 %v5614
          %v5883 = vunpack.c.h.b16 %v5614
          %v5884 = vunpack.c.l.b16 %v5615
          %v5885 = vunpack.c.h.b16 %v5615
          %v5886 = vunpack.c.l.b16 %v5616
          %v5887 = vunpack.c.h.b16 %v5616
          %v5888 = vunpack.c.l.b16 %v5617
          %v5889 = vunpack.c.h.b16 %v5617
          %v5890 = vunpack.c.l.b16 %v5618
          %v5891 = vunpack.c.h.b16 %v5618
          %v5892 = vunpack.c.l.b16 %v5619
          %v5893 = vunpack.c.h.b16 %v5619
          %v5894 = vunpack.c.l.b16 %v5620
          %v5895 = vunpack.c.h.b16 %v5620
          %v5896 = vunpack.c.l.b16 %v5621
          %v5897 = vunpack.c.h.b16 %v5621
          %v5898 = vunpack.c.l.b16 %v5622
          %v5899 = vunpack.c.h.b16 %v5622
          %v5900 = vunpack.c.l.b16 %v5623
          %v5901 = vunpack.c.h.b16 %v5623
          %v5902 = vunpack.c.l.b16 %v5624
          %v5903 = vunpack.c.h.b16 %v5624
          %v5904 = vunpack.c.l.b16 %v5625
          %v5905 = vunpack.c.h.b16 %v5625
          %v5906 = vunpack.c.l.b16 %v5626
          %v5907 = vunpack.c.h.b16 %v5626
          %v5908 = vunpack.c.l.b16 %v5627
          %v5909 = vunpack.c.h.b16 %v5627
          %v5910 = vunpack.c.l.b16 %v5628
          %v5911 = vunpack.c.h.b16 %v5628
          %v5912 = vunpack.c.l.b16 %v5629
          %v5913 = vunpack.c.h.b16 %v5629
          %v5914 = vunpack.c.l.b16 %v5630
          %v5915 = vunpack.c.h.b16 %v5630
          %v5916 = vunpack.c.l.b16 %v5631
          %v5917 = vunpack.c.h.b16 %v5631
          %v5918 = vunpack.c.l.b16 %v5632
          %v5919 = vunpack.c.h.b16 %v5632
          %v5920 = vunpack.c.l.b16 %v5633
          %v5921 = vunpack.c.h.b16 %v5633
          %v5922 = vunpack.c.l.b16 %v5634
          %v5923 = vunpack.c.h.b16 %v5634
          %v5924 = vunpack.c.l.b16 %v5635
          %v5925 = vunpack.c.h.b16 %v5635
          %v5926 = vunpack.c.l.b16 %v5636
          %v5927 = vunpack.c.h.b16 %v5636
          %v5928 = vunpack.c.l.b16 %v5637
          %v5929 = vunpack.c.h.b16 %v5637
          %v5930 = vunpack.c.l.b16 %v5638
          %v5931 = vunpack.c.h.b16 %v5638
          %v5932 = vunpack.c.l.b16 %v5639
          %v5933 = vunpack.c.h.b16 %v5639
          %v5934 = vunpack.c.l.b16 %v5640
          %v5935 = vunpack.c.h.b16 %v5640
          %v5936 = vunpack.c.l.b16 %v5641
          %v5937 = vunpack.c.h.b16 %v5641
          %v5938 = vunpack.c.l.b16 %v5642
          %v5939 = vunpack.c.h.b16 %v5642
          %v5940 = vunpack.c.l.b16 %v5643
          %v5941 = vunpack.c.h.b16 %v5643
          %v5942 = vunpack.c.l.b16 %v5644
          %v5943 = vunpack.c.h.b16 %v5644
          %v5944 = vunpack.c.l.b16 %v5645
          %v5945 = vunpack.c.h.b16 %v5645
          %v5946 = vunpack.c.l.b16 %v5646
          %v5947 = vunpack.c.h.b16 %v5646
          %v5948 = vunpack.c.l.b16 %v5647
          %v5949 = vunpack.c.h.b16 %v5647
          %v5950 = vunpack.c.l.b16 %v5648
          %v5951 = vunpack.c.h.b16 %v5648
          %v5952 = vunpack.c.l.b16 %v5649
          %v5953 = vunpack.c.h.b16 %v5649
          %v5954 = vunpack.c.l.b16 %v5650
          %v5955 = vunpack.c.h.b16 %v5650
          %v5956 = vunpack.c.l.b16 %v5651
          %v5957 = vunpack.c.h.b16 %v5651
          %v5958 = vunpack.c.l.b16 %v5652
          %v5959 = vunpack.c.h.b16 %v5652
          %v5960 = vunpack.c.l.b16 %v5653
          %v5961 = vunpack.c.h.b16 %v5653
          %v5962 = vunpack.c.l.b16 %v5654
          %v5963 = vunpack.c.h.b16 %v5654
          %v5964 = vunpack.c.l.b16 %v5655
          %v5965 = vunpack.c.h.b16 %v5655
          %v5966 = vunpack.c.l.b16 %v5656
          %v5967 = vunpack.c.h.b16 %v5656
          %v5968 = vunpack.c.l.b16 %v5657
          %v5969 = vunpack.c.h.b16 %v5657
          %v5970 = vunpack.c.l.b16 %v5658
          %v5971 = vunpack.c.h.b16 %v5658
          %v5972 = vunpack.c.l.b16 %v5659
          %v5973 = vunpack.c.h.b16 %v5659
          %v5974 = vunpack.c.l.b16 %v5660
          %v5975 = vunpack.c.h.b16 %v5660
          %v5976 = vunpack.c.l.b16 %v5661
          %v5977 = vunpack.c.h.b16 %v5661
          %v5978 = vunpack.c.l.b16 %v5662
          %v5979 = vunpack.c.h.b16 %v5662
          %v5980 = vunpack.c.l.b16 %v5663
          %v5981 = vunpack.c.h.b16 %v5663
          %v5982 = vunpack.c.l.b16 %v5664
          %v5983 = vunpack.c.h.b16 %v5664
          %v5984 = vunpack.c.l.b16 %v5665
          %v5985 = vunpack.c.h.b16 %v5665
          %v5986 = vunpack.c.l.b16 %v5666
          %v5987 = vunpack.c.h.b16 %v5666
          %v5988 = vunpack.c.l.b16 %v5667
          %v5989 = vunpack.c.h.b16 %v5667
          %v5990 = vunpack.c.l.b16 %v5668
          %v5991 = vunpack.c.h.b16 %v5668
          %v5992 = vunpack.c.l.b16 %v5669
          %v5993 = vunpack.c.h.b16 %v5669
          %v5994 = vunpack.c.l.b16 %v5670
          %v5995 = vunpack.c.h.b16 %v5670
          %v5996 = vunpack.c.l.b16 %v5671
          %v5997 = vunpack.c.h.b16 %v5671
          %v5998 = vunpack.c.l.b16 %v5672
          %v5999 = vunpack.c.h.b16 %v5672
          %v6000 = vunpack.c.l.b16 %v5673
          %v6001 = vunpack.c.h.b16 %v5673
          %v6002 = vunpack.c.l.b16 %v5674
          %v6003 = vunpack.c.h.b16 %v5674
          %v6004 = vunpack.c.l.b16 %v5675
          %v6005 = vunpack.c.h.b16 %v5675
          %v6006 = vunpack.c.l.b16 %v5676
          %v6007 = vunpack.c.h.b16 %v5676
          %v6008 = vunpack.c.l.b16 %v5677
          %v6009 = vunpack.c.h.b16 %v5677
          %v6010 = vunpack.c.l.b16 %v5678
          %v6011 = vunpack.c.h.b16 %v5678
          %v6012 = vunpack.c.l.b16 %v5679
          %v6013 = vunpack.c.h.b16 %v5679
          %v6014 = vunpack.c.l.b16 %v5680
          %v6015 = vunpack.c.h.b16 %v5680
          %v6016 = vunpack.c.l.b16 %v5681
          %v6017 = vunpack.c.h.b16 %v5681
          %v6018 = vunpack.c.l.b16 %v5682
          %v6019 = vunpack.c.h.b16 %v5682
          %v6020 = vunpack.c.l.b16 %v5683
          %v6021 = vunpack.c.h.b16 %v5683
          %v6022 = vunpack.c.l.b16 %v5684
          %v6023 = vunpack.c.h.b16 %v5684
          %v6024 = vunpack.c.l.b16 %v5685
          %v6025 = vunpack.c.h.b16 %v5685
          %v6026 = vunpack.c.l.b16 %v5686
          %v6027 = vunpack.c.h.b16 %v5686
          %v6028 = vunpack.c.l.b16 %v5687
          %v6029 = vunpack.c.h.b16 %v5687
          %v6030 = vunpack.c.l.b16 %v5688
          %v6031 = vunpack.c.h.b16 %v5688
          %v6032 = vunpack.c.l.b16 %v5689
          %v6033 = vunpack.c.h.b16 %v5689
          %v6034 = vunpack.c.l.b16 %v5690
          %v6035 = vunpack.c.h.b16 %v5690
          %v6036 = vunpack.c.l.b16 %v5691
          %v6037 = vunpack.c.h.b16 %v5691
          %v6038 = vunpack.c.l.b16 %v5692
          %v6039 = vunpack.c.h.b16 %v5692
          %v6040 = vunpack.c.l.b16 %v5693
          %v6041 = vunpack.c.h.b16 %v5693
          %v6042 = vunpack.c.l.b16 %v5694
          %v6043 = vunpack.c.h.b16 %v5694
          %v6044 = vunpack.c.l.b16 %v5695
          %v6045 = vunpack.c.h.b16 %v5695
          %v6046 = vunpack.c.l.b16 %v5696
          %v6047 = vunpack.c.h.b16 %v5696
          %v6048 = vunpack.c.l.b16 %v5697
          %v6049 = vunpack.c.h.b16 %v5697
          %v6050 = vunpack.c.l.b16 %v5698
          %v6051 = vunpack.c.h.b16 %v5698
          %v6052 = vunpack.c.l.b16 %v5699
          %v6053 = vunpack.c.h.b16 %v5699
          %v6054 = vunpack.c.l.b16 %v5700
          %v6055 = vunpack.c.h.b16 %v5700
          %v6056 = vunpack.c.l.b16 %v5701
          %v6057 = vunpack.c.h.b16 %v5701
          %v6058 = vunpack.c.l.b16 %v5702
          %v6059 = vunpack.c.h.b16 %v5702
          %v6060 = vunpack.c.l.b16 %v5703
          %v6061 = vunpack.c.h.b16 %v5703
          %v6062 = vunpack.c.l.b16 %v5704
          %v6063 = vunpack.c.h.b16 %v5704
          %v6064 = vunpack.c.l.b16 %v5705
          %v6065 = vunpack.c.h.b16 %v5705
          %v6066 = vunpack.c.l.b16 %v5706
          %v6067 = vunpack.c.h.b16 %v5706
          %v6068 = vunpack.c.l.b16 %v5707
          %v6069 = vunpack.c.h.b16 %v5707
          %v6070 = vunpack.c.l.b16 %v5708
          %v6071 = vunpack.c.h.b16 %v5708
          %v6072 = vunpack.c.l.b16 %v5709
          %v6073 = vunpack.c.h.b16 %v5709
          %v6074 = vunpack.c.l.b16 %v5710
          %v6075 = vunpack.c.h.b16 %v5710
          %v6076 = vunpack.c.l.b16 %v5711
          %v6077 = vunpack.c.h.b16 %v5711
          %v6078 = vunpack.c.l.b16 %v5712
          %v6079 = vunpack.c.h.b16 %v5712
          %v6080 = vunpack.c.l.b16 %v5713
          %v6081 = vunpack.c.h.b16 %v5713
          %v6082 = vunpack.c.l.b16 %v5714
          %v6083 = vunpack.c.h.b16 %v5714
          %v6084 = vunpack.c.l.b16 %v5715
          %v6085 = vunpack.c.h.b16 %v5715
          %v6086 = vunpack.c.l.b16 %v5716
          %v6087 = vunpack.c.h.b16 %v5716
          %v6088 = vunpack.c.l.b16 %v5717
          %v6089 = vunpack.c.h.b16 %v5717
          %v6090 = vunpack.c.l.b16 %v5718
          %v6091 = vunpack.c.h.b16 %v5718
          %v6092 = vunpack.c.l.b16 %v5719
          %v6093 = vunpack.c.h.b16 %v5719
          %v6094 = vunpack.c.l.b16 %v5720
          %v6095 = vunpack.c.h.b16 %v5720
          %v6096 = vunpack.c.l.b16 %v5721
          %v6097 = vunpack.c.h.b16 %v5721
          %v6098 = vunpack.c.l.b16 %v5722
          %v6099 = vunpack.c.h.b16 %v5722
          %v6100 = vunpack.c.l.b16 %v5723
          %v6101 = vunpack.c.h.b16 %v5723
          %v6102 = vunpack.c.l.b16 %v5724
          %v6103 = vunpack.c.h.b16 %v5724
          %v6104 = vunpack.c.l.b16 %v5725
          %v6105 = vunpack.c.h.b16 %v5725
          %v6106 = vunpack.c.l.b16 %v5726
          %v6107 = vunpack.c.h.b16 %v5726
          %v6108 = vunpack.c.l.b16 %v5727
          %v6109 = vunpack.c.h.b16 %v5727
          %v6110 = vunpack.c.l.b16 %v5728
          %v6111 = vunpack.c.h.b16 %v5728
          %v6112 = vunpack.c.l.b16 %v5729
          %v6113 = vunpack.c.h.b16 %v5729
          %v6114 = vpack.c.b16 %v5862, %v5858
          %v6115 = vpack.c.b16 %v5863, %v5859
          %v6116 = vpack.c.b16 %v5864, %v5860
          %v6117 = vpack.c.b16 %v5865, %v5861
          %v6118 = vpack.c.b16 %v5870, %v5866
          %v6119 = vpack.c.b16 %v5871, %v5867
          %v6120 = vpack.c.b16 %v5872, %v5868
          %v6121 = vpack.c.b16 %v5873, %v5869
          %v6122 = vpack.c.b16 %v5878, %v5874
          %v6123 = vpack.c.b16 %v5879, %v5875
          %v6124 = vpack.c.b16 %v5880, %v5876
          %v6125 = vpack.c.b16 %v5881, %v5877
          %v6126 = vpack.c.b16 %v5886, %v5882
          %v6127 = vpack.c.b16 %v5887, %v5883
          %v6128 = vpack.c.b16 %v5888, %v5884
          %v6129 = vpack.c.b16 %v5889, %v5885
          %v6130 = vpack.c.b16 %v5894, %v5890
          %v6131 = vpack.c.b16 %v5895, %v5891
          %v6132 = vpack.c.b16 %v5896, %v5892
          %v6133 = vpack.c.b16 %v5897, %v5893
          %v6134 = vpack.c.b16 %v5902, %v5898
          %v6135 = vpack.c.b16 %v5903, %v5899
          %v6136 = vpack.c.b16 %v5904, %v5900
          %v6137 = vpack.c.b16 %v5905, %v5901
          %v6138 = vpack.c.b16 %v5910, %v5906
          %v6139 = vpack.c.b16 %v5911, %v5907
          %v6140 = vpack.c.b16 %v5912, %v5908
          %v6141 = vpack.c.b16 %v5913, %v5909
          %v6142 = vpack.c.b16 %v5918, %v5914
          %v6143 = vpack.c.b16 %v5919, %v5915
          %v6144 = vpack.c.b16 %v5920, %v5916
          %v6145 = vpack.c.b16 %v5921, %v5917
          %v6146 = vpack.c.b16 %v5926, %v5922
          %v6147 = vpack.c.b16 %v5927, %v5923
          %v6148 = vpack.c.b16 %v5928, %v5924
          %v6149 = vpack.c.b16 %v5929, %v5925
          %v6150 = vpack.c.b16 %v5934, %v5930
          %v6151 = vpack.c.b16 %v5935, %v5931
          %v6152 = vpack.c.b16 %v5936, %v5932
          %v6153 = vpack.c.b16 %v5937, %v5933
          %v6154 = vpack.c.b16 %v5942, %v5938
          %v6155 = vpack.c.b16 %v5943, %v5939
          %v6156 = vpack.c.b16 %v5944, %v5940
          %v6157 = vpack.c.b16 %v5945, %v5941
          %v6158 = vpack.c.b16 %v5950, %v5946
          %v6159 = vpack.c.b16 %v5951, %v5947
          %v6160 = vpack.c.b16 %v5952, %v5948
          %v6161 = vpack.c.b16 %v5953, %v5949
          %v6162 = vpack.c.b16 %v5958, %v5954
          %v6163 = vpack.c.b16 %v5959, %v5955
          %v6164 = vpack.c.b16 %v5960, %v5956
          %v6165 = vpack.c.b16 %v5961, %v5957
          %v6166 = vpack.c.b16 %v5966, %v5962
          %v6167 = vpack.c.b16 %v5967, %v5963
          %v6168 = vpack.c.b16 %v5968, %v5964
          %v6169 = vpack.c.b16 %v5969, %v5965
          %v6170 = vpack.c.b16 %v5974, %v5970
          %v6171 = vpack.c.b16 %v5975, %v5971
          %v6172 = vpack.c.b16 %v5976, %v5972
          %v6173 = vpack.c.b16 %v5977, %v5973
          %v6174 = vpack.c.b16 %v5982, %v5978
          %v6175 = vpack.c.b16 %v5983, %v5979
          %v6176 = vpack.c.b16 %v5984, %v5980
          %v6177 = vpack.c.b16 %v5985, %v5981
          %v6178 = vpack.c.b16 %v5990, %v5986
          %v6179 = vpack.c.b16 %v5991, %v5987
          %v6180 = vpack.c.b16 %v5992, %v5988
          %v6181 = vpack.c.b16 %v5993, %v5989
          %v6182 = vpack.c.b16 %v5998, %v5994
          %v6183 = vpack.c.b16 %v5999, %v5995
          %v6184 = vpack.c.b16 %v6000, %v5996
          %v6185 = vpack.c.b16 %v6001, %v5997
          %v6186 = vpack.c.b16 %v6006, %v6002
          %v6187 = vpack.c.b16 %v6007, %v6003
          %v6188 = vpack.c.b16 %v6008, %v6004
          %v6189 = vpack.c.b16 %v6009, %v6005
          %v6190 = vpack.c.b16 %v6014, %v6010
          %v6191 = vpack.c.b16 %v6015, %v6011
          %v6192 = vpack.c.b16 %v6016, %v6012
          %v6193 = vpack.c.b16 %v6017, %v6013
          %v6194 = vpack.c.b16 %v6022, %v6018
          %v6195 = vpack.c.b16 %v6023, %v6019
          %v6196 = vpack.c.b16 %v6024, %v6020
          %v6197 = vpack.c.b16 %v6025, %v6021
          %v6198 = vpack.c.b16 %v6030, %v6026
          %v6199 = vpack.c.b16 %v6031, %v6027
          %v6200 = vpack.c.b16 %v6032, %v6028
          %v6201 = vpack.c.b16 %v6033, %v6029
          %v6202 = vpack.c.b16 %v6038, %v6034
          %v6203 = vpack.c.b16 %v6039, %v6035
          %v6204 = vpack.c.b16 %v6040, %v6036
          %v6205 = vpack.c.b16 %v6041, %v6037
          %v6206 = vpack.c.b16 %v6046, %v6042
          %v6207 = vpack.c.b16 %v6047, %v6043
          %v6208 = vpack.c.b16 %v6048, %v6044
          %v6209 = vpack.c.b16 %v6049, %v6045
          %v6210 = vpack.c.b16 %v6054, %v6050
          %v6211 = vpack.c.b16 %v6055, %v6051
          %v6212 = vpack.c.b16 %v6056, %v6052
          %v6213 = vpack.c.b16 %v6057, %v6053
          %v6214 = vpack.c.b16 %v6062, %v6058
          %v6215 = vpack.c.b16 %v6063, %v6059
          %v6216 = vpack.c.b16 %v6064, %v6060
          %v6217 = vpack.c.b16 %v6065, %v6061
          %v6218 = vpack.c.b16 %v6070, %v6066
          %v6219 = vpack.c.b16 %v6071, %v6067
          %v6220 = vpack.c.b16 %v6072, %v6068
          %v6221 = vpack.c.b16 %v6073, %v6069
          %v6222 = vpack.c.b16 %v6078, %v6074
          %v6223 = vpack.c.b16 %v6079, %v6075
          %v6224 = vpack.c.b16 %v6080, %v6076
          %v6225 = vpack.c.b16 %v6081, %v6077
          %v6226 = vpack.c.b16 %v6086, %v6082
          %v6227 = vpack.c.b16 %v6087, %v6083
          %v6228 = vpack.c.b16 %v6088, %v6084
          %v6229 = vpack.c.b16 %v6089, %v6085
          %v6230 = vpack.c.b16 %v6094, %v6090
          %v6231 = vpack.c.b16 %v6095, %v6091
          %v6232 = vpack.c.b16 %v6096, %v6092
          %v6233 = vpack.c.b16 %v6097, %v6093
          %v6234 = vpack.c.b16 %v6102, %v6098
          %v6235 = vpack.c.b16 %v6103, %v6099
          %v6236 = vpack.c.b16 %v6104, %v6100
          %v6237 = vpack.c.b16 %v6105, %v6101
          %v6238 = vpack.c.b16 %v6110, %v6106
          %v6239 = vpack.c.b16 %v6111, %v6107
          %v6240 = vpack.c.b16 %v6112, %v6108
          %v6241 = vpack.c.b16 %v6113, %v6109
          %6370 = vmatpush.bf16.msra.mxu0 %v6142
          %6371 = vmatpush.bf16.msra.mxu0 %v6138
          %6372 = vmatpush.bf16.msra.mxu0 %v6134
          %6373 = vmatpush.bf16.msra.mxu0 %v6130
          %6374 = vmatpush.bf16.msra.mxu0 %v6126
          %6375 = vmatpush.bf16.msra.mxu0 %v6122
          %6376 = vmatpush.bf16.msra.mxu0 %v6118
          %6377 = vmatpush.bf16.msra.mxu0 %v6114
          %6378 = vmatmul.bf16.gmra.mxu0 %v5590
          %v6379 = vpop.f32.mrf.mxu0
          %v6380 = vadd.f32 0.0, %v6379
          %v6381 = vpop.f32.mrf.mxu0
          %v6382 = vadd.f32 0.0, %v6381
          %6383 = vmatmul.bf16.gmra.mxu0 %v5594
          %v6384 = vpop.f32.mrf.mxu0
          %v6385 = vadd.f32 0.0, %v6384
          %v6386 = vpop.f32.mrf.mxu0
          %v6387 = vadd.f32 0.0, %v6386
          %6388 = vmatmul.bf16.gmra.mxu0 %v5598
          %v6389 = vpop.f32.mrf.mxu0
          %v6390 = vadd.f32 0.0, %v6389
          %v6391 = vpop.f32.mrf.mxu0
          %v6392 = vadd.f32 0.0, %v6391
          %6393 = vdwg.mxu0
          %6394 = vmatpush.bf16.msra.mxu0 %v6174
          %6395 = vmatpush.bf16.msra.mxu0 %v6170
          %6396 = vmatpush.bf16.msra.mxu0 %v6166
          %6397 = vmatpush.bf16.msra.mxu0 %v6162
          %6398 = vmatpush.bf16.msra.mxu0 %v6158
          %6399 = vmatpush.bf16.msra.mxu0 %v6154
          %6400 = vmatpush.bf16.msra.mxu0 %v6150
          %6401 = vmatpush.bf16.msra.mxu0 %v6146
          %6402 = vmatmul.bf16.gmra.mxu0 %v5591
          %v6403 = vpop.f32.mrf.mxu0
          %v6404 = vadd.f32 %v6380, %v6403
          %v6405 = vpop.f32.mrf.mxu0
          %v6406 = vadd.f32 %v6382, %v6405
          %6407 = vmatmul.bf16.gmra.mxu0 %v5595
          %v6408 = vpop.f32.mrf.mxu0
          %v6409 = vadd.f32 %v6385, %v6408
          %v6410 = vpop.f32.mrf.mxu0
          %v6411 = vadd.f32 %v6387, %v6410
          %6412 = vmatmul.bf16.gmra.mxu0 %v5599
          %v6413 = vpop.f32.mrf.mxu0
          %v6414 = vadd.f32 %v6390, %v6413
          %v6415 = vpop.f32.mrf.mxu0
          %v6416 = vadd.f32 %v6392, %v6415
          %6417 = vdwg.mxu0
          %6418 = vmatpush.bf16.msra.mxu0 %v6206
          %6419 = vmatpush.bf16.msra.mxu0 %v6202
          %6420 = vmatpush.bf16.msra.mxu0 %v6198
          %6421 = vmatpush.bf16.msra.mxu0 %v6194
          %6422 = vmatpush.bf16.msra.mxu0 %v6190
          %6423 = vmatpush.bf16.msra.mxu0 %v6186
          %6424 = vmatpush.bf16.msra.mxu0 %v6182
          %6425 = vmatpush.bf16.msra.mxu0 %v6178
          %6426 = vmatmul.bf16.gmra.mxu0 %v5592
          %v6427 = vpop.f32.mrf.mxu0
          %v6428 = vadd.f32 %v6404, %v6427
          %v6429 = vpop.f32.mrf.mxu0
          %v6430 = vadd.f32 %v6406, %v6429
          %6431 = vmatmul.bf16.gmra.mxu0 %v5596
          %v6432 = vpop.f32.mrf.mxu0
          %v6433 = vadd.f32 %v6409, %v6432
          %v6434 = vpop.f32.mrf.mxu0
          %v6435 = vadd.f32 %v6411, %v6434
          %6436 = vmatmul.bf16.gmra.mxu0 %v5600
          %v6437 = vpop.f32.mrf.mxu0
          %v6438 = vadd.f32 %v6414, %v6437
          %v6439 = vpop.f32.mrf.mxu0
          %v6440 = vadd.f32 %v6416, %v6439
          %6441 = vdwg.mxu0
          %6442 = vmatpush.bf16.msra.mxu0 %v6238
          %6443 = vmatpush.bf16.msra.mxu0 %v6234
          %6444 = vmatpush.bf16.msra.mxu0 %v6230
          %6445 = vmatpush.bf16.msra.mxu0 %v6226
          %6446 = vmatpush.bf16.msra.mxu0 %v6222
          %6447 = vmatpush.bf16.msra.mxu0 %v6218
          %6448 = vmatpush.bf16.msra.mxu0 %v6214
          %6449 = vmatpush.bf16.msra.mxu0 %v6210
          %6450 = vmatmul.bf16.gmra.mxu0 %v5593
          %v6451 = vpop.f32.mrf.mxu0
          %v6452 = vadd.f32 %v6428, %v6451
          %v6453 = vpop.f32.mrf.mxu0
          %v6454 = vadd.f32 %v6430, %v6453
          %6455 = vmatmul.bf16.gmra.mxu0 %v5597
          %v6456 = vpop.f32.mrf.mxu0
          %v6457 = vadd.f32 %v6433, %v6456
          %v6458 = vpop.f32.mrf.mxu0
          %v6459 = vadd.f32 %v6435, %v6458
          %6460 = vmatmul.bf16.gmra.mxu0 %v5601
          %v6461 = vpop.f32.mrf.mxu0
          %v6462 = vadd.f32 %v6438, %v6461
          %v6463 = vpop.f32.mrf.mxu0
          %v6464 = vadd.f32 %v6440, %v6463
          %6465 = vdwg.mxu0
          %6466 = vmatpush.bf16.msra.mxu0 %v6143
          %6467 = vmatpush.bf16.msra.mxu0 %v6139
          %6468 = vmatpush.bf16.msra.mxu0 %v6135
          %6469 = vmatpush.bf16.msra.mxu0 %v6131
          %6470 = vmatpush.bf16.msra.mxu0 %v6127
          %6471 = vmatpush.bf16.msra.mxu0 %v6123
          %6472 = vmatpush.bf16.msra.mxu0 %v6119
          %6473 = vmatpush.bf16.msra.mxu0 %v6115
          %6474 = vmatmul.bf16.gmra.mxu0 %v5590
          %v6475 = vpop.f32.mrf.mxu0
          %v6476 = vadd.f32 0.0, %v6475
          %v6477 = vpop.f32.mrf.mxu0
          %v6478 = vadd.f32 0.0, %v6477
          %6479 = vmatmul.bf16.gmra.mxu0 %v5594
          %v6480 = vpop.f32.mrf.mxu0
          %v6481 = vadd.f32 0.0, %v6480
          %v6482 = vpop.f32.mrf.mxu0
          %v6483 = vadd.f32 0.0, %v6482
          %6484 = vmatmul.bf16.gmra.mxu0 %v5598
          %v6485 = vpop.f32.mrf.mxu0
          %v6486 = vadd.f32 0.0, %v6485
          %v6487 = vpop.f32.mrf.mxu0
          %v6488 = vadd.f32 0.0, %v6487
          %6489 = vdwg.mxu0
          %6490 = vmatpush.bf16.msra.mxu0 %v6175
          %6491 = vmatpush.bf16.msra.mxu0 %v6171
          %6492 = vmatpush.bf16.msra.mxu0 %v6167
          %6493 = vmatpush.bf16.msra.mxu0 %v6163
          %6494 = vmatpush.bf16.msra.mxu0 %v6159
          %6495 = vmatpush.bf16.msra.mxu0 %v6155
          %6496 = vmatpush.bf16.msra.mxu0 %v6151
          %6497 = vmatpush.bf16.msra.mxu0 %v6147
          %6498 = vmatmul.bf16.gmra.mxu0 %v5591
          %v6499 = vpop.f32.mrf.mxu0
          %v6500 = vadd.f32 %v6476, %v6499
          %v6501 = vpop.f32.mrf.mxu0
          %v6502 = vadd.f32 %v6478, %v6501
          %6503 = vmatmul.bf16.gmra.mxu0 %v5595
          %v6504 = vpop.f32.mrf.mxu0
          %v6505 = vadd.f32 %v6481, %v6504
          %v6506 = vpop.f32.mrf.mxu0
          %v6507 = vadd.f32 %v6483, %v6506
          %6508 = vmatmul.bf16.gmra.mxu0 %v5599
          %v6509 = vpop.f32.mrf.mxu0
          %v6510 = vadd.f32 %v6486, %v6509
          %v6511 = vpop.f32.mrf.mxu0
          %v6512 = vadd.f32 %v6488, %v6511
          %6513 = vdwg.mxu0
          %6514 = vmatpush.bf16.msra.mxu0 %v6207
          %6515 = vmatpush.bf16.msra.mxu0 %v6203
          %6516 = vmatpush.bf16.msra.mxu0 %v6199
          %6517 = vmatpush.bf16.msra.mxu0 %v6195
          %6518 = vmatpush.bf16.msra.mxu0 %v6191
          %6519 = vmatpush.bf16.msra.mxu0 %v6187
          %6520 = vmatpush.bf16.msra.mxu0 %v6183
          %6521 = vmatpush.bf16.msra.mxu0 %v6179
          %6522 = vmatmul.bf16.gmra.mxu0 %v5592
          %v6523 = vpop.f32.mrf.mxu0
          %v6524 = vadd.f32 %v6500, %v6523
          %v6525 = vpop.f32.mrf.mxu0
          %v6526 = vadd.f32 %v6502, %v6525
          %6527 = vmatmul.bf16.gmra.mxu0 %v5596
          %v6528 = vpop.f32.mrf.mxu0
          %v6529 = vadd.f32 %v6505, %v6528
          %v6530 = vpop.f32.mrf.mxu0
          %v6531 = vadd.f32 %v6507, %v6530
          %6532 = vmatmul.bf16.gmra.mxu0 %v5600
          %v6533 = vpop.f32.mrf.mxu0
          %v6534 = vadd.f32 %v6510, %v6533
          %v6535 = vpop.f32.mrf.mxu0
          %v6536 = vadd.f32 %v6512, %v6535
          %6537 = vdwg.mxu0
          %6538 = vmatpush.bf16.msra.mxu0 %v6239
          %6539 = vmatpush.bf16.msra.mxu0 %v6235
          %6540 = vmatpush.bf16.msra.mxu0 %v6231
          %6541 = vmatpush.bf16.msra.mxu0 %v6227
          %6542 = vmatpush.bf16.msra.mxu0 %v6223
          %6543 = vmatpush.bf16.msra.mxu0 %v6219
          %6544 = vmatpush.bf16.msra.mxu0 %v6215
          %6545 = vmatpush.bf16.msra.mxu0 %v6211
          %6546 = vmatmul.bf16.gmra.mxu0 %v5593
          %v6547 = vpop.f32.mrf.mxu0
          %v6548 = vadd.f32 %v6524, %v6547
          %v6549 = vpop.f32.mrf.mxu0
          %v6550 = vadd.f32 %v6526, %v6549
          %6551 = vmatmul.bf16.gmra.mxu0 %v5597
          %v6552 = vpop.f32.mrf.mxu0
          %v6553 = vadd.f32 %v6529, %v6552
          %v6554 = vpop.f32.mrf.mxu0
          %v6555 = vadd.f32 %v6531, %v6554
          %6556 = vmatmul.bf16.gmra.mxu0 %v5601
          %v6557 = vpop.f32.mrf.mxu0
          %v6558 = vadd.f32 %v6534, %v6557
          %v6559 = vpop.f32.mrf.mxu0
          %v6560 = vadd.f32 %v6536, %v6559
          %6561 = vdwg.mxu0
          %6562 = vmatpush.bf16.msra.mxu0 %v6144
          %6563 = vmatpush.bf16.msra.mxu0 %v6140
          %6564 = vmatpush.bf16.msra.mxu0 %v6136
          %6565 = vmatpush.bf16.msra.mxu0 %v6132
          %6566 = vmatpush.bf16.msra.mxu0 %v6128
          %6567 = vmatpush.bf16.msra.mxu0 %v6124
          %6568 = vmatpush.bf16.msra.mxu0 %v6120
          %6569 = vmatpush.bf16.msra.mxu0 %v6116
          %6570 = vmatmul.bf16.gmra.mxu0 %v5590
          %v6571 = vpop.f32.mrf.mxu0
          %v6572 = vadd.f32 0.0, %v6571
          %v6573 = vpop.f32.mrf.mxu0
          %v6574 = vadd.f32 0.0, %v6573
          %6575 = vmatmul.bf16.gmra.mxu0 %v5594
          %v6576 = vpop.f32.mrf.mxu0
          %v6577 = vadd.f32 0.0, %v6576
          %v6578 = vpop.f32.mrf.mxu0
          %v6579 = vadd.f32 0.0, %v6578
          %6580 = vmatmul.bf16.gmra.mxu0 %v5598
          %v6581 = vpop.f32.mrf.mxu0
          %v6582 = vadd.f32 0.0, %v6581
          %v6583 = vpop.f32.mrf.mxu0
          %v6584 = vadd.f32 0.0, %v6583
          %6585 = vdwg.mxu0
          %6586 = vmatpush.bf16.msra.mxu0 %v6176
          %6587 = vmatpush.bf16.msra.mxu0 %v6172
          %6588 = vmatpush.bf16.msra.mxu0 %v6168
          %6589 = vmatpush.bf16.msra.mxu0 %v6164
          %6590 = vmatpush.bf16.msra.mxu0 %v6160
          %6591 = vmatpush.bf16.msra.mxu0 %v6156
          %6592 = vmatpush.bf16.msra.mxu0 %v6152
          %6593 = vmatpush.bf16.msra.mxu0 %v6148
          %6594 = vmatmul.bf16.gmra.mxu0 %v5591
          %v6595 = vpop.f32.mrf.mxu0
          %v6596 = vadd.f32 %v6572, %v6595
          %v6597 = vpop.f32.mrf.mxu0
          %v6598 = vadd.f32 %v6574, %v6597
          %6599 = vmatmul.bf16.gmra.mxu0 %v5595
          %v6600 = vpop.f32.mrf.mxu0
          %v6601 = vadd.f32 %v6577, %v6600
          %v6602 = vpop.f32.mrf.mxu0
          %v6603 = vadd.f32 %v6579, %v6602
          %6604 = vmatmul.bf16.gmra.mxu0 %v5599
          %v6605 = vpop.f32.mrf.mxu0
          %v6606 = vadd.f32 %v6582, %v6605
          %v6607 = vpop.f32.mrf.mxu0
          %v6608 = vadd.f32 %v6584, %v6607
          %6609 = vdwg.mxu0
          %6610 = vmatpush.bf16.msra.mxu0 %v6208
          %6611 = vmatpush.bf16.msra.mxu0 %v6204
          %6612 = vmatpush.bf16.msra.mxu0 %v6200
          %6613 = vmatpush.bf16.msra.mxu0 %v6196
          %6614 = vmatpush.bf16.msra.mxu0 %v6192
          %6615 = vmatpush.bf16.msra.mxu0 %v6188
          %6616 = vmatpush.bf16.msra.mxu0 %v6184
          %6617 = vmatpush.bf16.msra.mxu0 %v6180
          %6618 = vmatmul.bf16.gmra.mxu0 %v5592
          %v6619 = vpop.f32.mrf.mxu0
          %v6620 = vadd.f32 %v6596, %v6619
          %v6621 = vpop.f32.mrf.mxu0
          %v6622 = vadd.f32 %v6598, %v6621
          %6623 = vmatmul.bf16.gmra.mxu0 %v5596
          %v6624 = vpop.f32.mrf.mxu0
          %v6625 = vadd.f32 %v6601, %v6624
          %v6626 = vpop.f32.mrf.mxu0
          %v6627 = vadd.f32 %v6603, %v6626
          %6628 = vmatmul.bf16.gmra.mxu0 %v5600
          %v6629 = vpop.f32.mrf.mxu0
          %v6630 = vadd.f32 %v6606, %v6629
          %v6631 = vpop.f32.mrf.mxu0
          %v6632 = vadd.f32 %v6608, %v6631
          %6633 = vdwg.mxu0
          %6634 = vmatpush.bf16.msra.mxu0 %v6240
          %6635 = vmatpush.bf16.msra.mxu0 %v6236
          %6636 = vmatpush.bf16.msra.mxu0 %v6232
          %6637 = vmatpush.bf16.msra.mxu0 %v6228
          %6638 = vmatpush.bf16.msra.mxu0 %v6224
          %6639 = vmatpush.bf16.msra.mxu0 %v6220
          %6640 = vmatpush.bf16.msra.mxu0 %v6216
          %6641 = vmatpush.bf16.msra.mxu0 %v6212
          %6642 = vmatmul.bf16.gmra.mxu0 %v5593
          %v6643 = vpop.f32.mrf.mxu0
          %v6644 = vadd.f32 %v6620, %v6643
          %v6645 = vpop.f32.mrf.mxu0
          %v6646 = vadd.f32 %v6622, %v6645
          %6647 = vmatmul.bf16.gmra.mxu0 %v5597
          %v6648 = vpop.f32.mrf.mxu0
          %v6649 = vadd.f32 %v6625, %v6648
          %v6650 = vpop.f32.mrf.mxu0
          %v6651 = vadd.f32 %v6627, %v6650
          %6652 = vmatmul.bf16.gmra.mxu0 %v5601
          %v6653 = vpop.f32.mrf.mxu0
          %v6654 = vadd.f32 %v6630, %v6653
          %v6655 = vpop.f32.mrf.mxu0
          %v6656 = vadd.f32 %v6632, %v6655
          %6657 = vdwg.mxu0
          %6658 = vmatpush.bf16.msra.mxu0 %v6145
          %6659 = vmatpush.bf16.msra.mxu0 %v6141
          %6660 = vmatpush.bf16.msra.mxu0 %v6137
          %6661 = vmatpush.bf16.msra.mxu0 %v6133
          %6662 = vmatpush.bf16.msra.mxu0 %v6129
          %6663 = vmatpush.bf16.msra.mxu0 %v6125
          %6664 = vmatpush.bf16.msra.mxu0 %v6121
          %6665 = vmatpush.bf16.msra.mxu0 %v6117
          %6666 = vmatmul.bf16.gmra.mxu0 %v5590
          %v6667 = vpop.f32.mrf.mxu0
          %v6668 = vadd.f32 0.0, %v6667
          %v6669 = vpop.f32.mrf.mxu0
          %v6670 = vadd.f32 0.0, %v6669
          %6671 = vmatmul.bf16.gmra.mxu0 %v5594
          %v6672 = vpop.f32.mrf.mxu0
          %v6673 = vadd.f32 0.0, %v6672
          %v6674 = vpop.f32.mrf.mxu0
          %v6675 = vadd.f32 0.0, %v6674
          %6676 = vmatmul.bf16.gmra.mxu0 %v5598
          %v6677 = vpop.f32.mrf.mxu0
          %v6678 = vadd.f32 0.0, %v6677
          %v6679 = vpop.f32.mrf.mxu0
          %v6680 = vadd.f32 0.0, %v6679
          %6681 = vdwg.mxu0
          %6682 = vmatpush.bf16.msra.mxu0 %v6177
          %6683 = vmatpush.bf16.msra.mxu0 %v6173
          %6684 = vmatpush.bf16.msra.mxu0 %v6169
          %6685 = vmatpush.bf16.msra.mxu0 %v6165
          %6686 = vmatpush.bf16.msra.mxu0 %v6161
          %6687 = vmatpush.bf16.msra.mxu0 %v6157
          %6688 = vmatpush.bf16.msra.mxu0 %v6153
          %6689 = vmatpush.bf16.msra.mxu0 %v6149
          %6690 = vmatmul.bf16.gmra.mxu0 %v5591
          %v6691 = vpop.f32.mrf.mxu0
          %v6692 = vadd.f32 %v6668, %v6691
          %v6693 = vpop.f32.mrf.mxu0
          %v6694 = vadd.f32 %v6670, %v6693
          %6695 = vmatmul.bf16.gmra.mxu0 %v5595
          %v6696 = vpop.f32.mrf.mxu0
          %v6697 = vadd.f32 %v6673, %v6696
          %v6698 = vpop.f32.mrf.mxu0
          %v6699 = vadd.f32 %v6675, %v6698
          %6700 = vmatmul.bf16.gmra.mxu0 %v5599
          %v6701 = vpop.f32.mrf.mxu0
          %v6702 = vadd.f32 %v6678, %v6701
          %v6703 = vpop.f32.mrf.mxu0
          %v6704 = vadd.f32 %v6680, %v6703
          %6705 = vdwg.mxu0
          %6706 = vmatpush.bf16.msra.mxu0 %v6209
          %6707 = vmatpush.bf16.msra.mxu0 %v6205
          %6708 = vmatpush.bf16.msra.mxu0 %v6201
          %6709 = vmatpush.bf16.msra.mxu0 %v6197
          %6710 = vmatpush.bf16.msra.mxu0 %v6193
          %6711 = vmatpush.bf16.msra.mxu0 %v6189
          %6712 = vmatpush.bf16.msra.mxu0 %v6185
          %6713 = vmatpush.bf16.msra.mxu0 %v6181
          %6714 = vmatmul.bf16.gmra.mxu0 %v5592
          %v6715 = vpop.f32.mrf.mxu0
          %v6716 = vadd.f32 %v6692, %v6715
          %v6717 = vpop.f32.mrf.mxu0
          %v6718 = vadd.f32 %v6694, %v6717
          %6719 = vmatmul.bf16.gmra.mxu0 %v5596
          %v6720 = vpop.f32.mrf.mxu0
          %v6721 = vadd.f32 %v6697, %v6720
          %v6722 = vpop.f32.mrf.mxu0
          %v6723 = vadd.f32 %v6699, %v6722
          %6724 = vmatmul.bf16.gmra.mxu0 %v5600
          %v6725 = vpop.f32.mrf.mxu0
          %v6726 = vadd.f32 %v6702, %v6725
          %v6727 = vpop.f32.mrf.mxu0
          %v6728 = vadd.f32 %v6704, %v6727
          %6729 = vdwg.mxu0
          %6730 = vmatpush.bf16.msra.mxu0 %v6241
          %6731 = vmatpush.bf16.msra.mxu0 %v6237
          %6732 = vmatpush.bf16.msra.mxu0 %v6233
          %6733 = vmatpush.bf16.msra.mxu0 %v6229
          %6734 = vmatpush.bf16.msra.mxu0 %v6225
          %6735 = vmatpush.bf16.msra.mxu0 %v6221
          %6736 = vmatpush.bf16.msra.mxu0 %v6217
          %6737 = vmatpush.bf16.msra.mxu0 %v6213
          %6738 = vmatmul.bf16.gmra.mxu0 %v5593
          %v6739 = vpop.f32.mrf.mxu0
          %v6740 = vadd.f32 %v6716, %v6739
          %v6741 = vpop.f32.mrf.mxu0
          %v6742 = vadd.f32 %v6718, %v6741
          %6743 = vmatmul.bf16.gmra.mxu0 %v5597
          %v6744 = vpop.f32.mrf.mxu0
          %v6745 = vadd.f32 %v6721, %v6744
          %v6746 = vpop.f32.mrf.mxu0
          %v6747 = vadd.f32 %v6723, %v6746
          %6748 = vmatmul.bf16.gmra.mxu0 %v5601
          %v6749 = vpop.f32.mrf.mxu0
          %v6750 = vadd.f32 %v6726, %v6749
          %v6751 = vpop.f32.mrf.mxu0
          %v6752 = vadd.f32 %v6728, %v6751
          %6753 = vdwg.mxu0
          %v6754 = vadd.f32 %v5518, %v6452
          %v6755 = vadd.f32 %v5519, %v6548
          %v6756 = vadd.f32 %v5520, %v6644
          %v6757 = vadd.f32 %v5521, %v6740
          %v6758 = vadd.f32 %v5522, %v6454
          %v6759 = vadd.f32 %v5523, %v6550
          %v6760 = vadd.f32 %v5524, %v6646
          %v6761 = vadd.f32 %v5525, %v6742
          %v6762 = vadd.f32 %v5526, %v6457
          %v6763 = vadd.f32 %v5527, %v6553
          %v6764 = vadd.f32 %v5528, %v6649
          %v6765 = vadd.f32 %v5529, %v6745
          %v6766 = vadd.f32 %v5530, %v6459
          %v6767 = vadd.f32 %v5531, %v6555
          %v6768 = vadd.f32 %v5532, %v6651
          %v6769 = vadd.f32 %v5533, %v6747
          %v6770 = vadd.f32 %v5534, %v6462
          %v6771 = vadd.f32 %v5535, %v6558
          %v6772 = vadd.f32 %v5536, %v6654
          %v6773 = vadd.f32 %v5537, %v6750
          %v6774 = vadd.f32 %v5538, %v6464
          %v6775 = vadd.f32 %v5539, %v6560
          %v6776 = vadd.f32 %v5540, %v6656
          %v6777 = vadd.f32 %v5541, %v6752
          %v6778 = vld [vmem:[#allocation8] sm:$0xf]
          %v6780 = vperm.slane %v6778, 0
          %v6781 = vperm.slane %v6778, 1
          %v6782 = vperm.slane %v6778, 2
          %v6783 = vperm.slane %v6778, 3
          %v6788 = vadd.f32 %v6754, %v6780
          %v6789 = vadd.f32 %v6755, %v6781
          %v6790 = vadd.f32 %v6756, %v6782
          %v6791 = vadd.f32 %v6757, %v6783
          %v6792 = vadd.f32 %v6758, %v6780
          %v6793 = vadd.f32 %v6759, %v6781
          %v6794 = vadd.f32 %v6760, %v6782
          %v6795 = vadd.f32 %v6761, %v6783
          %v6796 = vadd.f32 %v6762, %v6780
          %v6797 = vadd.f32 %v6763, %v6781
          %v6798 = vadd.f32 %v6764, %v6782
          %v6799 = vadd.f32 %v6765, %v6783
          %v6800 = vadd.f32 %v6766, %v6780
          %v6801 = vadd.f32 %v6767, %v6781
          %v6802 = vadd.f32 %v6768, %v6782
          %v6803 = vadd.f32 %v6769, %v6783
          %v6804 = vadd.f32 %v6770, %v6780
          %v6805 = vadd.f32 %v6771, %v6781
          %v6806 = vadd.f32 %v6772, %v6782
          %v6807 = vadd.f32 %v6773, %v6783
          %v6808 = vadd.f32 %v6774, %v6780
          %v6809 = vadd.f32 %v6775, %v6781
          %v6810 = vadd.f32 %v6776, %v6782
          %v6811 = vadd.f32 %v6777, %v6783
          %v6812 = vmax.f32 %v6788, 0.0
          %v6813 = vmax.f32 %v6789, 0.0
          %v6814 = vmax.f32 %v6790, 0.0
          %v6815 = vmax.f32 %v6791, 0.0
          %v6816 = vmax.f32 %v6792, 0.0
          %v6817 = vmax.f32 %v6793, 0.0
          %v6818 = vmax.f32 %v6794, 0.0
          %v6819 = vmax.f32 %v6795, 0.0
          %v6820 = vmax.f32 %v6796, 0.0
          %v6821 = vmax.f32 %v6797, 0.0
          %v6822 = vmax.f32 %v6798, 0.0
          %v6823 = vmax.f32 %v6799, 0.0
          %v6824 = vmax.f32 %v6800, 0.0
          %v6825 = vmax.f32 %v6801, 0.0
          %v6826 = vmax.f32 %v6802, 0.0
          %v6827 = vmax.f32 %v6803, 0.0
          %v6828 = vmax.f32 %v6804, 0.0
          %v6829 = vmax.f32 %v6805, 0.0
          %v6830 = vmax.f32 %v6806, 0.0
          %v6831 = vmax.f32 %v6807, 0.0
          %v6832 = vmax.f32 %v6808, 0.0
          %v6833 = vmax.f32 %v6809, 0.0
          %v6834 = vmax.f32 %v6810, 0.0
          %v6835 = vmax.f32 %v6811, 0.0
          %v6836 = vlaneseq
          %v6837 = vshrl.u32 %v6836, 7
          %v6838 = vmul.u32 %v6837, 16
          %v6839 = vlaneseq
          %v6840 = vand.u32 %v6839, 127
          %vm6841 = vcmp.ge.s32.totalorder %v6840, %v6838
          %v6842 = vadd.s32 %v6838, 16
          %vm6843 = vcmp.lt.s32.totalorder %v6840, %v6842
          %vm6844 = vmand %vm6841, %vm6843
          %v6845 = vsel %vm6844, 0.0625, 0.0
          %vm6846 = vcmask 392192
          %v6848 = vsel %vm6846, %v6845, 0
          %6850 = vmatpush.msra.mxu0 0.0
          %6851 = vmatpush.msra.mxu0 0.0
          %6852 = vmatpush.msra.mxu0 0.0
          %6853 = vmatpush.msra.mxu0 0.0
          %6854 = vmatpush.msra.mxu0 0.0
          %6855 = vmatpush.msra.mxu0 0.0
          %6856 = vmatpush.msra.mxu0 0.0
          %6857 = vmatpush.msra.mxu0 0.0
          %6858 = vmatpush.msra.mxu0 0.0
          %6859 = vmatpush.msra.mxu0 0.0
          %6860 = vmatpush.msra.mxu0 %v6832
          %6861 = vmatpush.msra.mxu0 %v6828
          %6862 = vmatpush.msra.mxu0 %v6824
          %6863 = vmatpush.msra.mxu0 %v6820
          %6864 = vmatpush.msra.mxu0 %v6816
          %6865 = vmatpush.msra.mxu0 %v6812
          %6866 = vmatmul.f32.gmra.mxu0 %v6848
          %v6867 = vpop.f32.mrf.mxu0
          %v6868 = vadd.f32 0.0, %v6867
          %6869 = vdwg.mxu0
          %6870 = vmatpush.msra.mxu0 0.0
          %6871 = vmatpush.msra.mxu0 0.0
          %6872 = vmatpush.msra.mxu0 0.0
          %6873 = vmatpush.msra.mxu0 0.0
          %6874 = vmatpush.msra.mxu0 0.0
          %6875 = vmatpush.msra.mxu0 0.0
          %6876 = vmatpush.msra.mxu0 0.0
          %6877 = vmatpush.msra.mxu0 0.0
          %6878 = vmatpush.msra.mxu0 0.0
          %6879 = vmatpush.msra.mxu0 0.0
          %6880 = vmatpush.msra.mxu0 %v6833
          %6881 = vmatpush.msra.mxu0 %v6829
          %6882 = vmatpush.msra.mxu0 %v6825
          %6883 = vmatpush.msra.mxu0 %v6821
          %6884 = vmatpush.msra.mxu0 %v6817
          %6885 = vmatpush.msra.mxu0 %v6813
          %6886 = vmatmul.f32.gmra.mxu0 %v6848
          %v6887 = vpop.f32.mrf.mxu0
          %v6888 = vadd.f32 0.0, %v6887
          %6889 = vdwg.mxu0
          %6890 = vmatpush.msra.mxu0 0.0
          %6891 = vmatpush.msra.mxu0 0.0
          %6892 = vmatpush.msra.mxu0 0.0
          %6893 = vmatpush.msra.mxu0 0.0
          %6894 = vmatpush.msra.mxu0 0.0
          %6895 = vmatpush.msra.mxu0 0.0
          %6896 = vmatpush.msra.mxu0 0.0
          %6897 = vmatpush.msra.mxu0 0.0
          %6898 = vmatpush.msra.mxu0 0.0
          %6899 = vmatpush.msra.mxu0 0.0
          %6900 = vmatpush.msra.mxu0 %v6834
          %6901 = vmatpush.msra.mxu0 %v6830
          %6902 = vmatpush.msra.mxu0 %v6826
          %6903 = vmatpush.msra.mxu0 %v6822
          %6904 = vmatpush.msra.mxu0 %v6818
          %6905 = vmatpush.msra.mxu0 %v6814
          %6906 = vmatmul.f32.gmra.mxu0 %v6848
          %v6907 = vpop.f32.mrf.mxu0
          %v6908 = vadd.f32 0.0, %v6907
          %6909 = vdwg.mxu0
          %6910 = vmatpush.msra.mxu0 0.0
          %6911 = vmatpush.msra.mxu0 0.0
          %6912 = vmatpush.msra.mxu0 0.0
          %6913 = vmatpush.msra.mxu0 0.0
          %6914 = vmatpush.msra.mxu0 0.0
          %6915 = vmatpush.msra.mxu0 0.0
          %6916 = vmatpush.msra.mxu0 0.0
          %6917 = vmatpush.msra.mxu0 0.0
          %6918 = vmatpush.msra.mxu0 0.0
          %6919 = vmatpush.msra.mxu0 0.0
          %6920 = vmatpush.msra.mxu0 %v6835
          %6921 = vmatpush.msra.mxu0 %v6831
          %6922 = vmatpush.msra.mxu0 %v6827
          %6923 = vmatpush.msra.mxu0 %v6823
          %6924 = vmatpush.msra.mxu0 %v6819
          %6925 = vmatpush.msra.mxu0 %v6815
          %6926 = vmatmul.f32.gmra.mxu0 %v6848
          %v6927 = vpop.f32.mrf.mxu0
          %v6928 = vadd.f32 0.0, %v6927
          %6929 = vdwg.mxu0
          %v6934 = vrot.slane %v6888, 4
          %v6935 = vrot.slane %v6928, 4
          %vm6936 = vcmask 1043456
          %v6937 = vsel %vm6936, %v6868, %v6934
          %v6938 = vsel %vm6936, %v6908, %v6935
          %6941 = vst [vmem:[%s313] sm:$0x77] %v6937
          %6942 = vst [vmem:[%s313 + $0x8] sm:$0x77] %v6938
        $region60: #{tpu_custom_call.1} parent=35 // pred_fallthru
          _
        %p6943 = scmp.lt.s32.totalorder %s26, 1
        %s6944 = scalar_select %p6943, %s26, 1
        %s6945 = smul.addr %s6944, 4
        %s6946 = smul.addr %s6945, 4
        %s6947 = scalar_lea.vmem %s4, %s6946
        // Predicated region
        $region61: #{tpu_custom_call.1} parent=35 // pred_check
          %p6948 = pneg %p150
        $region62: #{tpu_custom_call.1} parent=35 // pred_check_branch
          %6950 = sbr.rel (%p6948) target = $region64
        $region63: #{tpu_custom_call.1} parent=35 // pred_region
          _
        $region64: #{tpu_custom_call.1} parent=35 // pred_fallthru
          _
      $region36: #{tpu_custom_call.1} parent=5 // pred_fallthru
        _
      %p6951 = scmp.le.s32.totalorder 2, %s17
      // Predicated region
      $region65: #{tpu_custom_call.1} parent=5 // pred_check
        %p6952 = pneg %p6951
      $region66: #{tpu_custom_call.1} parent=5 // pred_check_branch
        %6954 = sbr.rel (%p6952) target = $region68
      $region67: #{tpu_custom_call.1} parent=5 // pred_region
        %s6955 = ssub.s32 %s17, 2
        // Predicated region
        $region69: #{tpu_custom_call.1} parent=67 // pred_check
          %p6956 = pneg %p156
        $region70: #{tpu_custom_call.1} parent=67 // pred_check_branch
          %6958 = sbr.rel (%p6956) target = $region72
        $region71: #{tpu_custom_call.1} parent=67 // pred_region
          %p6959 = scmp.lt.s32.totalorder %s28, 1
          %s6960 = scalar_select %p6959, %s28, 1
          %s6961 = smul.addr %s6960, 4
          %s6962 = smul.addr %s6961, 4
          %s6963 = scalar_lea.vmem %s4, %s6962
        $region72: #{tpu_custom_call.1} parent=67 // pred_fallthru
          _
      $region68: #{tpu_custom_call.1} parent=5 // pred_fallthru
        _
    $region6: #{tpu_custom_call.1} parent=1 // loop_footer
      %s21 = sadd.s32 1, %s17
    $region7: #{tpu_custom_call.1} parent=1 // loop_footer_branch
      %16 = sbr.rel target = $region3
    $region8: #{tpu_custom_call.1} parent=1 // loop_exit
      _
    %6964 = vsyncpa [#allocation4], 1
    %s6965 = scalar_lea.sflag [#allocation4], 1
    %6966 = vsyncpa %s6965, 1
    %6967 = vsyncpa [#allocation6], 1
    %s6968 = scalar_lea.sflag [#allocation6], 1
    %6969 = vsyncpa %s6968, 1
    %6970 = vsyncpa [#allocation9], 1

</llo_original>
